<compile_context>
chip_gen: v7x
topology: tpu7x:2x2x1
jax: 0.10.0
libtpu: 0.0.40
codegen_flags: <defaults>
</compile_context>

<pallas_src>
import functools

import jax
import jax.numpy as jnp
from jax import lax
from jax.experimental import pallas as pl
from jax.experimental.pallas import tpu as pltpu


_SMALL_C_MAX = 8  # VPU path for C <= 8; MXU/NHWC path above.


# ----------------------------------------------------------------------------- helpers
def _vmem_capacity_bytes():
    """Per-core VMEM capacity; conservative v7x fallback (64 MiB) if unavailable."""
    try:
        info = pltpu.get_tpu_info()
        for name in ("vmem_capacity_bytes", "vmem_size_bytes", "vmem_bytes"):
            v = getattr(info, name, None)
            if v:
                return int(v)
    except Exception:
        pass
    return 64 * 1024 * 1024


def _vmem_limit_bytes(estimate, cap):
    """Scoped-VMEM limit sized to actual usage (with headroom), capped per generation."""
    lim = max(32 << 20, int(1.5 * estimate) + (8 << 20))
    return int(min(lim, int(cap * 0.75)))


def _strip_h_small(h, w, c, cap):
    budget = int(cap * 0.45)
    wl = -(-(w + 4) // 128) * 128            # lane padding of the padded width
    per_row = 4 * c * wl * 10                # in/out double buffers + live strip values
    th = min(budget // max(per_row, 1), -(-h // 8) * 8)
    return max(8, (int(th) // 8) * 8)


def _vmem_estimate_small(th, w, c):
    wl = -(-(w + 4) // 128) * 128
    rows8 = -(-(th + 8) // 8) * 8
    return 4 * c * wl * (rows8 * 9 + 16)


def _strip_h_large(h, w, c, cap, itemsize):
    budget = int(cap * 0.45)
    c_l = -(-c // 128) * 128
    c9_l = -(-(9 * c) // 128) * 128
    per_row = (itemsize * (w + 4) * 7 * c_l        # strips + live activations
               + itemsize * (w + 2) * c9_l         # single shared im2col scratch
               + 4 * (w + 2) * 2 * c_l)            # f32 conv outputs
    th = min(budget // max(per_row, 1), -(-h // 4) * 4)
    return max(4, (int(th) // 4) * 4)


def _vmem_estimate_large(th, w, c, itemsize):
    c_l = -(-c // 128) * 128
    c9_l = -(-(9 * c) // 128) * 128
    return (itemsize * (th + 4) * (w + 4) * 7 * c_l
            + itemsize * (th + 2) * (w + 2) * c9_l
            + 4 * (th + 2) * (w + 2) * 2 * c_l
            + 4 * 9 * c * c_l * itemsize)


# -------------------------------------------------------------- small-C (VPU, NCHW) path
def _rcu_small_c(x_nchw, w1_oihw, b1, w2_oihw, b2, strip_h):
    n, c, h, w = x_nchw.shape
    cap = _vmem_capacity_bytes()
    th = strip_h if strip_h is not None else _strip_h_small(h, w, c, cap)
    th = max(8, (int(th) // 8) * 8)          # strip rows land on the sublane axis -> %8
    n_strips = -(-h // th)
    h_pad = n_strips * th
    wp = w + 4

    # Single wrapper HBM pass: zero halo of 2 in H/W, plus 6 extra bottom rows so the
    # 8-row halo block of the last strip stays in-bounds.  No layout transposes (NCHW
    # is consumed directly -- review items "lane density for small C" / "wrapper traffic").
    xp = jnp.pad(x_nchw.astype(jnp.float32),
                 ((0, 0), (0, 0), (2, h_pad - h + 6), (2, 2)))     # (N, C, h_pad+8, wp)

    # Flattened OIHW weights / biases go to SMEM (scalar reads, fetched once, never
    # double-buffered).  Index = ((co*C + ci)*3 + kh)*3 + kw.
    w1f = w1_oihw.astype(jnp.float32).reshape(-1)
    w2f = w2_oihw.astype(jnp.float32).reshape(-1)
    b1f = b1.astype(jnp.float32).reshape(-1)
    b2f = b2.astype(jnp.float32).reshape(-1)

    def conv3x3_vpu(inp, w_ref, b_ref, ho, wo):
        # inp: (C, ho+2, wo+2) f32.  Valid 3x3 conv -> (C, ho, wo) entirely on the VPU:
        # SMEM scalar weight x shifted 2-D spatial slab (W stays on lanes).  Each tap
        # slice is extracted once and reused for every output channel.
        accs = [jnp.full((ho, wo), b_ref[co], jnp.float32) for co in range(c)]
        for ci in range(c):
            for kh in range(3):
                for kw in range(3):
                    tap = inp[ci, kh:kh + ho, kw:kw + wo]
                    off = (ci * 3 + kh) * 3 + kw
                    for co in range(c):
                        accs[co] = accs[co] + w_ref[co * c * 9 + off] * tap
        return jnp.stack(accs, axis=0)

    def kernel(xb_ref, xh_ref, w1_ref, b1_ref, w2_ref, b2_ref, o_ref):
        si = pl.program_id(1)

        # Strip window = th body rows + first 4 rows of the next 8-row block.
        # TODO(synk): a pl.Element-offset overlapping window would drop this copy.
        xh = xh_ref[0]
        xs = jnp.concatenate([xb_ref[0], xh[:, :4, :]], axis=1)     # (C, th+4, wp)
        xr = jnp.maximum(xs, 0.0)                                   # ReLU(x)

        # conv1 over the full window -> (C, th+2, w+2) extended tile.
        y1 = conv3x3_vpu(xr, w1_ref, b1_ref, th + 2, w + 2)

        # Cheap 2-D interior mask (ReLU + zero ring == conv2's SAME padding); replaces
        # the previous full-size 3-D iota/compare chain.
        gi = lax.broadcasted_iota(jnp.int32, (th + 2, w + 2), 0) + si * th - 1
        gj = lax.broadcasted_iota(jnp.int32, (th + 2, w + 2), 1) - 1
        keep = ((gi >= 0) & (gi < h) & (gj >= 0) & (gj < w)).astype(jnp.float32)
        y1 = jnp.maximum(y1, 0.0) * keep[None, :, :]

        # conv2 -> (C, th, w), then residual add against the un-ReLU'd input.
        y2 = conv3x3_vpu(y1, w2_ref, b2_ref, th, w)
        o_ref[0] = y2 + xs[:, 2:2 + th, 2:2 + w]

    est = _vmem_estimate_small(th, w, c)
    out = pl.pallas_call(
        kernel,
        out_shape=jax.ShapeDtypeStruct((n, c, h_pad, w), jnp.float32),
        grid_spec=pltpu.PrefetchScalarGridSpec(
            num_scalar_prefetch=0,
            grid=(n, n_strips),                      # one H-strip of one sample per step
            in_specs=[
                # strip body: th padded rows (W on lanes).
                pl.BlockSpec((1, c, th, wp), lambda ni, si: (ni, 0, si, 0)),
                # halo: first rows of the next strip (8-row block keeps sublane alignment).
                pl.BlockSpec((1, c, 8, wp), lambda ni, si: (ni, 0, (si + 1) * (th // 8), 0)),
                # weights / biases: whole arrays in SMEM (scalar reads, no double buffer).
                pl.BlockSpec(memory_space=pltpu.MemorySpace.SMEM),
                pl.BlockSpec(memory_space=pltpu.MemorySpace.SMEM),
                pl.BlockSpec(memory_space=pltpu.MemorySpace.SMEM),
                pl.BlockSpec(memory_space=pltpu.MemorySpace.SMEM),
            ],
            out_specs=pl.BlockSpec((1, c, th, w), lambda ni, si: (ni, 0, si, 0)),
        ),
        compiler_params=pltpu.CompilerParams(
            dimension_semantics=("parallel", "parallel"),   # v7x megacore: N x n_strips
            vmem_limit_bytes=_vmem_limit_bytes(est, cap),
        ),
    )(xp, xp, w1f, b1f, w2f, b2f)

    return out[:, :, :h, :].astype(x_nchw.dtype)

    # TODO(synk): a fully lane-dense variant would flatten H*W onto the 128-lane axis
    # (unmasked vst even for tiny W); kept W-on-lanes here to avoid in-kernel relayouts.


# -------------------------------------------------------------- large-C (MXU, NHWC) path
def _rcu_nhwc(x_nchw, w1_oihw, b1, w2_oihw, b2, strip_h, matmul_dtype=jnp.float32):
    # matmul_dtype=jnp.bfloat16 halves HBM/VMEM traffic and doubles MXU rate on v6e/v7x
    # (f32 accumulation is kept); default f32 so the reference check stays tight.
    n, c, h, w = x_nchw.shape
    cap = _vmem_capacity_bytes()
    itemsize = jnp.dtype(matmul_dtype).itemsize
    th = strip_h if strip_h is not None else _strip_h_large(h, w, c, cap, itemsize)
    th = max(4, (int(th) // 4) * 4)
    n_strips = -(-h // th)
    h_pad = n_strips * th
    wp = w + 4

    # TODO(synk): the NCHW->NHWC transpose + pad are still wrapper-side HBM passes; a
    # fused in-kernel halo (or blocked-C NCHW consumption) would remove them.
    x = jnp.transpose(x_nchw, (0, 2, 3, 1)).astype(matmul_dtype)
    x_pad = jnp.pad(x, ((0, 0), (2, 2 + h_pad - h), (2, 2), (0, 0)))
    w1m = jnp.transpose(w1_oihw, (2, 3, 1, 0)).reshape(9 * c, c).astype(matmul_dtype)
    w2m = jnp.transpose(w2_oihw, (2, 3, 1, 0)).reshape(9 * c, c).astype(matmul_dtype)
    b1r = b1.reshape(1, c).astype(jnp.float32)
    b2r = b2.reshape(1, c).astype(jnp.float32)

    def kernel(xb_ref, xh_ref, w1_ref, b1_ref, w2_ref, b2_ref, o_ref, p_ref):
        si = pl.program_id(1)

        def conv3x3(inp, wmat, bias, ho, wo):
            # Valid 3x3 conv as ONE im2col matmul (K = 9C) into the single SHARED scratch.
            # TODO(synk): the reviewer-suggested accumulated per-tap matmuls need a rank-3
            # lhs dot_general (or a per-tap (ho*wo, C) relayout); im2col with a shared
            # scratch is the safe Mosaic-supported form and halves the previous scratch VMEM.
            for kh in range(3):
                for kw in range(3):
                    t = kh * 3 + kw
                    p_ref[0:ho, 0:wo, t * c:(t + 1) * c] = (
                        inp[kh:kh + ho, kw:kw + wo, :].astype(p_ref.dtype))
            patches = p_ref[0:ho, 0:wo, :].reshape(ho * wo, 9 * c)
            y = jnp.dot(patches, wmat, preferred_element_type=jnp.float32) + bias
            return y.reshape(ho, wo, c)

        xs = jnp.concatenate([xb_ref[0], xh_ref[0]], axis=0)        # (th+4, wp, C)
        xr = jnp.maximum(xs, 0.0).astype(matmul_dtype)              # ReLU(x)

        y1 = conv3x3(xr, w1_ref[...], b1_ref[...], th + 2, w + 2)

        # Cheap 2-D interior mask (zero ring = conv2's SAME padding).
        gi = lax.broadcasted_iota(jnp.int32, (th + 2, w + 2), 0) + si * th
        gj = lax.broadcasted_iota(jnp.int32, (th + 2, w + 2), 1)
        keep = ((gi >= 1) & (gi <= h) & (gj >= 1) & (gj <= w)).astype(jnp.float32)
        y1 = jnp.maximum(y1, 0.0) * keep[:, :, None]

        y2 = conv3x3(y1.astype(matmul_dtype), w2_ref[...], b2_ref[...], th, w)
        o_ref[0] = (y2 + xs[2:2 + th, 2:2 + w, :].astype(jnp.float32)).astype(o_ref.dtype)

    est = _vmem_estimate_large(th, w, c, itemsize)
    out_nhwc = pl.pallas_call(
        kernel,
        out_shape=jax.ShapeDtypeStruct((n, h_pad, w, c), jnp.float32),
        grid_spec=pltpu.PrefetchScalarGridSpec(
            num_scalar_prefetch=0,
            grid=(n, n_strips),
            in_specs=[
                pl.BlockSpec((1, th, wp, c), lambda ni, si: (ni, si, 0, 0)),
                pl.BlockSpec((1, 4, wp, c), lambda ni, si: (ni, (si + 1) * (th // 4), 0, 0)),
                # Constant block index -> fetched once, never re-DMA'd.
                # TODO(synk): pipeline_mode=pl.Buffered(1) would drop the redundant second
                # buffer for these constant blocks; left off pending support confirmation.
                pl.BlockSpec((9 * c, c), lambda ni, si: (0, 0)),
                pl.BlockSpec((1, c), lambda ni, si: (0, 0)),
                pl.BlockSpec((9 * c, c), lambda ni, si: (0, 0)),
                pl.BlockSpec((1, c), lambda ni, si: (0, 0)),
            ],
            out_specs=pl.BlockSpec((1, th, w, c), lambda ni, si: (ni, si, 0, 0)),
            scratch_shapes=[pltpu.VMEM((th + 2, w + 2, 9 * c), matmul_dtype)],  # shared
        ),
        compiler_params=pltpu.CompilerParams(
            dimension_semantics=("parallel", "parallel"),
            vmem_limit_bytes=_vmem_limit_bytes(est, cap),
        ),
    )(x_pad, x_pad, w1m, b1r, w2m, b2r)

    out_nhwc = out_nhwc[:, :h]
    return jnp.transpose(out_nhwc, (0, 3, 1, 2)).astype(x_nchw.dtype)


# ----------------------------------------------------------------------------- dispatch
@functools.partial(jax.jit, static_argnames=("strip_h",))
def residual_conv_unit(x_nchw, w1_oihw, b1, w2_oihw, b2, *, strip_h=None):
    n, c, h, w = x_nchw.shape
    assert w1_oihw.shape == (c, c, 3, 3) and w2_oihw.shape == (c, c, 3, 3)
    if c <= _SMALL_C_MAX:
        return _rcu_small_c(x_nchw, w1_oihw, b1, w2_oihw, b2, strip_h)
    return _rcu_nhwc(x_nchw, w1_oihw, b1, w2_oihw, b2, strip_h)


# ---------------------------------------------------------------------------- reference
def reference_forward(x_nchw, w1_oihw, b1, w2_oihw, b2):
    """Pure-JAX reference (lax.conv, SAME padding) matching the residualConvUnit."""
    x = jnp.transpose(x_nchw, (0, 2, 3, 1)).astype(jnp.float32)

    def conv(v, w_oihw, bias):
        w_hwio = jnp.transpose(w_oihw, (2, 3, 1, 0)).astype(jnp.float32)
        y = lax.conv_general_dilated(
            v, w_hwio, window_strides=(1, 1), padding="SAME",
            dimension_numbers=("NHWC", "HWIO", "NHWC"))
        return y + bias.reshape(1, 1, 1, -1)

    y = jnp.maximum(x, 0.0)
    y = conv(y, w1_oihw, b1)
    y = jnp.maximum(y, 0.0)
    y = conv(y, w2_oihw, b2)
    return jnp.transpose(y + x, (0, 3, 1, 2))


if __name__ == "__main__":
    N, C, H, W = 2, 4, 16, 16
    key = jax.random.PRNGKey(0)
    kx, k1, k2, k3, k4 = jax.random.split(key, 5)

    x = jax.random.normal(kx, (N, C, H, W), dtype=jnp.float32)
    # Deterministic synthetic parameters (PyTorch Conv2d layout: OIHW weights, (C,) bias).
    w1 = 0.1 * jax.random.normal(k1, (C, C, 3, 3), dtype=jnp.float32)
    b1 = 0.1 * jax.random.normal(k2, (C,), dtype=jnp.float32)
    w2 = 0.1 * jax.random.normal(k3, (C, C, 3, 3), dtype=jnp.float32)
    b2 = 0.1 * jax.random.normal(k4, (C,), dtype=jnp.float32)

    ref = reference_forward(x, w1, b1, w2, b2)

    # strip_h=8 -> two H-strips per sample: exercises the halo block + cross-strip mask.
    out = jax.block_until_ready(residual_conv_unit(x, w1, b1, w2, b2, strip_h=8))
    assert out.shape == (N, C, H, W), out.shape
    err = float(jnp.max(jnp.abs(out - ref)))
    assert jnp.allclose(out, ref, atol=1e-4, rtol=1e-4), err

    # Auto (generation-aware) strip height -> single strip per sample.
    out2 = jax.block_until_ready(residual_conv_unit(x, w1, b1, w2, b2))
    err2 = float(jnp.max(jnp.abs(out2 - ref)))
    assert jnp.allclose(out2, ref, atol=1e-4, rtol=1e-4), err2

    print("KERNEL_OK")
</pallas_src>

<mosaic_0001>
module attributes {stable_mosaic.version = 11 : i64} {
  func.func @kernel(%arg0: i32, %arg1: i32, %arg2: memref<1x4x8x20xf32, #tpu.memory_space<vmem>>, %arg3: memref<1x4x8x20xf32, #tpu.memory_space<vmem>>, %arg4: memref<144xf32, #tpu.memory_space<smem>>, %arg5: memref<4xf32, #tpu.memory_space<smem>>, %arg6: memref<144xf32, #tpu.memory_space<smem>>, %arg7: memref<4xf32, #tpu.memory_space<smem>>, %arg8: memref<1x4x8x16xf32, #tpu.memory_space<vmem>>) attributes {dimension_semantics = [#tpu.dimension_semantics<parallel>, #tpu.dimension_semantics<parallel>], iteration_bounds = array<i64: 2, 2>, scalar_prefetch = 0 : i64, scratch_operands = 0 : i64, tpu.core_type = #tpu.core_type<tc>, window_params = [{transform_indices = @transform_0, window_bounds = array<i64: 1, 4, 8, 20>}, {transform_indices = @transform_1, window_bounds = array<i64: 1, 4, 8, 20>}, {transform_indices = @transform_2, window_bounds = array<i64: 144>}, {transform_indices = @transform_3, window_bounds = array<i64: 4>}, {transform_indices = @transform_4, window_bounds = array<i64: 144>}, {transform_indices = @transform_5, window_bounds = array<i64: 4>}, {transform_indices = @transform_6, window_bounds = array<i64: 1, 4, 8, 16>}]} {
    %c0 = arith.constant 0 : index
    %c0_0 = arith.constant 0 : index
    %c0_1 = arith.constant 0 : index
    %c0_2 = arith.constant 0 : index
    %0 = vector.load %arg3[%c0, %c0_0, %c0_1, %c0_2] : memref<1x4x8x20xf32, #tpu.memory_space<vmem>>, vector<1x4x8x20xf32>
    %1 = vector.shape_cast %0 : vector<1x4x8x20xf32> to vector<4x8x20xf32>
    %c0_3 = arith.constant 0 : index
    %c0_4 = arith.constant 0 : index
    %c0_5 = arith.constant 0 : index
    %c0_6 = arith.constant 0 : index
    %2 = vector.load %arg2[%c0_3, %c0_4, %c0_5, %c0_6] : memref<1x4x8x20xf32, #tpu.memory_space<vmem>>, vector<1x4x8x20xf32>
    %3 = vector.shape_cast %2 : vector<1x4x8x20xf32> to vector<4x8x20xf32>
    %4 = vector.extract_strided_slice %1 {offsets = [0, 0, 0], sizes = [4, 4, 20], strides = [1, 1, 1]} : vector<4x8x20xf32> to vector<4x4x20xf32>
    %5 = tpu.concatenate %3, %4 in 1 : vector<4x8x20xf32>, vector<4x4x20xf32> -> vector<4x12x20xf32>
    %cst = arith.constant 0.000000e+00 : f32
    %6 = vector.broadcast %cst : f32 to vector<4x12x20xf32>
    %7 = arith.maximumf %5, %6 : vector<4x12x20xf32>
    %c0_7 = arith.constant 0 : index
    %8 = memref.load %arg5[%c0_7] : memref<4xf32, #tpu.memory_space<smem>>
    %9 = vector.broadcast %8 : f32 to vector<10x18xf32>
    %c1 = arith.constant 1 : index
    %10 = memref.load %arg5[%c1] : memref<4xf32, #tpu.memory_space<smem>>
    %11 = vector.broadcast %10 : f32 to vector<10x18xf32>
    %c2 = arith.constant 2 : index
    %12 = memref.load %arg5[%c2] : memref<4xf32, #tpu.memory_space<smem>>
    %13 = vector.broadcast %12 : f32 to vector<10x18xf32>
    %c3 = arith.constant 3 : index
    %14 = memref.load %arg5[%c3] : memref<4xf32, #tpu.memory_space<smem>>
    %15 = vector.broadcast %14 : f32 to vector<10x18xf32>
    %16 = vector.extract_strided_slice %7 {offsets = [0, 0, 0], sizes = [1, 10, 18], strides = [1, 1, 1]} : vector<4x12x20xf32> to vector<1x10x18xf32>
    %17 = vector.shape_cast %16 : vector<1x10x18xf32> to vector<10x18xf32>
    %c0_8 = arith.constant 0 : index
    %18 = memref.load %arg4[%c0_8] : memref<144xf32, #tpu.memory_space<smem>>
    %19 = vector.broadcast %18 : f32 to vector<10x18xf32>
    %20 = arith.mulf %19, %17 : vector<10x18xf32>
    %21 = arith.addf %9, %20 : vector<10x18xf32>
    %c36 = arith.constant 36 : index
    %22 = memref.load %arg4[%c36] : memref<144xf32, #tpu.memory_space<smem>>
    %23 = vector.broadcast %22 : f32 to vector<10x18xf32>
    %24 = arith.mulf %23, %17 : vector<10x18xf32>
    %25 = arith.addf %11, %24 : vector<10x18xf32>
    %c72 = arith.constant 72 : index
    %26 = memref.load %arg4[%c72] : memref<144xf32, #tpu.memory_space<smem>>
    %27 = vector.broadcast %26 : f32 to vector<10x18xf32>
    %28 = arith.mulf %27, %17 : vector<10x18xf32>
    %29 = arith.addf %13, %28 : vector<10x18xf32>
    %c108 = arith.constant 108 : index
    %30 = memref.load %arg4[%c108] : memref<144xf32, #tpu.memory_space<smem>>
    %31 = vector.broadcast %30 : f32 to vector<10x18xf32>
    %32 = arith.mulf %31, %17 : vector<10x18xf32>
    %33 = arith.addf %15, %32 : vector<10x18xf32>
    %34 = vector.extract_strided_slice %7 {offsets = [0, 0, 1], sizes = [1, 10, 18], strides = [1, 1, 1]} : vector<4x12x20xf32> to vector<1x10x18xf32>
    %35 = vector.shape_cast %34 : vector<1x10x18xf32> to vector<10x18xf32>
    %c1_9 = arith.constant 1 : index
    %36 = memref.load %arg4[%c1_9] : memref<144xf32, #tpu.memory_space<smem>>
    %37 = vector.broadcast %36 : f32 to vector<10x18xf32>
    %38 = arith.mulf %37, %35 : vector<10x18xf32>
    %39 = arith.addf %21, %38 : vector<10x18xf32>
    %c37 = arith.constant 37 : index
    %40 = memref.load %arg4[%c37] : memref<144xf32, #tpu.memory_space<smem>>
    %41 = vector.broadcast %40 : f32 to vector<10x18xf32>
    %42 = arith.mulf %41, %35 : vector<10x18xf32>
    %43 = arith.addf %25, %42 : vector<10x18xf32>
    %c73 = arith.constant 73 : index
    %44 = memref.load %arg4[%c73] : memref<144xf32, #tpu.memory_space<smem>>
    %45 = vector.broadcast %44 : f32 to vector<10x18xf32>
    %46 = arith.mulf %45, %35 : vector<10x18xf32>
    %47 = arith.addf %29, %46 : vector<10x18xf32>
    %c109 = arith.constant 109 : index
    %48 = memref.load %arg4[%c109] : memref<144xf32, #tpu.memory_space<smem>>
    %49 = vector.broadcast %48 : f32 to vector<10x18xf32>
    %50 = arith.mulf %49, %35 : vector<10x18xf32>
    %51 = arith.addf %33, %50 : vector<10x18xf32>
    %52 = vector.extract_strided_slice %7 {offsets = [0, 0, 2], sizes = [1, 10, 18], strides = [1, 1, 1]} : vector<4x12x20xf32> to vector<1x10x18xf32>
    %53 = vector.shape_cast %52 : vector<1x10x18xf32> to vector<10x18xf32>
    %c2_10 = arith.constant 2 : index
    %54 = memref.load %arg4[%c2_10] : memref<144xf32, #tpu.memory_space<smem>>
    %55 = vector.broadcast %54 : f32 to vector<10x18xf32>
    %56 = arith.mulf %55, %53 : vector<10x18xf32>
    %57 = arith.addf %39, %56 : vector<10x18xf32>
    %c38 = arith.constant 38 : index
    %58 = memref.load %arg4[%c38] : memref<144xf32, #tpu.memory_space<smem>>
    %59 = vector.broadcast %58 : f32 to vector<10x18xf32>
    %60 = arith.mulf %59, %53 : vector<10x18xf32>
    %61 = arith.addf %43, %60 : vector<10x18xf32>
    %c74 = arith.constant 74 : index
    %62 = memref.load %arg4[%c74] : memref<144xf32, #tpu.memory_space<smem>>
    %63 = vector.broadcast %62 : f32 to vector<10x18xf32>
    %64 = arith.mulf %63, %53 : vector<10x18xf32>
    %65 = arith.addf %47, %64 : vector<10x18xf32>
    %c110 = arith.constant 110 : index
    %66 = memref.load %arg4[%c110] : memref<144xf32, #tpu.memory_space<smem>>
    %67 = vector.broadcast %66 : f32 to vector<10x18xf32>
    %68 = arith.mulf %67, %53 : vector<10x18xf32>
    %69 = arith.addf %51, %68 : vector<10x18xf32>
    %70 = vector.extract_strided_slice %7 {offsets = [0, 1, 0], sizes = [1, 10, 18], strides = [1, 1, 1]} : vector<4x12x20xf32> to vector<1x10x18xf32>
    %71 = vector.shape_cast %70 : vector<1x10x18xf32> to vector<10x18xf32>
    %c3_11 = arith.constant 3 : index
    %72 = memref.load %arg4[%c3_11] : memref<144xf32, #tpu.memory_space<smem>>
    %73 = vector.broadcast %72 : f32 to vector<10x18xf32>
    %74 = arith.mulf %73, %71 : vector<10x18xf32>
    %75 = arith.addf %57, %74 : vector<10x18xf32>
    %c39 = arith.constant 39 : index
    %76 = memref.load %arg4[%c39] : memref<144xf32, #tpu.memory_space<smem>>
    %77 = vector.broadcast %76 : f32 to vector<10x18xf32>
    %78 = arith.mulf %77, %71 : vector<10x18xf32>
    %79 = arith.addf %61, %78 : vector<10x18xf32>
    %c75 = arith.constant 75 : index
    %80 = memref.load %arg4[%c75] : memref<144xf32, #tpu.memory_space<smem>>
    %81 = vector.broadcast %80 : f32 to vector<10x18xf32>
    %82 = arith.mulf %81, %71 : vector<10x18xf32>
    %83 = arith.addf %65, %82 : vector<10x18xf32>
    %c111 = arith.constant 111 : index
    %84 = memref.load %arg4[%c111] : memref<144xf32, #tpu.memory_space<smem>>
    %85 = vector.broadcast %84 : f32 to vector<10x18xf32>
    %86 = arith.mulf %85, %71 : vector<10x18xf32>
    %87 = arith.addf %69, %86 : vector<10x18xf32>
    %88 = vector.extract_strided_slice %7 {offsets = [0, 1, 1], sizes = [1, 10, 18], strides = [1, 1, 1]} : vector<4x12x20xf32> to vector<1x10x18xf32>
    %89 = vector.shape_cast %88 : vector<1x10x18xf32> to vector<10x18xf32>
    %c4 = arith.constant 4 : index
    %90 = memref.load %arg4[%c4] : memref<144xf32, #tpu.memory_space<smem>>
    %91 = vector.broadcast %90 : f32 to vector<10x18xf32>
    %92 = arith.mulf %91, %89 : vector<10x18xf32>
    %93 = arith.addf %75, %92 : vector<10x18xf32>
    %c40 = arith.constant 40 : index
    %94 = memref.load %arg4[%c40] : memref<144xf32, #tpu.memory_space<smem>>
    %95 = vector.broadcast %94 : f32 to vector<10x18xf32>
    %96 = arith.mulf %95, %89 : vector<10x18xf32>
    %97 = arith.addf %79, %96 : vector<10x18xf32>
    %c76 = arith.constant 76 : index
    %98 = memref.load %arg4[%c76] : memref<144xf32, #tpu.memory_space<smem>>
    %99 = vector.broadcast %98 : f32 to vector<10x18xf32>
    %100 = arith.mulf %99, %89 : vector<10x18xf32>
    %101 = arith.addf %83, %100 : vector<10x18xf32>
    %c112 = arith.constant 112 : index
    %102 = memref.load %arg4[%c112] : memref<144xf32, #tpu.memory_space<smem>>
    %103 = vector.broadcast %102 : f32 to vector<10x18xf32>
    %104 = arith.mulf %103, %89 : vector<10x18xf32>
    %105 = arith.addf %87, %104 : vector<10x18xf32>
    %106 = vector.extract_strided_slice %7 {offsets = [0, 1, 2], sizes = [1, 10, 18], strides = [1, 1, 1]} : vector<4x12x20xf32> to vector<1x10x18xf32>
    %107 = vector.shape_cast %106 : vector<1x10x18xf32> to vector<10x18xf32>
    %c5 = arith.constant 5 : index
    %108 = memref.load %arg4[%c5] : memref<144xf32, #tpu.memory_space<smem>>
    %109 = vector.broadcast %108 : f32 to vector<10x18xf32>
    %110 = arith.mulf %109, %107 : vector<10x18xf32>
    %111 = arith.addf %93, %110 : vector<10x18xf32>
    %c41 = arith.constant 41 : index
    %112 = memref.load %arg4[%c41] : memref<144xf32, #tpu.memory_space<smem>>
    %113 = vector.broadcast %112 : f32 to vector<10x18xf32>
    %114 = arith.mulf %113, %107 : vector<10x18xf32>
    %115 = arith.addf %97, %114 : vector<10x18xf32>
    %c77 = arith.constant 77 : index
    %116 = memref.load %arg4[%c77] : memref<144xf32, #tpu.memory_space<smem>>
    %117 = vector.broadcast %116 : f32 to vector<10x18xf32>
    %118 = arith.mulf %117, %107 : vector<10x18xf32>
    %119 = arith.addf %101, %118 : vector<10x18xf32>
    %c113 = arith.constant 113 : index
    %120 = memref.load %arg4[%c113] : memref<144xf32, #tpu.memory_space<smem>>
    %121 = vector.broadcast %120 : f32 to vector<10x18xf32>
    %122 = arith.mulf %121, %107 : vector<10x18xf32>
    %123 = arith.addf %105, %122 : vector<10x18xf32>
    %124 = vector.extract_strided_slice %7 {offsets = [0, 2, 0], sizes = [1, 10, 18], strides = [1, 1, 1]} : vector<4x12x20xf32> to vector<1x10x18xf32>
    %125 = vector.shape_cast %124 : vector<1x10x18xf32> to vector<10x18xf32>
    %c6 = arith.constant 6 : index
    %126 = memref.load %arg4[%c6] : memref<144xf32, #tpu.memory_space<smem>>
    %127 = vector.broadcast %126 : f32 to vector<10x18xf32>
    %128 = arith.mulf %127, %125 : vector<10x18xf32>
    %129 = arith.addf %111, %128 : vector<10x18xf32>
    %c42 = arith.constant 42 : index
    %130 = memref.load %arg4[%c42] : memref<144xf32, #tpu.memory_space<smem>>
    %131 = vector.broadcast %130 : f32 to vector<10x18xf32>
    %132 = arith.mulf %131, %125 : vector<10x18xf32>
    %133 = arith.addf %115, %132 : vector<10x18xf32>
    %c78 = arith.constant 78 : index
    %134 = memref.load %arg4[%c78] : memref<144xf32, #tpu.memory_space<smem>>
    %135 = vector.broadcast %134 : f32 to vector<10x18xf32>
    %136 = arith.mulf %135, %125 : vector<10x18xf32>
    %137 = arith.addf %119, %136 : vector<10x18xf32>
    %c114 = arith.constant 114 : index
    %138 = memref.load %arg4[%c114] : memref<144xf32, #tpu.memory_space<smem>>
    %139 = vector.broadcast %138 : f32 to vector<10x18xf32>
    %140 = arith.mulf %139, %125 : vector<10x18xf32>
    %141 = arith.addf %123, %140 : vector<10x18xf32>
    %142 = vector.extract_strided_slice %7 {offsets = [0, 2, 1], sizes = [1, 10, 18], strides = [1, 1, 1]} : vector<4x12x20xf32> to vector<1x10x18xf32>
    %143 = vector.shape_cast %142 : vector<1x10x18xf32> to vector<10x18xf32>
    %c7 = arith.constant 7 : index
    %144 = memref.load %arg4[%c7] : memref<144xf32, #tpu.memory_space<smem>>
    %145 = vector.broadcast %144 : f32 to vector<10x18xf32>
    %146 = arith.mulf %145, %143 : vector<10x18xf32>
    %147 = arith.addf %129, %146 : vector<10x18xf32>
    %c43 = arith.constant 43 : index
    %148 = memref.load %arg4[%c43] : memref<144xf32, #tpu.memory_space<smem>>
    %149 = vector.broadcast %148 : f32 to vector<10x18xf32>
    %150 = arith.mulf %149, %143 : vector<10x18xf32>
    %151 = arith.addf %133, %150 : vector<10x18xf32>
    %c79 = arith.constant 79 : index
    %152 = memref.load %arg4[%c79] : memref<144xf32, #tpu.memory_space<smem>>
    %153 = vector.broadcast %152 : f32 to vector<10x18xf32>
    %154 = arith.mulf %153, %143 : vector<10x18xf32>
    %155 = arith.addf %137, %154 : vector<10x18xf32>
    %c115 = arith.constant 115 : index
    %156 = memref.load %arg4[%c115] : memref<144xf32, #tpu.memory_space<smem>>
    %157 = vector.broadcast %156 : f32 to vector<10x18xf32>
    %158 = arith.mulf %157, %143 : vector<10x18xf32>
    %159 = arith.addf %141, %158 : vector<10x18xf32>
    %160 = vector.extract_strided_slice %7 {offsets = [0, 2, 2], sizes = [1, 10, 18], strides = [1, 1, 1]} : vector<4x12x20xf32> to vector<1x10x18xf32>
    %161 = vector.shape_cast %160 : vector<1x10x18xf32> to vector<10x18xf32>
    %c8 = arith.constant 8 : index
    %162 = memref.load %arg4[%c8] : memref<144xf32, #tpu.memory_space<smem>>
    %163 = vector.broadcast %162 : f32 to vector<10x18xf32>
    %164 = arith.mulf %163, %161 : vector<10x18xf32>
    %165 = arith.addf %147, %164 : vector<10x18xf32>
    %c44 = arith.constant 44 : index
    %166 = memref.load %arg4[%c44] : memref<144xf32, #tpu.memory_space<smem>>
    %167 = vector.broadcast %166 : f32 to vector<10x18xf32>
    %168 = arith.mulf %167, %161 : vector<10x18xf32>
    %169 = arith.addf %151, %168 : vector<10x18xf32>
    %c80 = arith.constant 80 : index
    %170 = memref.load %arg4[%c80] : memref<144xf32, #tpu.memory_space<smem>>
    %171 = vector.broadcast %170 : f32 to vector<10x18xf32>
    %172 = arith.mulf %171, %161 : vector<10x18xf32>
    %173 = arith.addf %155, %172 : vector<10x18xf32>
    %c116 = arith.constant 116 : index
    %174 = memref.load %arg4[%c116] : memref<144xf32, #tpu.memory_space<smem>>
    %175 = vector.broadcast %174 : f32 to vector<10x18xf32>
    %176 = arith.mulf %175, %161 : vector<10x18xf32>
    %177 = arith.addf %159, %176 : vector<10x18xf32>
    %178 = vector.extract_strided_slice %7 {offsets = [1, 0, 0], sizes = [1, 10, 18], strides = [1, 1, 1]} : vector<4x12x20xf32> to vector<1x10x18xf32>
    %179 = vector.shape_cast %178 : vector<1x10x18xf32> to vector<10x18xf32>
    %c9 = arith.constant 9 : index
    %180 = memref.load %arg4[%c9] : memref<144xf32, #tpu.memory_space<smem>>
    %181 = vector.broadcast %180 : f32 to vector<10x18xf32>
    %182 = arith.mulf %181, %179 : vector<10x18xf32>
    %183 = arith.addf %165, %182 : vector<10x18xf32>
    %c45 = arith.constant 45 : index
    %184 = memref.load %arg4[%c45] : memref<144xf32, #tpu.memory_space<smem>>
    %185 = vector.broadcast %184 : f32 to vector<10x18xf32>
    %186 = arith.mulf %185, %179 : vector<10x18xf32>
    %187 = arith.addf %169, %186 : vector<10x18xf32>
    %c81 = arith.constant 81 : index
    %188 = memref.load %arg4[%c81] : memref<144xf32, #tpu.memory_space<smem>>
    %189 = vector.broadcast %188 : f32 to vector<10x18xf32>
    %190 = arith.mulf %189, %179 : vector<10x18xf32>
    %191 = arith.addf %173, %190 : vector<10x18xf32>
    %c117 = arith.constant 117 : index
    %192 = memref.load %arg4[%c117] : memref<144xf32, #tpu.memory_space<smem>>
    %193 = vector.broadcast %192 : f32 to vector<10x18xf32>
    %194 = arith.mulf %193, %179 : vector<10x18xf32>
    %195 = arith.addf %177, %194 : vector<10x18xf32>
    %196 = vector.extract_strided_slice %7 {offsets = [1, 0, 1], sizes = [1, 10, 18], strides = [1, 1, 1]} : vector<4x12x20xf32> to vector<1x10x18xf32>
    %197 = vector.shape_cast %196 : vector<1x10x18xf32> to vector<10x18xf32>
    %c10 = arith.constant 10 : index
    %198 = memref.load %arg4[%c10] : memref<144xf32, #tpu.memory_space<smem>>
    %199 = vector.broadcast %198 : f32 to vector<10x18xf32>
    %200 = arith.mulf %199, %197 : vector<10x18xf32>
    %201 = arith.addf %183, %200 : vector<10x18xf32>
    %c46 = arith.constant 46 : index
    %202 = memref.load %arg4[%c46] : memref<144xf32, #tpu.memory_space<smem>>
    %203 = vector.broadcast %202 : f32 to vector<10x18xf32>
    %204 = arith.mulf %203, %197 : vector<10x18xf32>
    %205 = arith.addf %187, %204 : vector<10x18xf32>
    %c82 = arith.constant 82 : index
    %206 = memref.load %arg4[%c82] : memref<144xf32, #tpu.memory_space<smem>>
    %207 = vector.broadcast %206 : f32 to vector<10x18xf32>
    %208 = arith.mulf %207, %197 : vector<10x18xf32>
    %209 = arith.addf %191, %208 : vector<10x18xf32>
    %c118 = arith.constant 118 : index
    %210 = memref.load %arg4[%c118] : memref<144xf32, #tpu.memory_space<smem>>
    %211 = vector.broadcast %210 : f32 to vector<10x18xf32>
    %212 = arith.mulf %211, %197 : vector<10x18xf32>
    %213 = arith.addf %195, %212 : vector<10x18xf32>
    %214 = vector.extract_strided_slice %7 {offsets = [1, 0, 2], sizes = [1, 10, 18], strides = [1, 1, 1]} : vector<4x12x20xf32> to vector<1x10x18xf32>
    %215 = vector.shape_cast %214 : vector<1x10x18xf32> to vector<10x18xf32>
    %c11 = arith.constant 11 : index
    %216 = memref.load %arg4[%c11] : memref<144xf32, #tpu.memory_space<smem>>
    %217 = vector.broadcast %216 : f32 to vector<10x18xf32>
    %218 = arith.mulf %217, %215 : vector<10x18xf32>
    %219 = arith.addf %201, %218 : vector<10x18xf32>
    %c47 = arith.constant 47 : index
    %220 = memref.load %arg4[%c47] : memref<144xf32, #tpu.memory_space<smem>>
    %221 = vector.broadcast %220 : f32 to vector<10x18xf32>
    %222 = arith.mulf %221, %215 : vector<10x18xf32>
    %223 = arith.addf %205, %222 : vector<10x18xf32>
    %c83 = arith.constant 83 : index
    %224 = memref.load %arg4[%c83] : memref<144xf32, #tpu.memory_space<smem>>
    %225 = vector.broadcast %224 : f32 to vector<10x18xf32>
    %226 = arith.mulf %225, %215 : vector<10x18xf32>
    %227 = arith.addf %209, %226 : vector<10x18xf32>
    %c119 = arith.constant 119 : index
    %228 = memref.load %arg4[%c119] : memref<144xf32, #tpu.memory_space<smem>>
    %229 = vector.broadcast %228 : f32 to vector<10x18xf32>
    %230 = arith.mulf %229, %215 : vector<10x18xf32>
    %231 = arith.addf %213, %230 : vector<10x18xf32>
    %232 = vector.extract_strided_slice %7 {offsets = [1, 1, 0], sizes = [1, 10, 18], strides = [1, 1, 1]} : vector<4x12x20xf32> to vector<1x10x18xf32>
    %233 = vector.shape_cast %232 : vector<1x10x18xf32> to vector<10x18xf32>
    %c12 = arith.constant 12 : index
    %234 = memref.load %arg4[%c12] : memref<144xf32, #tpu.memory_space<smem>>
    %235 = vector.broadcast %234 : f32 to vector<10x18xf32>
    %236 = arith.mulf %235, %233 : vector<10x18xf32>
    %237 = arith.addf %219, %236 : vector<10x18xf32>
    %c48 = arith.constant 48 : index
    %238 = memref.load %arg4[%c48] : memref<144xf32, #tpu.memory_space<smem>>
    %239 = vector.broadcast %238 : f32 to vector<10x18xf32>
    %240 = arith.mulf %239, %233 : vector<10x18xf32>
    %241 = arith.addf %223, %240 : vector<10x18xf32>
    %c84 = arith.constant 84 : index
    %242 = memref.load %arg4[%c84] : memref<144xf32, #tpu.memory_space<smem>>
    %243 = vector.broadcast %242 : f32 to vector<10x18xf32>
    %244 = arith.mulf %243, %233 : vector<10x18xf32>
    %245 = arith.addf %227, %244 : vector<10x18xf32>
    %c120 = arith.constant 120 : index
    %246 = memref.load %arg4[%c120] : memref<144xf32, #tpu.memory_space<smem>>
    %247 = vector.broadcast %246 : f32 to vector<10x18xf32>
    %248 = arith.mulf %247, %233 : vector<10x18xf32>
    %249 = arith.addf %231, %248 : vector<10x18xf32>
    %250 = vector.extract_strided_slice %7 {offsets = [1, 1, 1], sizes = [1, 10, 18], strides = [1, 1, 1]} : vector<4x12x20xf32> to vector<1x10x18xf32>
    %251 = vector.shape_cast %250 : vector<1x10x18xf32> to vector<10x18xf32>
    %c13 = arith.constant 13 : index
    %252 = memref.load %arg4[%c13] : memref<144xf32, #tpu.memory_space<smem>>
    %253 = vector.broadcast %252 : f32 to vector<10x18xf32>
    %254 = arith.mulf %253, %251 : vector<10x18xf32>
    %255 = arith.addf %237, %254 : vector<10x18xf32>
    %c49 = arith.constant 49 : index
    %256 = memref.load %arg4[%c49] : memref<144xf32, #tpu.memory_space<smem>>
    %257 = vector.broadcast %256 : f32 to vector<10x18xf32>
    %258 = arith.mulf %257, %251 : vector<10x18xf32>
    %259 = arith.addf %241, %258 : vector<10x18xf32>
    %c85 = arith.constant 85 : index
    %260 = memref.load %arg4[%c85] : memref<144xf32, #tpu.memory_space<smem>>
    %261 = vector.broadcast %260 : f32 to vector<10x18xf32>
    %262 = arith.mulf %261, %251 : vector<10x18xf32>
    %263 = arith.addf %245, %262 : vector<10x18xf32>
    %c121 = arith.constant 121 : index
    %264 = memref.load %arg4[%c121] : memref<144xf32, #tpu.memory_space<smem>>
    %265 = vector.broadcast %264 : f32 to vector<10x18xf32>
    %266 = arith.mulf %265, %251 : vector<10x18xf32>
    %267 = arith.addf %249, %266 : vector<10x18xf32>
    %268 = vector.extract_strided_slice %7 {offsets = [1, 1, 2], sizes = [1, 10, 18], strides = [1, 1, 1]} : vector<4x12x20xf32> to vector<1x10x18xf32>
    %269 = vector.shape_cast %268 : vector<1x10x18xf32> to vector<10x18xf32>
    %c14 = arith.constant 14 : index
    %270 = memref.load %arg4[%c14] : memref<144xf32, #tpu.memory_space<smem>>
    %271 = vector.broadcast %270 : f32 to vector<10x18xf32>
    %272 = arith.mulf %271, %269 : vector<10x18xf32>
    %273 = arith.addf %255, %272 : vector<10x18xf32>
    %c50 = arith.constant 50 : index
    %274 = memref.load %arg4[%c50] : memref<144xf32, #tpu.memory_space<smem>>
    %275 = vector.broadcast %274 : f32 to vector<10x18xf32>
    %276 = arith.mulf %275, %269 : vector<10x18xf32>
    %277 = arith.addf %259, %276 : vector<10x18xf32>
    %c86 = arith.constant 86 : index
    %278 = memref.load %arg4[%c86] : memref<144xf32, #tpu.memory_space<smem>>
    %279 = vector.broadcast %278 : f32 to vector<10x18xf32>
    %280 = arith.mulf %279, %269 : vector<10x18xf32>
    %281 = arith.addf %263, %280 : vector<10x18xf32>
    %c122 = arith.constant 122 : index
    %282 = memref.load %arg4[%c122] : memref<144xf32, #tpu.memory_space<smem>>
    %283 = vector.broadcast %282 : f32 to vector<10x18xf32>
    %284 = arith.mulf %283, %269 : vector<10x18xf32>
    %285 = arith.addf %267, %284 : vector<10x18xf32>
    %286 = vector.extract_strided_slice %7 {offsets = [1, 2, 0], sizes = [1, 10, 18], strides = [1, 1, 1]} : vector<4x12x20xf32> to vector<1x10x18xf32>
    %287 = vector.shape_cast %286 : vector<1x10x18xf32> to vector<10x18xf32>
    %c15 = arith.constant 15 : index
    %288 = memref.load %arg4[%c15] : memref<144xf32, #tpu.memory_space<smem>>
    %289 = vector.broadcast %288 : f32 to vector<10x18xf32>
    %290 = arith.mulf %289, %287 : vector<10x18xf32>
    %291 = arith.addf %273, %290 : vector<10x18xf32>
    %c51 = arith.constant 51 : index
    %292 = memref.load %arg4[%c51] : memref<144xf32, #tpu.memory_space<smem>>
    %293 = vector.broadcast %292 : f32 to vector<10x18xf32>
    %294 = arith.mulf %293, %287 : vector<10x18xf32>
    %295 = arith.addf %277, %294 : vector<10x18xf32>
    %c87 = arith.constant 87 : index
    %296 = memref.load %arg4[%c87] : memref<144xf32, #tpu.memory_space<smem>>
    %297 = vector.broadcast %296 : f32 to vector<10x18xf32>
    %298 = arith.mulf %297, %287 : vector<10x18xf32>
    %299 = arith.addf %281, %298 : vector<10x18xf32>
    %c123 = arith.constant 123 : index
    %300 = memref.load %arg4[%c123] : memref<144xf32, #tpu.memory_space<smem>>
    %301 = vector.broadcast %300 : f32 to vector<10x18xf32>
    %302 = arith.mulf %301, %287 : vector<10x18xf32>
    %303 = arith.addf %285, %302 : vector<10x18xf32>
    %304 = vector.extract_strided_slice %7 {offsets = [1, 2, 1], sizes = [1, 10, 18], strides = [1, 1, 1]} : vector<4x12x20xf32> to vector<1x10x18xf32>
    %305 = vector.shape_cast %304 : vector<1x10x18xf32> to vector<10x18xf32>
    %c16 = arith.constant 16 : index
    %306 = memref.load %arg4[%c16] : memref<144xf32, #tpu.memory_space<smem>>
    %307 = vector.broadcast %306 : f32 to vector<10x18xf32>
    %308 = arith.mulf %307, %305 : vector<10x18xf32>
    %309 = arith.addf %291, %308 : vector<10x18xf32>
    %c52 = arith.constant 52 : index
    %310 = memref.load %arg4[%c52] : memref<144xf32, #tpu.memory_space<smem>>
    %311 = vector.broadcast %310 : f32 to vector<10x18xf32>
    %312 = arith.mulf %311, %305 : vector<10x18xf32>
    %313 = arith.addf %295, %312 : vector<10x18xf32>
    %c88 = arith.constant 88 : index
    %314 = memref.load %arg4[%c88] : memref<144xf32, #tpu.memory_space<smem>>
    %315 = vector.broadcast %314 : f32 to vector<10x18xf32>
    %316 = arith.mulf %315, %305 : vector<10x18xf32>
    %317 = arith.addf %299, %316 : vector<10x18xf32>
    %c124 = arith.constant 124 : index
    %318 = memref.load %arg4[%c124] : memref<144xf32, #tpu.memory_space<smem>>
    %319 = vector.broadcast %318 : f32 to vector<10x18xf32>
    %320 = arith.mulf %319, %305 : vector<10x18xf32>
    %321 = arith.addf %303, %320 : vector<10x18xf32>
    %322 = vector.extract_strided_slice %7 {offsets = [1, 2, 2], sizes = [1, 10, 18], strides = [1, 1, 1]} : vector<4x12x20xf32> to vector<1x10x18xf32>
    %323 = vector.shape_cast %322 : vector<1x10x18xf32> to vector<10x18xf32>
    %c17 = arith.constant 17 : index
    %324 = memref.load %arg4[%c17] : memref<144xf32, #tpu.memory_space<smem>>
    %325 = vector.broadcast %324 : f32 to vector<10x18xf32>
    %326 = arith.mulf %325, %323 : vector<10x18xf32>
    %327 = arith.addf %309, %326 : vector<10x18xf32>
    %c53 = arith.constant 53 : index
    %328 = memref.load %arg4[%c53] : memref<144xf32, #tpu.memory_space<smem>>
    %329 = vector.broadcast %328 : f32 to vector<10x18xf32>
    %330 = arith.mulf %329, %323 : vector<10x18xf32>
    %331 = arith.addf %313, %330 : vector<10x18xf32>
    %c89 = arith.constant 89 : index
    %332 = memref.load %arg4[%c89] : memref<144xf32, #tpu.memory_space<smem>>
    %333 = vector.broadcast %332 : f32 to vector<10x18xf32>
    %334 = arith.mulf %333, %323 : vector<10x18xf32>
    %335 = arith.addf %317, %334 : vector<10x18xf32>
    %c125 = arith.constant 125 : index
    %336 = memref.load %arg4[%c125] : memref<144xf32, #tpu.memory_space<smem>>
    %337 = vector.broadcast %336 : f32 to vector<10x18xf32>
    %338 = arith.mulf %337, %323 : vector<10x18xf32>
    %339 = arith.addf %321, %338 : vector<10x18xf32>
    %340 = vector.extract_strided_slice %7 {offsets = [2, 0, 0], sizes = [1, 10, 18], strides = [1, 1, 1]} : vector<4x12x20xf32> to vector<1x10x18xf32>
    %341 = vector.shape_cast %340 : vector<1x10x18xf32> to vector<10x18xf32>
    %c18 = arith.constant 18 : index
    %342 = memref.load %arg4[%c18] : memref<144xf32, #tpu.memory_space<smem>>
    %343 = vector.broadcast %342 : f32 to vector<10x18xf32>
    %344 = arith.mulf %343, %341 : vector<10x18xf32>
    %345 = arith.addf %327, %344 : vector<10x18xf32>
    %c54 = arith.constant 54 : index
    %346 = memref.load %arg4[%c54] : memref<144xf32, #tpu.memory_space<smem>>
    %347 = vector.broadcast %346 : f32 to vector<10x18xf32>
    %348 = arith.mulf %347, %341 : vector<10x18xf32>
    %349 = arith.addf %331, %348 : vector<10x18xf32>
    %c90 = arith.constant 90 : index
    %350 = memref.load %arg4[%c90] : memref<144xf32, #tpu.memory_space<smem>>
    %351 = vector.broadcast %350 : f32 to vector<10x18xf32>
    %352 = arith.mulf %351, %341 : vector<10x18xf32>
    %353 = arith.addf %335, %352 : vector<10x18xf32>
    %c126 = arith.constant 126 : index
    %354 = memref.load %arg4[%c126] : memref<144xf32, #tpu.memory_space<smem>>
    %355 = vector.broadcast %354 : f32 to vector<10x18xf32>
    %356 = arith.mulf %355, %341 : vector<10x18xf32>
    %357 = arith.addf %339, %356 : vector<10x18xf32>
    %358 = vector.extract_strided_slice %7 {offsets = [2, 0, 1], sizes = [1, 10, 18], strides = [1, 1, 1]} : vector<4x12x20xf32> to vector<1x10x18xf32>
    %359 = vector.shape_cast %358 : vector<1x10x18xf32> to vector<10x18xf32>
    %c19 = arith.constant 19 : index
    %360 = memref.load %arg4[%c19] : memref<144xf32, #tpu.memory_space<smem>>
    %361 = vector.broadcast %360 : f32 to vector<10x18xf32>
    %362 = arith.mulf %361, %359 : vector<10x18xf32>
    %363 = arith.addf %345, %362 : vector<10x18xf32>
    %c55 = arith.constant 55 : index
    %364 = memref.load %arg4[%c55] : memref<144xf32, #tpu.memory_space<smem>>
    %365 = vector.broadcast %364 : f32 to vector<10x18xf32>
    %366 = arith.mulf %365, %359 : vector<10x18xf32>
    %367 = arith.addf %349, %366 : vector<10x18xf32>
    %c91 = arith.constant 91 : index
    %368 = memref.load %arg4[%c91] : memref<144xf32, #tpu.memory_space<smem>>
    %369 = vector.broadcast %368 : f32 to vector<10x18xf32>
    %370 = arith.mulf %369, %359 : vector<10x18xf32>
    %371 = arith.addf %353, %370 : vector<10x18xf32>
    %c127 = arith.constant 127 : index
    %372 = memref.load %arg4[%c127] : memref<144xf32, #tpu.memory_space<smem>>
    %373 = vector.broadcast %372 : f32 to vector<10x18xf32>
    %374 = arith.mulf %373, %359 : vector<10x18xf32>
    %375 = arith.addf %357, %374 : vector<10x18xf32>
    %376 = vector.extract_strided_slice %7 {offsets = [2, 0, 2], sizes = [1, 10, 18], strides = [1, 1, 1]} : vector<4x12x20xf32> to vector<1x10x18xf32>
    %377 = vector.shape_cast %376 : vector<1x10x18xf32> to vector<10x18xf32>
    %c20 = arith.constant 20 : index
    %378 = memref.load %arg4[%c20] : memref<144xf32, #tpu.memory_space<smem>>
    %379 = vector.broadcast %378 : f32 to vector<10x18xf32>
    %380 = arith.mulf %379, %377 : vector<10x18xf32>
    %381 = arith.addf %363, %380 : vector<10x18xf32>
    %c56 = arith.constant 56 : index
    %382 = memref.load %arg4[%c56] : memref<144xf32, #tpu.memory_space<smem>>
    %383 = vector.broadcast %382 : f32 to vector<10x18xf32>
    %384 = arith.mulf %383, %377 : vector<10x18xf32>
    %385 = arith.addf %367, %384 : vector<10x18xf32>
    %c92 = arith.constant 92 : index
    %386 = memref.load %arg4[%c92] : memref<144xf32, #tpu.memory_space<smem>>
    %387 = vector.broadcast %386 : f32 to vector<10x18xf32>
    %388 = arith.mulf %387, %377 : vector<10x18xf32>
    %389 = arith.addf %371, %388 : vector<10x18xf32>
    %c128 = arith.constant 128 : index
    %390 = memref.load %arg4[%c128] : memref<144xf32, #tpu.memory_space<smem>>
    %391 = vector.broadcast %390 : f32 to vector<10x18xf32>
    %392 = arith.mulf %391, %377 : vector<10x18xf32>
    %393 = arith.addf %375, %392 : vector<10x18xf32>
    %394 = vector.extract_strided_slice %7 {offsets = [2, 1, 0], sizes = [1, 10, 18], strides = [1, 1, 1]} : vector<4x12x20xf32> to vector<1x10x18xf32>
    %395 = vector.shape_cast %394 : vector<1x10x18xf32> to vector<10x18xf32>
    %c21 = arith.constant 21 : index
    %396 = memref.load %arg4[%c21] : memref<144xf32, #tpu.memory_space<smem>>
    %397 = vector.broadcast %396 : f32 to vector<10x18xf32>
    %398 = arith.mulf %397, %395 : vector<10x18xf32>
    %399 = arith.addf %381, %398 : vector<10x18xf32>
    %c57 = arith.constant 57 : index
    %400 = memref.load %arg4[%c57] : memref<144xf32, #tpu.memory_space<smem>>
    %401 = vector.broadcast %400 : f32 to vector<10x18xf32>
    %402 = arith.mulf %401, %395 : vector<10x18xf32>
    %403 = arith.addf %385, %402 : vector<10x18xf32>
    %c93 = arith.constant 93 : index
    %404 = memref.load %arg4[%c93] : memref<144xf32, #tpu.memory_space<smem>>
    %405 = vector.broadcast %404 : f32 to vector<10x18xf32>
    %406 = arith.mulf %405, %395 : vector<10x18xf32>
    %407 = arith.addf %389, %406 : vector<10x18xf32>
    %c129 = arith.constant 129 : index
    %408 = memref.load %arg4[%c129] : memref<144xf32, #tpu.memory_space<smem>>
    %409 = vector.broadcast %408 : f32 to vector<10x18xf32>
    %410 = arith.mulf %409, %395 : vector<10x18xf32>
    %411 = arith.addf %393, %410 : vector<10x18xf32>
    %412 = vector.extract_strided_slice %7 {offsets = [2, 1, 1], sizes = [1, 10, 18], strides = [1, 1, 1]} : vector<4x12x20xf32> to vector<1x10x18xf32>
    %413 = vector.shape_cast %412 : vector<1x10x18xf32> to vector<10x18xf32>
    %c22 = arith.constant 22 : index
    %414 = memref.load %arg4[%c22] : memref<144xf32, #tpu.memory_space<smem>>
    %415 = vector.broadcast %414 : f32 to vector<10x18xf32>
    %416 = arith.mulf %415, %413 : vector<10x18xf32>
    %417 = arith.addf %399, %416 : vector<10x18xf32>
    %c58 = arith.constant 58 : index
    %418 = memref.load %arg4[%c58] : memref<144xf32, #tpu.memory_space<smem>>
    %419 = vector.broadcast %418 : f32 to vector<10x18xf32>
    %420 = arith.mulf %419, %413 : vector<10x18xf32>
    %421 = arith.addf %403, %420 : vector<10x18xf32>
    %c94 = arith.constant 94 : index
    %422 = memref.load %arg4[%c94] : memref<144xf32, #tpu.memory_space<smem>>
    %423 = vector.broadcast %422 : f32 to vector<10x18xf32>
    %424 = arith.mulf %423, %413 : vector<10x18xf32>
    %425 = arith.addf %407, %424 : vector<10x18xf32>
    %c130 = arith.constant 130 : index
    %426 = memref.load %arg4[%c130] : memref<144xf32, #tpu.memory_space<smem>>
    %427 = vector.broadcast %426 : f32 to vector<10x18xf32>
    %428 = arith.mulf %427, %413 : vector<10x18xf32>
    %429 = arith.addf %411, %428 : vector<10x18xf32>
    %430 = vector.extract_strided_slice %7 {offsets = [2, 1, 2], sizes = [1, 10, 18], strides = [1, 1, 1]} : vector<4x12x20xf32> to vector<1x10x18xf32>
    %431 = vector.shape_cast %430 : vector<1x10x18xf32> to vector<10x18xf32>
    %c23 = arith.constant 23 : index
    %432 = memref.load %arg4[%c23] : memref<144xf32, #tpu.memory_space<smem>>
    %433 = vector.broadcast %432 : f32 to vector<10x18xf32>
    %434 = arith.mulf %433, %431 : vector<10x18xf32>
    %435 = arith.addf %417, %434 : vector<10x18xf32>
    %c59 = arith.constant 59 : index
    %436 = memref.load %arg4[%c59] : memref<144xf32, #tpu.memory_space<smem>>
    %437 = vector.broadcast %436 : f32 to vector<10x18xf32>
    %438 = arith.mulf %437, %431 : vector<10x18xf32>
    %439 = arith.addf %421, %438 : vector<10x18xf32>
    %c95 = arith.constant 95 : index
    %440 = memref.load %arg4[%c95] : memref<144xf32, #tpu.memory_space<smem>>
    %441 = vector.broadcast %440 : f32 to vector<10x18xf32>
    %442 = arith.mulf %441, %431 : vector<10x18xf32>
    %443 = arith.addf %425, %442 : vector<10x18xf32>
    %c131 = arith.constant 131 : index
    %444 = memref.load %arg4[%c131] : memref<144xf32, #tpu.memory_space<smem>>
    %445 = vector.broadcast %444 : f32 to vector<10x18xf32>
    %446 = arith.mulf %445, %431 : vector<10x18xf32>
    %447 = arith.addf %429, %446 : vector<10x18xf32>
    %448 = vector.extract_strided_slice %7 {offsets = [2, 2, 0], sizes = [1, 10, 18], strides = [1, 1, 1]} : vector<4x12x20xf32> to vector<1x10x18xf32>
    %449 = vector.shape_cast %448 : vector<1x10x18xf32> to vector<10x18xf32>
    %c24 = arith.constant 24 : index
    %450 = memref.load %arg4[%c24] : memref<144xf32, #tpu.memory_space<smem>>
    %451 = vector.broadcast %450 : f32 to vector<10x18xf32>
    %452 = arith.mulf %451, %449 : vector<10x18xf32>
    %453 = arith.addf %435, %452 : vector<10x18xf32>
    %c60 = arith.constant 60 : index
    %454 = memref.load %arg4[%c60] : memref<144xf32, #tpu.memory_space<smem>>
    %455 = vector.broadcast %454 : f32 to vector<10x18xf32>
    %456 = arith.mulf %455, %449 : vector<10x18xf32>
    %457 = arith.addf %439, %456 : vector<10x18xf32>
    %c96 = arith.constant 96 : index
    %458 = memref.load %arg4[%c96] : memref<144xf32, #tpu.memory_space<smem>>
    %459 = vector.broadcast %458 : f32 to vector<10x18xf32>
    %460 = arith.mulf %459, %449 : vector<10x18xf32>
    %461 = arith.addf %443, %460 : vector<10x18xf32>
    %c132 = arith.constant 132 : index
    %462 = memref.load %arg4[%c132] : memref<144xf32, #tpu.memory_space<smem>>
    %463 = vector.broadcast %462 : f32 to vector<10x18xf32>
    %464 = arith.mulf %463, %449 : vector<10x18xf32>
    %465 = arith.addf %447, %464 : vector<10x18xf32>
    %466 = vector.extract_strided_slice %7 {offsets = [2, 2, 1], sizes = [1, 10, 18], strides = [1, 1, 1]} : vector<4x12x20xf32> to vector<1x10x18xf32>
    %467 = vector.shape_cast %466 : vector<1x10x18xf32> to vector<10x18xf32>
    %c25 = arith.constant 25 : index
    %468 = memref.load %arg4[%c25] : memref<144xf32, #tpu.memory_space<smem>>
    %469 = vector.broadcast %468 : f32 to vector<10x18xf32>
    %470 = arith.mulf %469, %467 : vector<10x18xf32>
    %471 = arith.addf %453, %470 : vector<10x18xf32>
    %c61 = arith.constant 61 : index
    %472 = memref.load %arg4[%c61] : memref<144xf32, #tpu.memory_space<smem>>
    %473 = vector.broadcast %472 : f32 to vector<10x18xf32>
    %474 = arith.mulf %473, %467 : vector<10x18xf32>
    %475 = arith.addf %457, %474 : vector<10x18xf32>
    %c97 = arith.constant 97 : index
    %476 = memref.load %arg4[%c97] : memref<144xf32, #tpu.memory_space<smem>>
    %477 = vector.broadcast %476 : f32 to vector<10x18xf32>
    %478 = arith.mulf %477, %467 : vector<10x18xf32>
    %479 = arith.addf %461, %478 : vector<10x18xf32>
    %c133 = arith.constant 133 : index
    %480 = memref.load %arg4[%c133] : memref<144xf32, #tpu.memory_space<smem>>
    %481 = vector.broadcast %480 : f32 to vector<10x18xf32>
    %482 = arith.mulf %481, %467 : vector<10x18xf32>
    %483 = arith.addf %465, %482 : vector<10x18xf32>
    %484 = vector.extract_strided_slice %7 {offsets = [2, 2, 2], sizes = [1, 10, 18], strides = [1, 1, 1]} : vector<4x12x20xf32> to vector<1x10x18xf32>
    %485 = vector.shape_cast %484 : vector<1x10x18xf32> to vector<10x18xf32>
    %c26 = arith.constant 26 : index
    %486 = memref.load %arg4[%c26] : memref<144xf32, #tpu.memory_space<smem>>
    %487 = vector.broadcast %486 : f32 to vector<10x18xf32>
    %488 = arith.mulf %487, %485 : vector<10x18xf32>
    %489 = arith.addf %471, %488 : vector<10x18xf32>
    %c62 = arith.constant 62 : index
    %490 = memref.load %arg4[%c62] : memref<144xf32, #tpu.memory_space<smem>>
    %491 = vector.broadcast %490 : f32 to vector<10x18xf32>
    %492 = arith.mulf %491, %485 : vector<10x18xf32>
    %493 = arith.addf %475, %492 : vector<10x18xf32>
    %c98 = arith.constant 98 : index
    %494 = memref.load %arg4[%c98] : memref<144xf32, #tpu.memory_space<smem>>
    %495 = vector.broadcast %494 : f32 to vector<10x18xf32>
    %496 = arith.mulf %495, %485 : vector<10x18xf32>
    %497 = arith.addf %479, %496 : vector<10x18xf32>
    %c134 = arith.constant 134 : index
    %498 = memref.load %arg4[%c134] : memref<144xf32, #tpu.memory_space<smem>>
    %499 = vector.broadcast %498 : f32 to vector<10x18xf32>
    %500 = arith.mulf %499, %485 : vector<10x18xf32>
    %501 = arith.addf %483, %500 : vector<10x18xf32>
    %502 = vector.extract_strided_slice %7 {offsets = [3, 0, 0], sizes = [1, 10, 18], strides = [1, 1, 1]} : vector<4x12x20xf32> to vector<1x10x18xf32>
    %503 = vector.shape_cast %502 : vector<1x10x18xf32> to vector<10x18xf32>
    %c27 = arith.constant 27 : index
    %504 = memref.load %arg4[%c27] : memref<144xf32, #tpu.memory_space<smem>>
    %505 = vector.broadcast %504 : f32 to vector<10x18xf32>
    %506 = arith.mulf %505, %503 : vector<10x18xf32>
    %507 = arith.addf %489, %506 : vector<10x18xf32>
    %c63 = arith.constant 63 : index
    %508 = memref.load %arg4[%c63] : memref<144xf32, #tpu.memory_space<smem>>
    %509 = vector.broadcast %508 : f32 to vector<10x18xf32>
    %510 = arith.mulf %509, %503 : vector<10x18xf32>
    %511 = arith.addf %493, %510 : vector<10x18xf32>
    %c99 = arith.constant 99 : index
    %512 = memref.load %arg4[%c99] : memref<144xf32, #tpu.memory_space<smem>>
    %513 = vector.broadcast %512 : f32 to vector<10x18xf32>
    %514 = arith.mulf %513, %503 : vector<10x18xf32>
    %515 = arith.addf %497, %514 : vector<10x18xf32>
    %c135 = arith.constant 135 : index
    %516 = memref.load %arg4[%c135] : memref<144xf32, #tpu.memory_space<smem>>
    %517 = vector.broadcast %516 : f32 to vector<10x18xf32>
    %518 = arith.mulf %517, %503 : vector<10x18xf32>
    %519 = arith.addf %501, %518 : vector<10x18xf32>
    %520 = vector.extract_strided_slice %7 {offsets = [3, 0, 1], sizes = [1, 10, 18], strides = [1, 1, 1]} : vector<4x12x20xf32> to vector<1x10x18xf32>
    %521 = vector.shape_cast %520 : vector<1x10x18xf32> to vector<10x18xf32>
    %c28 = arith.constant 28 : index
    %522 = memref.load %arg4[%c28] : memref<144xf32, #tpu.memory_space<smem>>
    %523 = vector.broadcast %522 : f32 to vector<10x18xf32>
    %524 = arith.mulf %523, %521 : vector<10x18xf32>
    %525 = arith.addf %507, %524 : vector<10x18xf32>
    %c64 = arith.constant 64 : index
    %526 = memref.load %arg4[%c64] : memref<144xf32, #tpu.memory_space<smem>>
    %527 = vector.broadcast %526 : f32 to vector<10x18xf32>
    %528 = arith.mulf %527, %521 : vector<10x18xf32>
    %529 = arith.addf %511, %528 : vector<10x18xf32>
    %c100 = arith.constant 100 : index
    %530 = memref.load %arg4[%c100] : memref<144xf32, #tpu.memory_space<smem>>
    %531 = vector.broadcast %530 : f32 to vector<10x18xf32>
    %532 = arith.mulf %531, %521 : vector<10x18xf32>
    %533 = arith.addf %515, %532 : vector<10x18xf32>
    %c136 = arith.constant 136 : index
    %534 = memref.load %arg4[%c136] : memref<144xf32, #tpu.memory_space<smem>>
    %535 = vector.broadcast %534 : f32 to vector<10x18xf32>
    %536 = arith.mulf %535, %521 : vector<10x18xf32>
    %537 = arith.addf %519, %536 : vector<10x18xf32>
    %538 = vector.extract_strided_slice %7 {offsets = [3, 0, 2], sizes = [1, 10, 18], strides = [1, 1, 1]} : vector<4x12x20xf32> to vector<1x10x18xf32>
    %539 = vector.shape_cast %538 : vector<1x10x18xf32> to vector<10x18xf32>
    %c29 = arith.constant 29 : index
    %540 = memref.load %arg4[%c29] : memref<144xf32, #tpu.memory_space<smem>>
    %541 = vector.broadcast %540 : f32 to vector<10x18xf32>
    %542 = arith.mulf %541, %539 : vector<10x18xf32>
    %543 = arith.addf %525, %542 : vector<10x18xf32>
    %c65 = arith.constant 65 : index
    %544 = memref.load %arg4[%c65] : memref<144xf32, #tpu.memory_space<smem>>
    %545 = vector.broadcast %544 : f32 to vector<10x18xf32>
    %546 = arith.mulf %545, %539 : vector<10x18xf32>
    %547 = arith.addf %529, %546 : vector<10x18xf32>
    %c101 = arith.constant 101 : index
    %548 = memref.load %arg4[%c101] : memref<144xf32, #tpu.memory_space<smem>>
    %549 = vector.broadcast %548 : f32 to vector<10x18xf32>
    %550 = arith.mulf %549, %539 : vector<10x18xf32>
    %551 = arith.addf %533, %550 : vector<10x18xf32>
    %c137 = arith.constant 137 : index
    %552 = memref.load %arg4[%c137] : memref<144xf32, #tpu.memory_space<smem>>
    %553 = vector.broadcast %552 : f32 to vector<10x18xf32>
    %554 = arith.mulf %553, %539 : vector<10x18xf32>
    %555 = arith.addf %537, %554 : vector<10x18xf32>
    %556 = vector.extract_strided_slice %7 {offsets = [3, 1, 0], sizes = [1, 10, 18], strides = [1, 1, 1]} : vector<4x12x20xf32> to vector<1x10x18xf32>
    %557 = vector.shape_cast %556 : vector<1x10x18xf32> to vector<10x18xf32>
    %c30 = arith.constant 30 : index
    %558 = memref.load %arg4[%c30] : memref<144xf32, #tpu.memory_space<smem>>
    %559 = vector.broadcast %558 : f32 to vector<10x18xf32>
    %560 = arith.mulf %559, %557 : vector<10x18xf32>
    %561 = arith.addf %543, %560 : vector<10x18xf32>
    %c66 = arith.constant 66 : index
    %562 = memref.load %arg4[%c66] : memref<144xf32, #tpu.memory_space<smem>>
    %563 = vector.broadcast %562 : f32 to vector<10x18xf32>
    %564 = arith.mulf %563, %557 : vector<10x18xf32>
    %565 = arith.addf %547, %564 : vector<10x18xf32>
    %c102 = arith.constant 102 : index
    %566 = memref.load %arg4[%c102] : memref<144xf32, #tpu.memory_space<smem>>
    %567 = vector.broadcast %566 : f32 to vector<10x18xf32>
    %568 = arith.mulf %567, %557 : vector<10x18xf32>
    %569 = arith.addf %551, %568 : vector<10x18xf32>
    %c138 = arith.constant 138 : index
    %570 = memref.load %arg4[%c138] : memref<144xf32, #tpu.memory_space<smem>>
    %571 = vector.broadcast %570 : f32 to vector<10x18xf32>
    %572 = arith.mulf %571, %557 : vector<10x18xf32>
    %573 = arith.addf %555, %572 : vector<10x18xf32>
    %574 = vector.extract_strided_slice %7 {offsets = [3, 1, 1], sizes = [1, 10, 18], strides = [1, 1, 1]} : vector<4x12x20xf32> to vector<1x10x18xf32>
    %575 = vector.shape_cast %574 : vector<1x10x18xf32> to vector<10x18xf32>
    %c31 = arith.constant 31 : index
    %576 = memref.load %arg4[%c31] : memref<144xf32, #tpu.memory_space<smem>>
    %577 = vector.broadcast %576 : f32 to vector<10x18xf32>
    %578 = arith.mulf %577, %575 : vector<10x18xf32>
    %579 = arith.addf %561, %578 : vector<10x18xf32>
    %c67 = arith.constant 67 : index
    %580 = memref.load %arg4[%c67] : memref<144xf32, #tpu.memory_space<smem>>
    %581 = vector.broadcast %580 : f32 to vector<10x18xf32>
    %582 = arith.mulf %581, %575 : vector<10x18xf32>
    %583 = arith.addf %565, %582 : vector<10x18xf32>
    %c103 = arith.constant 103 : index
    %584 = memref.load %arg4[%c103] : memref<144xf32, #tpu.memory_space<smem>>
    %585 = vector.broadcast %584 : f32 to vector<10x18xf32>
    %586 = arith.mulf %585, %575 : vector<10x18xf32>
    %587 = arith.addf %569, %586 : vector<10x18xf32>
    %c139 = arith.constant 139 : index
    %588 = memref.load %arg4[%c139] : memref<144xf32, #tpu.memory_space<smem>>
    %589 = vector.broadcast %588 : f32 to vector<10x18xf32>
    %590 = arith.mulf %589, %575 : vector<10x18xf32>
    %591 = arith.addf %573, %590 : vector<10x18xf32>
    %592 = vector.extract_strided_slice %7 {offsets = [3, 1, 2], sizes = [1, 10, 18], strides = [1, 1, 1]} : vector<4x12x20xf32> to vector<1x10x18xf32>
    %593 = vector.shape_cast %592 : vector<1x10x18xf32> to vector<10x18xf32>
    %c32 = arith.constant 32 : index
    %594 = memref.load %arg4[%c32] : memref<144xf32, #tpu.memory_space<smem>>
    %595 = vector.broadcast %594 : f32 to vector<10x18xf32>
    %596 = arith.mulf %595, %593 : vector<10x18xf32>
    %597 = arith.addf %579, %596 : vector<10x18xf32>
    %c68 = arith.constant 68 : index
    %598 = memref.load %arg4[%c68] : memref<144xf32, #tpu.memory_space<smem>>
    %599 = vector.broadcast %598 : f32 to vector<10x18xf32>
    %600 = arith.mulf %599, %593 : vector<10x18xf32>
    %601 = arith.addf %583, %600 : vector<10x18xf32>
    %c104 = arith.constant 104 : index
    %602 = memref.load %arg4[%c104] : memref<144xf32, #tpu.memory_space<smem>>
    %603 = vector.broadcast %602 : f32 to vector<10x18xf32>
    %604 = arith.mulf %603, %593 : vector<10x18xf32>
    %605 = arith.addf %587, %604 : vector<10x18xf32>
    %c140 = arith.constant 140 : index
    %606 = memref.load %arg4[%c140] : memref<144xf32, #tpu.memory_space<smem>>
    %607 = vector.broadcast %606 : f32 to vector<10x18xf32>
    %608 = arith.mulf %607, %593 : vector<10x18xf32>
    %609 = arith.addf %591, %608 : vector<10x18xf32>
    %610 = vector.extract_strided_slice %7 {offsets = [3, 2, 0], sizes = [1, 10, 18], strides = [1, 1, 1]} : vector<4x12x20xf32> to vector<1x10x18xf32>
    %611 = vector.shape_cast %610 : vector<1x10x18xf32> to vector<10x18xf32>
    %c33 = arith.constant 33 : index
    %612 = memref.load %arg4[%c33] : memref<144xf32, #tpu.memory_space<smem>>
    %613 = vector.broadcast %612 : f32 to vector<10x18xf32>
    %614 = arith.mulf %613, %611 : vector<10x18xf32>
    %615 = arith.addf %597, %614 : vector<10x18xf32>
    %c69 = arith.constant 69 : index
    %616 = memref.load %arg4[%c69] : memref<144xf32, #tpu.memory_space<smem>>
    %617 = vector.broadcast %616 : f32 to vector<10x18xf32>
    %618 = arith.mulf %617, %611 : vector<10x18xf32>
    %619 = arith.addf %601, %618 : vector<10x18xf32>
    %c105 = arith.constant 105 : index
    %620 = memref.load %arg4[%c105] : memref<144xf32, #tpu.memory_space<smem>>
    %621 = vector.broadcast %620 : f32 to vector<10x18xf32>
    %622 = arith.mulf %621, %611 : vector<10x18xf32>
    %623 = arith.addf %605, %622 : vector<10x18xf32>
    %c141 = arith.constant 141 : index
    %624 = memref.load %arg4[%c141] : memref<144xf32, #tpu.memory_space<smem>>
    %625 = vector.broadcast %624 : f32 to vector<10x18xf32>
    %626 = arith.mulf %625, %611 : vector<10x18xf32>
    %627 = arith.addf %609, %626 : vector<10x18xf32>
    %628 = vector.extract_strided_slice %7 {offsets = [3, 2, 1], sizes = [1, 10, 18], strides = [1, 1, 1]} : vector<4x12x20xf32> to vector<1x10x18xf32>
    %629 = vector.shape_cast %628 : vector<1x10x18xf32> to vector<10x18xf32>
    %c34 = arith.constant 34 : index
    %630 = memref.load %arg4[%c34] : memref<144xf32, #tpu.memory_space<smem>>
    %631 = vector.broadcast %630 : f32 to vector<10x18xf32>
    %632 = arith.mulf %631, %629 : vector<10x18xf32>
    %633 = arith.addf %615, %632 : vector<10x18xf32>
    %c70 = arith.constant 70 : index
    %634 = memref.load %arg4[%c70] : memref<144xf32, #tpu.memory_space<smem>>
    %635 = vector.broadcast %634 : f32 to vector<10x18xf32>
    %636 = arith.mulf %635, %629 : vector<10x18xf32>
    %637 = arith.addf %619, %636 : vector<10x18xf32>
    %c106 = arith.constant 106 : index
    %638 = memref.load %arg4[%c106] : memref<144xf32, #tpu.memory_space<smem>>
    %639 = vector.broadcast %638 : f32 to vector<10x18xf32>
    %640 = arith.mulf %639, %629 : vector<10x18xf32>
    %641 = arith.addf %623, %640 : vector<10x18xf32>
    %c142 = arith.constant 142 : index
    %642 = memref.load %arg4[%c142] : memref<144xf32, #tpu.memory_space<smem>>
    %643 = vector.broadcast %642 : f32 to vector<10x18xf32>
    %644 = arith.mulf %643, %629 : vector<10x18xf32>
    %645 = arith.addf %627, %644 : vector<10x18xf32>
    %646 = vector.extract_strided_slice %7 {offsets = [3, 2, 2], sizes = [1, 10, 18], strides = [1, 1, 1]} : vector<4x12x20xf32> to vector<1x10x18xf32>
    %647 = vector.shape_cast %646 : vector<1x10x18xf32> to vector<10x18xf32>
    %c35 = arith.constant 35 : index
    %648 = memref.load %arg4[%c35] : memref<144xf32, #tpu.memory_space<smem>>
    %649 = vector.broadcast %648 : f32 to vector<10x18xf32>
    %650 = arith.mulf %649, %647 : vector<10x18xf32>
    %651 = arith.addf %633, %650 : vector<10x18xf32>
    %c71 = arith.constant 71 : index
    %652 = memref.load %arg4[%c71] : memref<144xf32, #tpu.memory_space<smem>>
    %653 = vector.broadcast %652 : f32 to vector<10x18xf32>
    %654 = arith.mulf %653, %647 : vector<10x18xf32>
    %655 = arith.addf %637, %654 : vector<10x18xf32>
    %c107 = arith.constant 107 : index
    %656 = memref.load %arg4[%c107] : memref<144xf32, #tpu.memory_space<smem>>
    %657 = vector.broadcast %656 : f32 to vector<10x18xf32>
    %658 = arith.mulf %657, %647 : vector<10x18xf32>
    %659 = arith.addf %641, %658 : vector<10x18xf32>
    %c143 = arith.constant 143 : index
    %660 = memref.load %arg4[%c143] : memref<144xf32, #tpu.memory_space<smem>>
    %661 = vector.broadcast %660 : f32 to vector<10x18xf32>
    %662 = arith.mulf %661, %647 : vector<10x18xf32>
    %663 = arith.addf %645, %662 : vector<10x18xf32>
    %664 = vector.shape_cast %651 : vector<10x18xf32> to vector<1x10x18xf32>
    %665 = vector.shape_cast %655 : vector<10x18xf32> to vector<1x10x18xf32>
    %666 = vector.shape_cast %659 : vector<10x18xf32> to vector<1x10x18xf32>
    %667 = vector.shape_cast %663 : vector<10x18xf32> to vector<1x10x18xf32>
    %668 = tpu.concatenate %664, %665, %666, %667 in 0 : vector<1x10x18xf32>, vector<1x10x18xf32>, vector<1x10x18xf32>, vector<1x10x18xf32> -> vector<4x10x18xf32>
    %669 = tpu.iota {dimensions = array<i32: 0>} : vector<10x18xi32>
    %c8_i32 = arith.constant 8 : i32
    %670 = arith.muli %arg1, %c8_i32 : i32
    %671 = vector.broadcast %670 : i32 to vector<10x18xi32>
    %672 = arith.addi %669, %671 : vector<10x18xi32>
    %c1_i32 = arith.constant 1 : i32
    %673 = vector.broadcast %c1_i32 : i32 to vector<10x18xi32>
    %674 = arith.subi %672, %673 : vector<10x18xi32>
    %675 = tpu.iota {dimensions = array<i32: 1>} : vector<10x18xi32>
    %c1_i32_12 = arith.constant 1 : i32
    %676 = vector.broadcast %c1_i32_12 : i32 to vector<10x18xi32>
    %677 = arith.subi %675, %676 : vector<10x18xi32>
    %c0_i32 = arith.constant 0 : i32
    %678 = vector.broadcast %c0_i32 : i32 to vector<10x18xi32>
    %679 = arith.cmpi sge, %674, %678 : vector<10x18xi32>
    %c16_i32 = arith.constant 16 : i32
    %680 = vector.broadcast %c16_i32 : i32 to vector<10x18xi32>
    %681 = arith.cmpi slt, %674, %680 : vector<10x18xi32>
    %682 = arith.andi %679, %681 : vector<10x18xi1>
    %c0_i32_13 = arith.constant 0 : i32
    %683 = vector.broadcast %c0_i32_13 : i32 to vector<10x18xi32>
    %684 = arith.cmpi sge, %677, %683 : vector<10x18xi32>
    %685 = arith.andi %682, %684 : vector<10x18xi1>
    %c16_i32_14 = arith.constant 16 : i32
    %686 = vector.broadcast %c16_i32_14 : i32 to vector<10x18xi32>
    %687 = arith.cmpi slt, %677, %686 : vector<10x18xi32>
    %688 = arith.andi %685, %687 : vector<10x18xi1>
    %689 = arith.extui %688 : vector<10x18xi1> to vector<10x18xi32>
    %690 = arith.sitofp %689 : vector<10x18xi32> to vector<10x18xf32>
    %cst_15 = arith.constant 0.000000e+00 : f32
    %691 = vector.broadcast %cst_15 : f32 to vector<4x10x18xf32>
    %692 = arith.maximumf %668, %691 : vector<4x10x18xf32>
    %693 = vector.shape_cast %690 : vector<10x18xf32> to vector<1x10x18xf32>
    %694 = vector.broadcast %693 : vector<1x10x18xf32> to vector<4x10x18xf32>
    %695 = arith.mulf %692, %694 : vector<4x10x18xf32>
    %c0_16 = arith.constant 0 : index
    %696 = memref.load %arg7[%c0_16] : memref<4xf32, #tpu.memory_space<smem>>
    %697 = vector.broadcast %696 : f32 to vector<8x16xf32>
    %c1_17 = arith.constant 1 : index
    %698 = memref.load %arg7[%c1_17] : memref<4xf32, #tpu.memory_space<smem>>
    %699 = vector.broadcast %698 : f32 to vector<8x16xf32>
    %c2_18 = arith.constant 2 : index
    %700 = memref.load %arg7[%c2_18] : memref<4xf32, #tpu.memory_space<smem>>
    %701 = vector.broadcast %700 : f32 to vector<8x16xf32>
    %c3_19 = arith.constant 3 : index
    %702 = memref.load %arg7[%c3_19] : memref<4xf32, #tpu.memory_space<smem>>
    %703 = vector.broadcast %702 : f32 to vector<8x16xf32>
    %704 = vector.extract_strided_slice %695 {offsets = [0, 0, 0], sizes = [1, 8, 16], strides = [1, 1, 1]} : vector<4x10x18xf32> to vector<1x8x16xf32>
    %705 = vector.shape_cast %704 : vector<1x8x16xf32> to vector<8x16xf32>
    %c0_20 = arith.constant 0 : index
    %706 = memref.load %arg6[%c0_20] : memref<144xf32, #tpu.memory_space<smem>>
    %707 = vector.broadcast %706 : f32 to vector<8x16xf32>
    %708 = arith.mulf %707, %705 : vector<8x16xf32>
    %709 = arith.addf %697, %708 : vector<8x16xf32>
    %c36_21 = arith.constant 36 : index
    %710 = memref.load %arg6[%c36_21] : memref<144xf32, #tpu.memory_space<smem>>
    %711 = vector.broadcast %710 : f32 to vector<8x16xf32>
    %712 = arith.mulf %711, %705 : vector<8x16xf32>
    %713 = arith.addf %699, %712 : vector<8x16xf32>
    %c72_22 = arith.constant 72 : index
    %714 = memref.load %arg6[%c72_22] : memref<144xf32, #tpu.memory_space<smem>>
    %715 = vector.broadcast %714 : f32 to vector<8x16xf32>
    %716 = arith.mulf %715, %705 : vector<8x16xf32>
    %717 = arith.addf %701, %716 : vector<8x16xf32>
    %c108_23 = arith.constant 108 : index
    %718 = memref.load %arg6[%c108_23] : memref<144xf32, #tpu.memory_space<smem>>
    %719 = vector.broadcast %718 : f32 to vector<8x16xf32>
    %720 = arith.mulf %719, %705 : vector<8x16xf32>
    %721 = arith.addf %703, %720 : vector<8x16xf32>
    %722 = vector.extract_strided_slice %695 {offsets = [0, 0, 1], sizes = [1, 8, 16], strides = [1, 1, 1]} : vector<4x10x18xf32> to vector<1x8x16xf32>
    %723 = vector.shape_cast %722 : vector<1x8x16xf32> to vector<8x16xf32>
    %c1_24 = arith.constant 1 : index
    %724 = memref.load %arg6[%c1_24] : memref<144xf32, #tpu.memory_space<smem>>
    %725 = vector.broadcast %724 : f32 to vector<8x16xf32>
    %726 = arith.mulf %725, %723 : vector<8x16xf32>
    %727 = arith.addf %709, %726 : vector<8x16xf32>
    %c37_25 = arith.constant 37 : index
    %728 = memref.load %arg6[%c37_25] : memref<144xf32, #tpu.memory_space<smem>>
    %729 = vector.broadcast %728 : f32 to vector<8x16xf32>
    %730 = arith.mulf %729, %723 : vector<8x16xf32>
    %731 = arith.addf %713, %730 : vector<8x16xf32>
    %c73_26 = arith.constant 73 : index
    %732 = memref.load %arg6[%c73_26] : memref<144xf32, #tpu.memory_space<smem>>
    %733 = vector.broadcast %732 : f32 to vector<8x16xf32>
    %734 = arith.mulf %733, %723 : vector<8x16xf32>
    %735 = arith.addf %717, %734 : vector<8x16xf32>
    %c109_27 = arith.constant 109 : index
    %736 = memref.load %arg6[%c109_27] : memref<144xf32, #tpu.memory_space<smem>>
    %737 = vector.broadcast %736 : f32 to vector<8x16xf32>
    %738 = arith.mulf %737, %723 : vector<8x16xf32>
    %739 = arith.addf %721, %738 : vector<8x16xf32>
    %740 = vector.extract_strided_slice %695 {offsets = [0, 0, 2], sizes = [1, 8, 16], strides = [1, 1, 1]} : vector<4x10x18xf32> to vector<1x8x16xf32>
    %741 = vector.shape_cast %740 : vector<1x8x16xf32> to vector<8x16xf32>
    %c2_28 = arith.constant 2 : index
    %742 = memref.load %arg6[%c2_28] : memref<144xf32, #tpu.memory_space<smem>>
    %743 = vector.broadcast %742 : f32 to vector<8x16xf32>
    %744 = arith.mulf %743, %741 : vector<8x16xf32>
    %745 = arith.addf %727, %744 : vector<8x16xf32>
    %c38_29 = arith.constant 38 : index
    %746 = memref.load %arg6[%c38_29] : memref<144xf32, #tpu.memory_space<smem>>
    %747 = vector.broadcast %746 : f32 to vector<8x16xf32>
    %748 = arith.mulf %747, %741 : vector<8x16xf32>
    %749 = arith.addf %731, %748 : vector<8x16xf32>
    %c74_30 = arith.constant 74 : index
    %750 = memref.load %arg6[%c74_30] : memref<144xf32, #tpu.memory_space<smem>>
    %751 = vector.broadcast %750 : f32 to vector<8x16xf32>
    %752 = arith.mulf %751, %741 : vector<8x16xf32>
    %753 = arith.addf %735, %752 : vector<8x16xf32>
    %c110_31 = arith.constant 110 : index
    %754 = memref.load %arg6[%c110_31] : memref<144xf32, #tpu.memory_space<smem>>
    %755 = vector.broadcast %754 : f32 to vector<8x16xf32>
    %756 = arith.mulf %755, %741 : vector<8x16xf32>
    %757 = arith.addf %739, %756 : vector<8x16xf32>
    %758 = vector.extract_strided_slice %695 {offsets = [0, 1, 0], sizes = [1, 8, 16], strides = [1, 1, 1]} : vector<4x10x18xf32> to vector<1x8x16xf32>
    %759 = vector.shape_cast %758 : vector<1x8x16xf32> to vector<8x16xf32>
    %c3_32 = arith.constant 3 : index
    %760 = memref.load %arg6[%c3_32] : memref<144xf32, #tpu.memory_space<smem>>
    %761 = vector.broadcast %760 : f32 to vector<8x16xf32>
    %762 = arith.mulf %761, %759 : vector<8x16xf32>
    %763 = arith.addf %745, %762 : vector<8x16xf32>
    %c39_33 = arith.constant 39 : index
    %764 = memref.load %arg6[%c39_33] : memref<144xf32, #tpu.memory_space<smem>>
    %765 = vector.broadcast %764 : f32 to vector<8x16xf32>
    %766 = arith.mulf %765, %759 : vector<8x16xf32>
    %767 = arith.addf %749, %766 : vector<8x16xf32>
    %c75_34 = arith.constant 75 : index
    %768 = memref.load %arg6[%c75_34] : memref<144xf32, #tpu.memory_space<smem>>
    %769 = vector.broadcast %768 : f32 to vector<8x16xf32>
    %770 = arith.mulf %769, %759 : vector<8x16xf32>
    %771 = arith.addf %753, %770 : vector<8x16xf32>
    %c111_35 = arith.constant 111 : index
    %772 = memref.load %arg6[%c111_35] : memref<144xf32, #tpu.memory_space<smem>>
    %773 = vector.broadcast %772 : f32 to vector<8x16xf32>
    %774 = arith.mulf %773, %759 : vector<8x16xf32>
    %775 = arith.addf %757, %774 : vector<8x16xf32>
    %776 = vector.extract_strided_slice %695 {offsets = [0, 1, 1], sizes = [1, 8, 16], strides = [1, 1, 1]} : vector<4x10x18xf32> to vector<1x8x16xf32>
    %777 = vector.shape_cast %776 : vector<1x8x16xf32> to vector<8x16xf32>
    %c4_36 = arith.constant 4 : index
    %778 = memref.load %arg6[%c4_36] : memref<144xf32, #tpu.memory_space<smem>>
    %779 = vector.broadcast %778 : f32 to vector<8x16xf32>
    %780 = arith.mulf %779, %777 : vector<8x16xf32>
    %781 = arith.addf %763, %780 : vector<8x16xf32>
    %c40_37 = arith.constant 40 : index
    %782 = memref.load %arg6[%c40_37] : memref<144xf32, #tpu.memory_space<smem>>
    %783 = vector.broadcast %782 : f32 to vector<8x16xf32>
    %784 = arith.mulf %783, %777 : vector<8x16xf32>
    %785 = arith.addf %767, %784 : vector<8x16xf32>
    %c76_38 = arith.constant 76 : index
    %786 = memref.load %arg6[%c76_38] : memref<144xf32, #tpu.memory_space<smem>>
    %787 = vector.broadcast %786 : f32 to vector<8x16xf32>
    %788 = arith.mulf %787, %777 : vector<8x16xf32>
    %789 = arith.addf %771, %788 : vector<8x16xf32>
    %c112_39 = arith.constant 112 : index
    %790 = memref.load %arg6[%c112_39] : memref<144xf32, #tpu.memory_space<smem>>
    %791 = vector.broadcast %790 : f32 to vector<8x16xf32>
    %792 = arith.mulf %791, %777 : vector<8x16xf32>
    %793 = arith.addf %775, %792 : vector<8x16xf32>
    %794 = vector.extract_strided_slice %695 {offsets = [0, 1, 2], sizes = [1, 8, 16], strides = [1, 1, 1]} : vector<4x10x18xf32> to vector<1x8x16xf32>
    %795 = vector.shape_cast %794 : vector<1x8x16xf32> to vector<8x16xf32>
    %c5_40 = arith.constant 5 : index
    %796 = memref.load %arg6[%c5_40] : memref<144xf32, #tpu.memory_space<smem>>
    %797 = vector.broadcast %796 : f32 to vector<8x16xf32>
    %798 = arith.mulf %797, %795 : vector<8x16xf32>
    %799 = arith.addf %781, %798 : vector<8x16xf32>
    %c41_41 = arith.constant 41 : index
    %800 = memref.load %arg6[%c41_41] : memref<144xf32, #tpu.memory_space<smem>>
    %801 = vector.broadcast %800 : f32 to vector<8x16xf32>
    %802 = arith.mulf %801, %795 : vector<8x16xf32>
    %803 = arith.addf %785, %802 : vector<8x16xf32>
    %c77_42 = arith.constant 77 : index
    %804 = memref.load %arg6[%c77_42] : memref<144xf32, #tpu.memory_space<smem>>
    %805 = vector.broadcast %804 : f32 to vector<8x16xf32>
    %806 = arith.mulf %805, %795 : vector<8x16xf32>
    %807 = arith.addf %789, %806 : vector<8x16xf32>
    %c113_43 = arith.constant 113 : index
    %808 = memref.load %arg6[%c113_43] : memref<144xf32, #tpu.memory_space<smem>>
    %809 = vector.broadcast %808 : f32 to vector<8x16xf32>
    %810 = arith.mulf %809, %795 : vector<8x16xf32>
    %811 = arith.addf %793, %810 : vector<8x16xf32>
    %812 = vector.extract_strided_slice %695 {offsets = [0, 2, 0], sizes = [1, 8, 16], strides = [1, 1, 1]} : vector<4x10x18xf32> to vector<1x8x16xf32>
    %813 = vector.shape_cast %812 : vector<1x8x16xf32> to vector<8x16xf32>
    %c6_44 = arith.constant 6 : index
    %814 = memref.load %arg6[%c6_44] : memref<144xf32, #tpu.memory_space<smem>>
    %815 = vector.broadcast %814 : f32 to vector<8x16xf32>
    %816 = arith.mulf %815, %813 : vector<8x16xf32>
    %817 = arith.addf %799, %816 : vector<8x16xf32>
    %c42_45 = arith.constant 42 : index
    %818 = memref.load %arg6[%c42_45] : memref<144xf32, #tpu.memory_space<smem>>
    %819 = vector.broadcast %818 : f32 to vector<8x16xf32>
    %820 = arith.mulf %819, %813 : vector<8x16xf32>
    %821 = arith.addf %803, %820 : vector<8x16xf32>
    %c78_46 = arith.constant 78 : index
    %822 = memref.load %arg6[%c78_46] : memref<144xf32, #tpu.memory_space<smem>>
    %823 = vector.broadcast %822 : f32 to vector<8x16xf32>
    %824 = arith.mulf %823, %813 : vector<8x16xf32>
    %825 = arith.addf %807, %824 : vector<8x16xf32>
    %c114_47 = arith.constant 114 : index
    %826 = memref.load %arg6[%c114_47] : memref<144xf32, #tpu.memory_space<smem>>
    %827 = vector.broadcast %826 : f32 to vector<8x16xf32>
    %828 = arith.mulf %827, %813 : vector<8x16xf32>
    %829 = arith.addf %811, %828 : vector<8x16xf32>
    %830 = vector.extract_strided_slice %695 {offsets = [0, 2, 1], sizes = [1, 8, 16], strides = [1, 1, 1]} : vector<4x10x18xf32> to vector<1x8x16xf32>
    %831 = vector.shape_cast %830 : vector<1x8x16xf32> to vector<8x16xf32>
    %c7_48 = arith.constant 7 : index
    %832 = memref.load %arg6[%c7_48] : memref<144xf32, #tpu.memory_space<smem>>
    %833 = vector.broadcast %832 : f32 to vector<8x16xf32>
    %834 = arith.mulf %833, %831 : vector<8x16xf32>
    %835 = arith.addf %817, %834 : vector<8x16xf32>
    %c43_49 = arith.constant 43 : index
    %836 = memref.load %arg6[%c43_49] : memref<144xf32, #tpu.memory_space<smem>>
    %837 = vector.broadcast %836 : f32 to vector<8x16xf32>
    %838 = arith.mulf %837, %831 : vector<8x16xf32>
    %839 = arith.addf %821, %838 : vector<8x16xf32>
    %c79_50 = arith.constant 79 : index
    %840 = memref.load %arg6[%c79_50] : memref<144xf32, #tpu.memory_space<smem>>
    %841 = vector.broadcast %840 : f32 to vector<8x16xf32>
    %842 = arith.mulf %841, %831 : vector<8x16xf32>
    %843 = arith.addf %825, %842 : vector<8x16xf32>
    %c115_51 = arith.constant 115 : index
    %844 = memref.load %arg6[%c115_51] : memref<144xf32, #tpu.memory_space<smem>>
    %845 = vector.broadcast %844 : f32 to vector<8x16xf32>
    %846 = arith.mulf %845, %831 : vector<8x16xf32>
    %847 = arith.addf %829, %846 : vector<8x16xf32>
    %848 = vector.extract_strided_slice %695 {offsets = [0, 2, 2], sizes = [1, 8, 16], strides = [1, 1, 1]} : vector<4x10x18xf32> to vector<1x8x16xf32>
    %849 = vector.shape_cast %848 : vector<1x8x16xf32> to vector<8x16xf32>
    %c8_52 = arith.constant 8 : index
    %850 = memref.load %arg6[%c8_52] : memref<144xf32, #tpu.memory_space<smem>>
    %851 = vector.broadcast %850 : f32 to vector<8x16xf32>
    %852 = arith.mulf %851, %849 : vector<8x16xf32>
    %853 = arith.addf %835, %852 : vector<8x16xf32>
    %c44_53 = arith.constant 44 : index
    %854 = memref.load %arg6[%c44_53] : memref<144xf32, #tpu.memory_space<smem>>
    %855 = vector.broadcast %854 : f32 to vector<8x16xf32>
    %856 = arith.mulf %855, %849 : vector<8x16xf32>
    %857 = arith.addf %839, %856 : vector<8x16xf32>
    %c80_54 = arith.constant 80 : index
    %858 = memref.load %arg6[%c80_54] : memref<144xf32, #tpu.memory_space<smem>>
    %859 = vector.broadcast %858 : f32 to vector<8x16xf32>
    %860 = arith.mulf %859, %849 : vector<8x16xf32>
    %861 = arith.addf %843, %860 : vector<8x16xf32>
    %c116_55 = arith.constant 116 : index
    %862 = memref.load %arg6[%c116_55] : memref<144xf32, #tpu.memory_space<smem>>
    %863 = vector.broadcast %862 : f32 to vector<8x16xf32>
    %864 = arith.mulf %863, %849 : vector<8x16xf32>
    %865 = arith.addf %847, %864 : vector<8x16xf32>
    %866 = vector.extract_strided_slice %695 {offsets = [1, 0, 0], sizes = [1, 8, 16], strides = [1, 1, 1]} : vector<4x10x18xf32> to vector<1x8x16xf32>
    %867 = vector.shape_cast %866 : vector<1x8x16xf32> to vector<8x16xf32>
    %c9_56 = arith.constant 9 : index
    %868 = memref.load %arg6[%c9_56] : memref<144xf32, #tpu.memory_space<smem>>
    %869 = vector.broadcast %868 : f32 to vector<8x16xf32>
    %870 = arith.mulf %869, %867 : vector<8x16xf32>
    %871 = arith.addf %853, %870 : vector<8x16xf32>
    %c45_57 = arith.constant 45 : index
    %872 = memref.load %arg6[%c45_57] : memref<144xf32, #tpu.memory_space<smem>>
    %873 = vector.broadcast %872 : f32 to vector<8x16xf32>
    %874 = arith.mulf %873, %867 : vector<8x16xf32>
    %875 = arith.addf %857, %874 : vector<8x16xf32>
    %c81_58 = arith.constant 81 : index
    %876 = memref.load %arg6[%c81_58] : memref<144xf32, #tpu.memory_space<smem>>
    %877 = vector.broadcast %876 : f32 to vector<8x16xf32>
    %878 = arith.mulf %877, %867 : vector<8x16xf32>
    %879 = arith.addf %861, %878 : vector<8x16xf32>
    %c117_59 = arith.constant 117 : index
    %880 = memref.load %arg6[%c117_59] : memref<144xf32, #tpu.memory_space<smem>>
    %881 = vector.broadcast %880 : f32 to vector<8x16xf32>
    %882 = arith.mulf %881, %867 : vector<8x16xf32>
    %883 = arith.addf %865, %882 : vector<8x16xf32>
    %884 = vector.extract_strided_slice %695 {offsets = [1, 0, 1], sizes = [1, 8, 16], strides = [1, 1, 1]} : vector<4x10x18xf32> to vector<1x8x16xf32>
    %885 = vector.shape_cast %884 : vector<1x8x16xf32> to vector<8x16xf32>
    %c10_60 = arith.constant 10 : index
    %886 = memref.load %arg6[%c10_60] : memref<144xf32, #tpu.memory_space<smem>>
    %887 = vector.broadcast %886 : f32 to vector<8x16xf32>
    %888 = arith.mulf %887, %885 : vector<8x16xf32>
    %889 = arith.addf %871, %888 : vector<8x16xf32>
    %c46_61 = arith.constant 46 : index
    %890 = memref.load %arg6[%c46_61] : memref<144xf32, #tpu.memory_space<smem>>
    %891 = vector.broadcast %890 : f32 to vector<8x16xf32>
    %892 = arith.mulf %891, %885 : vector<8x16xf32>
    %893 = arith.addf %875, %892 : vector<8x16xf32>
    %c82_62 = arith.constant 82 : index
    %894 = memref.load %arg6[%c82_62] : memref<144xf32, #tpu.memory_space<smem>>
    %895 = vector.broadcast %894 : f32 to vector<8x16xf32>
    %896 = arith.mulf %895, %885 : vector<8x16xf32>
    %897 = arith.addf %879, %896 : vector<8x16xf32>
    %c118_63 = arith.constant 118 : index
    %898 = memref.load %arg6[%c118_63] : memref<144xf32, #tpu.memory_space<smem>>
    %899 = vector.broadcast %898 : f32 to vector<8x16xf32>
    %900 = arith.mulf %899, %885 : vector<8x16xf32>
    %901 = arith.addf %883, %900 : vector<8x16xf32>
    %902 = vector.extract_strided_slice %695 {offsets = [1, 0, 2], sizes = [1, 8, 16], strides = [1, 1, 1]} : vector<4x10x18xf32> to vector<1x8x16xf32>
    %903 = vector.shape_cast %902 : vector<1x8x16xf32> to vector<8x16xf32>
    %c11_64 = arith.constant 11 : index
    %904 = memref.load %arg6[%c11_64] : memref<144xf32, #tpu.memory_space<smem>>
    %905 = vector.broadcast %904 : f32 to vector<8x16xf32>
    %906 = arith.mulf %905, %903 : vector<8x16xf32>
    %907 = arith.addf %889, %906 : vector<8x16xf32>
    %c47_65 = arith.constant 47 : index
    %908 = memref.load %arg6[%c47_65] : memref<144xf32, #tpu.memory_space<smem>>
    %909 = vector.broadcast %908 : f32 to vector<8x16xf32>
    %910 = arith.mulf %909, %903 : vector<8x16xf32>
    %911 = arith.addf %893, %910 : vector<8x16xf32>
    %c83_66 = arith.constant 83 : index
    %912 = memref.load %arg6[%c83_66] : memref<144xf32, #tpu.memory_space<smem>>
    %913 = vector.broadcast %912 : f32 to vector<8x16xf32>
    %914 = arith.mulf %913, %903 : vector<8x16xf32>
    %915 = arith.addf %897, %914 : vector<8x16xf32>
    %c119_67 = arith.constant 119 : index
    %916 = memref.load %arg6[%c119_67] : memref<144xf32, #tpu.memory_space<smem>>
    %917 = vector.broadcast %916 : f32 to vector<8x16xf32>
    %918 = arith.mulf %917, %903 : vector<8x16xf32>
    %919 = arith.addf %901, %918 : vector<8x16xf32>
    %920 = vector.extract_strided_slice %695 {offsets = [1, 1, 0], sizes = [1, 8, 16], strides = [1, 1, 1]} : vector<4x10x18xf32> to vector<1x8x16xf32>
    %921 = vector.shape_cast %920 : vector<1x8x16xf32> to vector<8x16xf32>
    %c12_68 = arith.constant 12 : index
    %922 = memref.load %arg6[%c12_68] : memref<144xf32, #tpu.memory_space<smem>>
    %923 = vector.broadcast %922 : f32 to vector<8x16xf32>
    %924 = arith.mulf %923, %921 : vector<8x16xf32>
    %925 = arith.addf %907, %924 : vector<8x16xf32>
    %c48_69 = arith.constant 48 : index
    %926 = memref.load %arg6[%c48_69] : memref<144xf32, #tpu.memory_space<smem>>
    %927 = vector.broadcast %926 : f32 to vector<8x16xf32>
    %928 = arith.mulf %927, %921 : vector<8x16xf32>
    %929 = arith.addf %911, %928 : vector<8x16xf32>
    %c84_70 = arith.constant 84 : index
    %930 = memref.load %arg6[%c84_70] : memref<144xf32, #tpu.memory_space<smem>>
    %931 = vector.broadcast %930 : f32 to vector<8x16xf32>
    %932 = arith.mulf %931, %921 : vector<8x16xf32>
    %933 = arith.addf %915, %932 : vector<8x16xf32>
    %c120_71 = arith.constant 120 : index
    %934 = memref.load %arg6[%c120_71] : memref<144xf32, #tpu.memory_space<smem>>
    %935 = vector.broadcast %934 : f32 to vector<8x16xf32>
    %936 = arith.mulf %935, %921 : vector<8x16xf32>
    %937 = arith.addf %919, %936 : vector<8x16xf32>
    %938 = vector.extract_strided_slice %695 {offsets = [1, 1, 1], sizes = [1, 8, 16], strides = [1, 1, 1]} : vector<4x10x18xf32> to vector<1x8x16xf32>
    %939 = vector.shape_cast %938 : vector<1x8x16xf32> to vector<8x16xf32>
    %c13_72 = arith.constant 13 : index
    %940 = memref.load %arg6[%c13_72] : memref<144xf32, #tpu.memory_space<smem>>
    %941 = vector.broadcast %940 : f32 to vector<8x16xf32>
    %942 = arith.mulf %941, %939 : vector<8x16xf32>
    %943 = arith.addf %925, %942 : vector<8x16xf32>
    %c49_73 = arith.constant 49 : index
    %944 = memref.load %arg6[%c49_73] : memref<144xf32, #tpu.memory_space<smem>>
    %945 = vector.broadcast %944 : f32 to vector<8x16xf32>
    %946 = arith.mulf %945, %939 : vector<8x16xf32>
    %947 = arith.addf %929, %946 : vector<8x16xf32>
    %c85_74 = arith.constant 85 : index
    %948 = memref.load %arg6[%c85_74] : memref<144xf32, #tpu.memory_space<smem>>
    %949 = vector.broadcast %948 : f32 to vector<8x16xf32>
    %950 = arith.mulf %949, %939 : vector<8x16xf32>
    %951 = arith.addf %933, %950 : vector<8x16xf32>
    %c121_75 = arith.constant 121 : index
    %952 = memref.load %arg6[%c121_75] : memref<144xf32, #tpu.memory_space<smem>>
    %953 = vector.broadcast %952 : f32 to vector<8x16xf32>
    %954 = arith.mulf %953, %939 : vector<8x16xf32>
    %955 = arith.addf %937, %954 : vector<8x16xf32>
    %956 = vector.extract_strided_slice %695 {offsets = [1, 1, 2], sizes = [1, 8, 16], strides = [1, 1, 1]} : vector<4x10x18xf32> to vector<1x8x16xf32>
    %957 = vector.shape_cast %956 : vector<1x8x16xf32> to vector<8x16xf32>
    %c14_76 = arith.constant 14 : index
    %958 = memref.load %arg6[%c14_76] : memref<144xf32, #tpu.memory_space<smem>>
    %959 = vector.broadcast %958 : f32 to vector<8x16xf32>
    %960 = arith.mulf %959, %957 : vector<8x16xf32>
    %961 = arith.addf %943, %960 : vector<8x16xf32>
    %c50_77 = arith.constant 50 : index
    %962 = memref.load %arg6[%c50_77] : memref<144xf32, #tpu.memory_space<smem>>
    %963 = vector.broadcast %962 : f32 to vector<8x16xf32>
    %964 = arith.mulf %963, %957 : vector<8x16xf32>
    %965 = arith.addf %947, %964 : vector<8x16xf32>
    %c86_78 = arith.constant 86 : index
    %966 = memref.load %arg6[%c86_78] : memref<144xf32, #tpu.memory_space<smem>>
    %967 = vector.broadcast %966 : f32 to vector<8x16xf32>
    %968 = arith.mulf %967, %957 : vector<8x16xf32>
    %969 = arith.addf %951, %968 : vector<8x16xf32>
    %c122_79 = arith.constant 122 : index
    %970 = memref.load %arg6[%c122_79] : memref<144xf32, #tpu.memory_space<smem>>
    %971 = vector.broadcast %970 : f32 to vector<8x16xf32>
    %972 = arith.mulf %971, %957 : vector<8x16xf32>
    %973 = arith.addf %955, %972 : vector<8x16xf32>
    %974 = vector.extract_strided_slice %695 {offsets = [1, 2, 0], sizes = [1, 8, 16], strides = [1, 1, 1]} : vector<4x10x18xf32> to vector<1x8x16xf32>
    %975 = vector.shape_cast %974 : vector<1x8x16xf32> to vector<8x16xf32>
    %c15_80 = arith.constant 15 : index
    %976 = memref.load %arg6[%c15_80] : memref<144xf32, #tpu.memory_space<smem>>
    %977 = vector.broadcast %976 : f32 to vector<8x16xf32>
    %978 = arith.mulf %977, %975 : vector<8x16xf32>
    %979 = arith.addf %961, %978 : vector<8x16xf32>
    %c51_81 = arith.constant 51 : index
    %980 = memref.load %arg6[%c51_81] : memref<144xf32, #tpu.memory_space<smem>>
    %981 = vector.broadcast %980 : f32 to vector<8x16xf32>
    %982 = arith.mulf %981, %975 : vector<8x16xf32>
    %983 = arith.addf %965, %982 : vector<8x16xf32>
    %c87_82 = arith.constant 87 : index
    %984 = memref.load %arg6[%c87_82] : memref<144xf32, #tpu.memory_space<smem>>
    %985 = vector.broadcast %984 : f32 to vector<8x16xf32>
    %986 = arith.mulf %985, %975 : vector<8x16xf32>
    %987 = arith.addf %969, %986 : vector<8x16xf32>
    %c123_83 = arith.constant 123 : index
    %988 = memref.load %arg6[%c123_83] : memref<144xf32, #tpu.memory_space<smem>>
    %989 = vector.broadcast %988 : f32 to vector<8x16xf32>
    %990 = arith.mulf %989, %975 : vector<8x16xf32>
    %991 = arith.addf %973, %990 : vector<8x16xf32>
    %992 = vector.extract_strided_slice %695 {offsets = [1, 2, 1], sizes = [1, 8, 16], strides = [1, 1, 1]} : vector<4x10x18xf32> to vector<1x8x16xf32>
    %993 = vector.shape_cast %992 : vector<1x8x16xf32> to vector<8x16xf32>
    %c16_84 = arith.constant 16 : index
    %994 = memref.load %arg6[%c16_84] : memref<144xf32, #tpu.memory_space<smem>>
    %995 = vector.broadcast %994 : f32 to vector<8x16xf32>
    %996 = arith.mulf %995, %993 : vector<8x16xf32>
    %997 = arith.addf %979, %996 : vector<8x16xf32>
    %c52_85 = arith.constant 52 : index
    %998 = memref.load %arg6[%c52_85] : memref<144xf32, #tpu.memory_space<smem>>
    %999 = vector.broadcast %998 : f32 to vector<8x16xf32>
    %1000 = arith.mulf %999, %993 : vector<8x16xf32>
    %1001 = arith.addf %983, %1000 : vector<8x16xf32>
    %c88_86 = arith.constant 88 : index
    %1002 = memref.load %arg6[%c88_86] : memref<144xf32, #tpu.memory_space<smem>>
    %1003 = vector.broadcast %1002 : f32 to vector<8x16xf32>
    %1004 = arith.mulf %1003, %993 : vector<8x16xf32>
    %1005 = arith.addf %987, %1004 : vector<8x16xf32>
    %c124_87 = arith.constant 124 : index
    %1006 = memref.load %arg6[%c124_87] : memref<144xf32, #tpu.memory_space<smem>>
    %1007 = vector.broadcast %1006 : f32 to vector<8x16xf32>
    %1008 = arith.mulf %1007, %993 : vector<8x16xf32>
    %1009 = arith.addf %991, %1008 : vector<8x16xf32>
    %1010 = vector.extract_strided_slice %695 {offsets = [1, 2, 2], sizes = [1, 8, 16], strides = [1, 1, 1]} : vector<4x10x18xf32> to vector<1x8x16xf32>
    %1011 = vector.shape_cast %1010 : vector<1x8x16xf32> to vector<8x16xf32>
    %c17_88 = arith.constant 17 : index
    %1012 = memref.load %arg6[%c17_88] : memref<144xf32, #tpu.memory_space<smem>>
    %1013 = vector.broadcast %1012 : f32 to vector<8x16xf32>
    %1014 = arith.mulf %1013, %1011 : vector<8x16xf32>
    %1015 = arith.addf %997, %1014 : vector<8x16xf32>
    %c53_89 = arith.constant 53 : index
    %1016 = memref.load %arg6[%c53_89] : memref<144xf32, #tpu.memory_space<smem>>
    %1017 = vector.broadcast %1016 : f32 to vector<8x16xf32>
    %1018 = arith.mulf %1017, %1011 : vector<8x16xf32>
    %1019 = arith.addf %1001, %1018 : vector<8x16xf32>
    %c89_90 = arith.constant 89 : index
    %1020 = memref.load %arg6[%c89_90] : memref<144xf32, #tpu.memory_space<smem>>
    %1021 = vector.broadcast %1020 : f32 to vector<8x16xf32>
    %1022 = arith.mulf %1021, %1011 : vector<8x16xf32>
    %1023 = arith.addf %1005, %1022 : vector<8x16xf32>
    %c125_91 = arith.constant 125 : index
    %1024 = memref.load %arg6[%c125_91] : memref<144xf32, #tpu.memory_space<smem>>
    %1025 = vector.broadcast %1024 : f32 to vector<8x16xf32>
    %1026 = arith.mulf %1025, %1011 : vector<8x16xf32>
    %1027 = arith.addf %1009, %1026 : vector<8x16xf32>
    %1028 = vector.extract_strided_slice %695 {offsets = [2, 0, 0], sizes = [1, 8, 16], strides = [1, 1, 1]} : vector<4x10x18xf32> to vector<1x8x16xf32>
    %1029 = vector.shape_cast %1028 : vector<1x8x16xf32> to vector<8x16xf32>
    %c18_92 = arith.constant 18 : index
    %1030 = memref.load %arg6[%c18_92] : memref<144xf32, #tpu.memory_space<smem>>
    %1031 = vector.broadcast %1030 : f32 to vector<8x16xf32>
    %1032 = arith.mulf %1031, %1029 : vector<8x16xf32>
    %1033 = arith.addf %1015, %1032 : vector<8x16xf32>
    %c54_93 = arith.constant 54 : index
    %1034 = memref.load %arg6[%c54_93] : memref<144xf32, #tpu.memory_space<smem>>
    %1035 = vector.broadcast %1034 : f32 to vector<8x16xf32>
    %1036 = arith.mulf %1035, %1029 : vector<8x16xf32>
    %1037 = arith.addf %1019, %1036 : vector<8x16xf32>
    %c90_94 = arith.constant 90 : index
    %1038 = memref.load %arg6[%c90_94] : memref<144xf32, #tpu.memory_space<smem>>
    %1039 = vector.broadcast %1038 : f32 to vector<8x16xf32>
    %1040 = arith.mulf %1039, %1029 : vector<8x16xf32>
    %1041 = arith.addf %1023, %1040 : vector<8x16xf32>
    %c126_95 = arith.constant 126 : index
    %1042 = memref.load %arg6[%c126_95] : memref<144xf32, #tpu.memory_space<smem>>
    %1043 = vector.broadcast %1042 : f32 to vector<8x16xf32>
    %1044 = arith.mulf %1043, %1029 : vector<8x16xf32>
    %1045 = arith.addf %1027, %1044 : vector<8x16xf32>
    %1046 = vector.extract_strided_slice %695 {offsets = [2, 0, 1], sizes = [1, 8, 16], strides = [1, 1, 1]} : vector<4x10x18xf32> to vector<1x8x16xf32>
    %1047 = vector.shape_cast %1046 : vector<1x8x16xf32> to vector<8x16xf32>
    %c19_96 = arith.constant 19 : index
    %1048 = memref.load %arg6[%c19_96] : memref<144xf32, #tpu.memory_space<smem>>
    %1049 = vector.broadcast %1048 : f32 to vector<8x16xf32>
    %1050 = arith.mulf %1049, %1047 : vector<8x16xf32>
    %1051 = arith.addf %1033, %1050 : vector<8x16xf32>
    %c55_97 = arith.constant 55 : index
    %1052 = memref.load %arg6[%c55_97] : memref<144xf32, #tpu.memory_space<smem>>
    %1053 = vector.broadcast %1052 : f32 to vector<8x16xf32>
    %1054 = arith.mulf %1053, %1047 : vector<8x16xf32>
    %1055 = arith.addf %1037, %1054 : vector<8x16xf32>
    %c91_98 = arith.constant 91 : index
    %1056 = memref.load %arg6[%c91_98] : memref<144xf32, #tpu.memory_space<smem>>
    %1057 = vector.broadcast %1056 : f32 to vector<8x16xf32>
    %1058 = arith.mulf %1057, %1047 : vector<8x16xf32>
    %1059 = arith.addf %1041, %1058 : vector<8x16xf32>
    %c127_99 = arith.constant 127 : index
    %1060 = memref.load %arg6[%c127_99] : memref<144xf32, #tpu.memory_space<smem>>
    %1061 = vector.broadcast %1060 : f32 to vector<8x16xf32>
    %1062 = arith.mulf %1061, %1047 : vector<8x16xf32>
    %1063 = arith.addf %1045, %1062 : vector<8x16xf32>
    %1064 = vector.extract_strided_slice %695 {offsets = [2, 0, 2], sizes = [1, 8, 16], strides = [1, 1, 1]} : vector<4x10x18xf32> to vector<1x8x16xf32>
    %1065 = vector.shape_cast %1064 : vector<1x8x16xf32> to vector<8x16xf32>
    %c20_100 = arith.constant 20 : index
    %1066 = memref.load %arg6[%c20_100] : memref<144xf32, #tpu.memory_space<smem>>
    %1067 = vector.broadcast %1066 : f32 to vector<8x16xf32>
    %1068 = arith.mulf %1067, %1065 : vector<8x16xf32>
    %1069 = arith.addf %1051, %1068 : vector<8x16xf32>
    %c56_101 = arith.constant 56 : index
    %1070 = memref.load %arg6[%c56_101] : memref<144xf32, #tpu.memory_space<smem>>
    %1071 = vector.broadcast %1070 : f32 to vector<8x16xf32>
    %1072 = arith.mulf %1071, %1065 : vector<8x16xf32>
    %1073 = arith.addf %1055, %1072 : vector<8x16xf32>
    %c92_102 = arith.constant 92 : index
    %1074 = memref.load %arg6[%c92_102] : memref<144xf32, #tpu.memory_space<smem>>
    %1075 = vector.broadcast %1074 : f32 to vector<8x16xf32>
    %1076 = arith.mulf %1075, %1065 : vector<8x16xf32>
    %1077 = arith.addf %1059, %1076 : vector<8x16xf32>
    %c128_103 = arith.constant 128 : index
    %1078 = memref.load %arg6[%c128_103] : memref<144xf32, #tpu.memory_space<smem>>
    %1079 = vector.broadcast %1078 : f32 to vector<8x16xf32>
    %1080 = arith.mulf %1079, %1065 : vector<8x16xf32>
    %1081 = arith.addf %1063, %1080 : vector<8x16xf32>
    %1082 = vector.extract_strided_slice %695 {offsets = [2, 1, 0], sizes = [1, 8, 16], strides = [1, 1, 1]} : vector<4x10x18xf32> to vector<1x8x16xf32>
    %1083 = vector.shape_cast %1082 : vector<1x8x16xf32> to vector<8x16xf32>
    %c21_104 = arith.constant 21 : index
    %1084 = memref.load %arg6[%c21_104] : memref<144xf32, #tpu.memory_space<smem>>
    %1085 = vector.broadcast %1084 : f32 to vector<8x16xf32>
    %1086 = arith.mulf %1085, %1083 : vector<8x16xf32>
    %1087 = arith.addf %1069, %1086 : vector<8x16xf32>
    %c57_105 = arith.constant 57 : index
    %1088 = memref.load %arg6[%c57_105] : memref<144xf32, #tpu.memory_space<smem>>
    %1089 = vector.broadcast %1088 : f32 to vector<8x16xf32>
    %1090 = arith.mulf %1089, %1083 : vector<8x16xf32>
    %1091 = arith.addf %1073, %1090 : vector<8x16xf32>
    %c93_106 = arith.constant 93 : index
    %1092 = memref.load %arg6[%c93_106] : memref<144xf32, #tpu.memory_space<smem>>
    %1093 = vector.broadcast %1092 : f32 to vector<8x16xf32>
    %1094 = arith.mulf %1093, %1083 : vector<8x16xf32>
    %1095 = arith.addf %1077, %1094 : vector<8x16xf32>
    %c129_107 = arith.constant 129 : index
    %1096 = memref.load %arg6[%c129_107] : memref<144xf32, #tpu.memory_space<smem>>
    %1097 = vector.broadcast %1096 : f32 to vector<8x16xf32>
    %1098 = arith.mulf %1097, %1083 : vector<8x16xf32>
    %1099 = arith.addf %1081, %1098 : vector<8x16xf32>
    %1100 = vector.extract_strided_slice %695 {offsets = [2, 1, 1], sizes = [1, 8, 16], strides = [1, 1, 1]} : vector<4x10x18xf32> to vector<1x8x16xf32>
    %1101 = vector.shape_cast %1100 : vector<1x8x16xf32> to vector<8x16xf32>
    %c22_108 = arith.constant 22 : index
    %1102 = memref.load %arg6[%c22_108] : memref<144xf32, #tpu.memory_space<smem>>
    %1103 = vector.broadcast %1102 : f32 to vector<8x16xf32>
    %1104 = arith.mulf %1103, %1101 : vector<8x16xf32>
    %1105 = arith.addf %1087, %1104 : vector<8x16xf32>
    %c58_109 = arith.constant 58 : index
    %1106 = memref.load %arg6[%c58_109] : memref<144xf32, #tpu.memory_space<smem>>
    %1107 = vector.broadcast %1106 : f32 to vector<8x16xf32>
    %1108 = arith.mulf %1107, %1101 : vector<8x16xf32>
    %1109 = arith.addf %1091, %1108 : vector<8x16xf32>
    %c94_110 = arith.constant 94 : index
    %1110 = memref.load %arg6[%c94_110] : memref<144xf32, #tpu.memory_space<smem>>
    %1111 = vector.broadcast %1110 : f32 to vector<8x16xf32>
    %1112 = arith.mulf %1111, %1101 : vector<8x16xf32>
    %1113 = arith.addf %1095, %1112 : vector<8x16xf32>
    %c130_111 = arith.constant 130 : index
    %1114 = memref.load %arg6[%c130_111] : memref<144xf32, #tpu.memory_space<smem>>
    %1115 = vector.broadcast %1114 : f32 to vector<8x16xf32>
    %1116 = arith.mulf %1115, %1101 : vector<8x16xf32>
    %1117 = arith.addf %1099, %1116 : vector<8x16xf32>
    %1118 = vector.extract_strided_slice %695 {offsets = [2, 1, 2], sizes = [1, 8, 16], strides = [1, 1, 1]} : vector<4x10x18xf32> to vector<1x8x16xf32>
    %1119 = vector.shape_cast %1118 : vector<1x8x16xf32> to vector<8x16xf32>
    %c23_112 = arith.constant 23 : index
    %1120 = memref.load %arg6[%c23_112] : memref<144xf32, #tpu.memory_space<smem>>
    %1121 = vector.broadcast %1120 : f32 to vector<8x16xf32>
    %1122 = arith.mulf %1121, %1119 : vector<8x16xf32>
    %1123 = arith.addf %1105, %1122 : vector<8x16xf32>
    %c59_113 = arith.constant 59 : index
    %1124 = memref.load %arg6[%c59_113] : memref<144xf32, #tpu.memory_space<smem>>
    %1125 = vector.broadcast %1124 : f32 to vector<8x16xf32>
    %1126 = arith.mulf %1125, %1119 : vector<8x16xf32>
    %1127 = arith.addf %1109, %1126 : vector<8x16xf32>
    %c95_114 = arith.constant 95 : index
    %1128 = memref.load %arg6[%c95_114] : memref<144xf32, #tpu.memory_space<smem>>
    %1129 = vector.broadcast %1128 : f32 to vector<8x16xf32>
    %1130 = arith.mulf %1129, %1119 : vector<8x16xf32>
    %1131 = arith.addf %1113, %1130 : vector<8x16xf32>
    %c131_115 = arith.constant 131 : index
    %1132 = memref.load %arg6[%c131_115] : memref<144xf32, #tpu.memory_space<smem>>
    %1133 = vector.broadcast %1132 : f32 to vector<8x16xf32>
    %1134 = arith.mulf %1133, %1119 : vector<8x16xf32>
    %1135 = arith.addf %1117, %1134 : vector<8x16xf32>
    %1136 = vector.extract_strided_slice %695 {offsets = [2, 2, 0], sizes = [1, 8, 16], strides = [1, 1, 1]} : vector<4x10x18xf32> to vector<1x8x16xf32>
    %1137 = vector.shape_cast %1136 : vector<1x8x16xf32> to vector<8x16xf32>
    %c24_116 = arith.constant 24 : index
    %1138 = memref.load %arg6[%c24_116] : memref<144xf32, #tpu.memory_space<smem>>
    %1139 = vector.broadcast %1138 : f32 to vector<8x16xf32>
    %1140 = arith.mulf %1139, %1137 : vector<8x16xf32>
    %1141 = arith.addf %1123, %1140 : vector<8x16xf32>
    %c60_117 = arith.constant 60 : index
    %1142 = memref.load %arg6[%c60_117] : memref<144xf32, #tpu.memory_space<smem>>
    %1143 = vector.broadcast %1142 : f32 to vector<8x16xf32>
    %1144 = arith.mulf %1143, %1137 : vector<8x16xf32>
    %1145 = arith.addf %1127, %1144 : vector<8x16xf32>
    %c96_118 = arith.constant 96 : index
    %1146 = memref.load %arg6[%c96_118] : memref<144xf32, #tpu.memory_space<smem>>
    %1147 = vector.broadcast %1146 : f32 to vector<8x16xf32>
    %1148 = arith.mulf %1147, %1137 : vector<8x16xf32>
    %1149 = arith.addf %1131, %1148 : vector<8x16xf32>
    %c132_119 = arith.constant 132 : index
    %1150 = memref.load %arg6[%c132_119] : memref<144xf32, #tpu.memory_space<smem>>
    %1151 = vector.broadcast %1150 : f32 to vector<8x16xf32>
    %1152 = arith.mulf %1151, %1137 : vector<8x16xf32>
    %1153 = arith.addf %1135, %1152 : vector<8x16xf32>
    %1154 = vector.extract_strided_slice %695 {offsets = [2, 2, 1], sizes = [1, 8, 16], strides = [1, 1, 1]} : vector<4x10x18xf32> to vector<1x8x16xf32>
    %1155 = vector.shape_cast %1154 : vector<1x8x16xf32> to vector<8x16xf32>
    %c25_120 = arith.constant 25 : index
    %1156 = memref.load %arg6[%c25_120] : memref<144xf32, #tpu.memory_space<smem>>
    %1157 = vector.broadcast %1156 : f32 to vector<8x16xf32>
    %1158 = arith.mulf %1157, %1155 : vector<8x16xf32>
    %1159 = arith.addf %1141, %1158 : vector<8x16xf32>
    %c61_121 = arith.constant 61 : index
    %1160 = memref.load %arg6[%c61_121] : memref<144xf32, #tpu.memory_space<smem>>
    %1161 = vector.broadcast %1160 : f32 to vector<8x16xf32>
    %1162 = arith.mulf %1161, %1155 : vector<8x16xf32>
    %1163 = arith.addf %1145, %1162 : vector<8x16xf32>
    %c97_122 = arith.constant 97 : index
    %1164 = memref.load %arg6[%c97_122] : memref<144xf32, #tpu.memory_space<smem>>
    %1165 = vector.broadcast %1164 : f32 to vector<8x16xf32>
    %1166 = arith.mulf %1165, %1155 : vector<8x16xf32>
    %1167 = arith.addf %1149, %1166 : vector<8x16xf32>
    %c133_123 = arith.constant 133 : index
    %1168 = memref.load %arg6[%c133_123] : memref<144xf32, #tpu.memory_space<smem>>
    %1169 = vector.broadcast %1168 : f32 to vector<8x16xf32>
    %1170 = arith.mulf %1169, %1155 : vector<8x16xf32>
    %1171 = arith.addf %1153, %1170 : vector<8x16xf32>
    %1172 = vector.extract_strided_slice %695 {offsets = [2, 2, 2], sizes = [1, 8, 16], strides = [1, 1, 1]} : vector<4x10x18xf32> to vector<1x8x16xf32>
    %1173 = vector.shape_cast %1172 : vector<1x8x16xf32> to vector<8x16xf32>
    %c26_124 = arith.constant 26 : index
    %1174 = memref.load %arg6[%c26_124] : memref<144xf32, #tpu.memory_space<smem>>
    %1175 = vector.broadcast %1174 : f32 to vector<8x16xf32>
    %1176 = arith.mulf %1175, %1173 : vector<8x16xf32>
    %1177 = arith.addf %1159, %1176 : vector<8x16xf32>
    %c62_125 = arith.constant 62 : index
    %1178 = memref.load %arg6[%c62_125] : memref<144xf32, #tpu.memory_space<smem>>
    %1179 = vector.broadcast %1178 : f32 to vector<8x16xf32>
    %1180 = arith.mulf %1179, %1173 : vector<8x16xf32>
    %1181 = arith.addf %1163, %1180 : vector<8x16xf32>
    %c98_126 = arith.constant 98 : index
    %1182 = memref.load %arg6[%c98_126] : memref<144xf32, #tpu.memory_space<smem>>
    %1183 = vector.broadcast %1182 : f32 to vector<8x16xf32>
    %1184 = arith.mulf %1183, %1173 : vector<8x16xf32>
    %1185 = arith.addf %1167, %1184 : vector<8x16xf32>
    %c134_127 = arith.constant 134 : index
    %1186 = memref.load %arg6[%c134_127] : memref<144xf32, #tpu.memory_space<smem>>
    %1187 = vector.broadcast %1186 : f32 to vector<8x16xf32>
    %1188 = arith.mulf %1187, %1173 : vector<8x16xf32>
    %1189 = arith.addf %1171, %1188 : vector<8x16xf32>
    %1190 = vector.extract_strided_slice %695 {offsets = [3, 0, 0], sizes = [1, 8, 16], strides = [1, 1, 1]} : vector<4x10x18xf32> to vector<1x8x16xf32>
    %1191 = vector.shape_cast %1190 : vector<1x8x16xf32> to vector<8x16xf32>
    %c27_128 = arith.constant 27 : index
    %1192 = memref.load %arg6[%c27_128] : memref<144xf32, #tpu.memory_space<smem>>
    %1193 = vector.broadcast %1192 : f32 to vector<8x16xf32>
    %1194 = arith.mulf %1193, %1191 : vector<8x16xf32>
    %1195 = arith.addf %1177, %1194 : vector<8x16xf32>
    %c63_129 = arith.constant 63 : index
    %1196 = memref.load %arg6[%c63_129] : memref<144xf32, #tpu.memory_space<smem>>
    %1197 = vector.broadcast %1196 : f32 to vector<8x16xf32>
    %1198 = arith.mulf %1197, %1191 : vector<8x16xf32>
    %1199 = arith.addf %1181, %1198 : vector<8x16xf32>
    %c99_130 = arith.constant 99 : index
    %1200 = memref.load %arg6[%c99_130] : memref<144xf32, #tpu.memory_space<smem>>
    %1201 = vector.broadcast %1200 : f32 to vector<8x16xf32>
    %1202 = arith.mulf %1201, %1191 : vector<8x16xf32>
    %1203 = arith.addf %1185, %1202 : vector<8x16xf32>
    %c135_131 = arith.constant 135 : index
    %1204 = memref.load %arg6[%c135_131] : memref<144xf32, #tpu.memory_space<smem>>
    %1205 = vector.broadcast %1204 : f32 to vector<8x16xf32>
    %1206 = arith.mulf %1205, %1191 : vector<8x16xf32>
    %1207 = arith.addf %1189, %1206 : vector<8x16xf32>
    %1208 = vector.extract_strided_slice %695 {offsets = [3, 0, 1], sizes = [1, 8, 16], strides = [1, 1, 1]} : vector<4x10x18xf32> to vector<1x8x16xf32>
    %1209 = vector.shape_cast %1208 : vector<1x8x16xf32> to vector<8x16xf32>
    %c28_132 = arith.constant 28 : index
    %1210 = memref.load %arg6[%c28_132] : memref<144xf32, #tpu.memory_space<smem>>
    %1211 = vector.broadcast %1210 : f32 to vector<8x16xf32>
    %1212 = arith.mulf %1211, %1209 : vector<8x16xf32>
    %1213 = arith.addf %1195, %1212 : vector<8x16xf32>
    %c64_133 = arith.constant 64 : index
    %1214 = memref.load %arg6[%c64_133] : memref<144xf32, #tpu.memory_space<smem>>
    %1215 = vector.broadcast %1214 : f32 to vector<8x16xf32>
    %1216 = arith.mulf %1215, %1209 : vector<8x16xf32>
    %1217 = arith.addf %1199, %1216 : vector<8x16xf32>
    %c100_134 = arith.constant 100 : index
    %1218 = memref.load %arg6[%c100_134] : memref<144xf32, #tpu.memory_space<smem>>
    %1219 = vector.broadcast %1218 : f32 to vector<8x16xf32>
    %1220 = arith.mulf %1219, %1209 : vector<8x16xf32>
    %1221 = arith.addf %1203, %1220 : vector<8x16xf32>
    %c136_135 = arith.constant 136 : index
    %1222 = memref.load %arg6[%c136_135] : memref<144xf32, #tpu.memory_space<smem>>
    %1223 = vector.broadcast %1222 : f32 to vector<8x16xf32>
    %1224 = arith.mulf %1223, %1209 : vector<8x16xf32>
    %1225 = arith.addf %1207, %1224 : vector<8x16xf32>
    %1226 = vector.extract_strided_slice %695 {offsets = [3, 0, 2], sizes = [1, 8, 16], strides = [1, 1, 1]} : vector<4x10x18xf32> to vector<1x8x16xf32>
    %1227 = vector.shape_cast %1226 : vector<1x8x16xf32> to vector<8x16xf32>
    %c29_136 = arith.constant 29 : index
    %1228 = memref.load %arg6[%c29_136] : memref<144xf32, #tpu.memory_space<smem>>
    %1229 = vector.broadcast %1228 : f32 to vector<8x16xf32>
    %1230 = arith.mulf %1229, %1227 : vector<8x16xf32>
    %1231 = arith.addf %1213, %1230 : vector<8x16xf32>
    %c65_137 = arith.constant 65 : index
    %1232 = memref.load %arg6[%c65_137] : memref<144xf32, #tpu.memory_space<smem>>
    %1233 = vector.broadcast %1232 : f32 to vector<8x16xf32>
    %1234 = arith.mulf %1233, %1227 : vector<8x16xf32>
    %1235 = arith.addf %1217, %1234 : vector<8x16xf32>
    %c101_138 = arith.constant 101 : index
    %1236 = memref.load %arg6[%c101_138] : memref<144xf32, #tpu.memory_space<smem>>
    %1237 = vector.broadcast %1236 : f32 to vector<8x16xf32>
    %1238 = arith.mulf %1237, %1227 : vector<8x16xf32>
    %1239 = arith.addf %1221, %1238 : vector<8x16xf32>
    %c137_139 = arith.constant 137 : index
    %1240 = memref.load %arg6[%c137_139] : memref<144xf32, #tpu.memory_space<smem>>
    %1241 = vector.broadcast %1240 : f32 to vector<8x16xf32>
    %1242 = arith.mulf %1241, %1227 : vector<8x16xf32>
    %1243 = arith.addf %1225, %1242 : vector<8x16xf32>
    %1244 = vector.extract_strided_slice %695 {offsets = [3, 1, 0], sizes = [1, 8, 16], strides = [1, 1, 1]} : vector<4x10x18xf32> to vector<1x8x16xf32>
    %1245 = vector.shape_cast %1244 : vector<1x8x16xf32> to vector<8x16xf32>
    %c30_140 = arith.constant 30 : index
    %1246 = memref.load %arg6[%c30_140] : memref<144xf32, #tpu.memory_space<smem>>
    %1247 = vector.broadcast %1246 : f32 to vector<8x16xf32>
    %1248 = arith.mulf %1247, %1245 : vector<8x16xf32>
    %1249 = arith.addf %1231, %1248 : vector<8x16xf32>
    %c66_141 = arith.constant 66 : index
    %1250 = memref.load %arg6[%c66_141] : memref<144xf32, #tpu.memory_space<smem>>
    %1251 = vector.broadcast %1250 : f32 to vector<8x16xf32>
    %1252 = arith.mulf %1251, %1245 : vector<8x16xf32>
    %1253 = arith.addf %1235, %1252 : vector<8x16xf32>
    %c102_142 = arith.constant 102 : index
    %1254 = memref.load %arg6[%c102_142] : memref<144xf32, #tpu.memory_space<smem>>
    %1255 = vector.broadcast %1254 : f32 to vector<8x16xf32>
    %1256 = arith.mulf %1255, %1245 : vector<8x16xf32>
    %1257 = arith.addf %1239, %1256 : vector<8x16xf32>
    %c138_143 = arith.constant 138 : index
    %1258 = memref.load %arg6[%c138_143] : memref<144xf32, #tpu.memory_space<smem>>
    %1259 = vector.broadcast %1258 : f32 to vector<8x16xf32>
    %1260 = arith.mulf %1259, %1245 : vector<8x16xf32>
    %1261 = arith.addf %1243, %1260 : vector<8x16xf32>
    %1262 = vector.extract_strided_slice %695 {offsets = [3, 1, 1], sizes = [1, 8, 16], strides = [1, 1, 1]} : vector<4x10x18xf32> to vector<1x8x16xf32>
    %1263 = vector.shape_cast %1262 : vector<1x8x16xf32> to vector<8x16xf32>
    %c31_144 = arith.constant 31 : index
    %1264 = memref.load %arg6[%c31_144] : memref<144xf32, #tpu.memory_space<smem>>
    %1265 = vector.broadcast %1264 : f32 to vector<8x16xf32>
    %1266 = arith.mulf %1265, %1263 : vector<8x16xf32>
    %1267 = arith.addf %1249, %1266 : vector<8x16xf32>
    %c67_145 = arith.constant 67 : index
    %1268 = memref.load %arg6[%c67_145] : memref<144xf32, #tpu.memory_space<smem>>
    %1269 = vector.broadcast %1268 : f32 to vector<8x16xf32>
    %1270 = arith.mulf %1269, %1263 : vector<8x16xf32>
    %1271 = arith.addf %1253, %1270 : vector<8x16xf32>
    %c103_146 = arith.constant 103 : index
    %1272 = memref.load %arg6[%c103_146] : memref<144xf32, #tpu.memory_space<smem>>
    %1273 = vector.broadcast %1272 : f32 to vector<8x16xf32>
    %1274 = arith.mulf %1273, %1263 : vector<8x16xf32>
    %1275 = arith.addf %1257, %1274 : vector<8x16xf32>
    %c139_147 = arith.constant 139 : index
    %1276 = memref.load %arg6[%c139_147] : memref<144xf32, #tpu.memory_space<smem>>
    %1277 = vector.broadcast %1276 : f32 to vector<8x16xf32>
    %1278 = arith.mulf %1277, %1263 : vector<8x16xf32>
    %1279 = arith.addf %1261, %1278 : vector<8x16xf32>
    %1280 = vector.extract_strided_slice %695 {offsets = [3, 1, 2], sizes = [1, 8, 16], strides = [1, 1, 1]} : vector<4x10x18xf32> to vector<1x8x16xf32>
    %1281 = vector.shape_cast %1280 : vector<1x8x16xf32> to vector<8x16xf32>
    %c32_148 = arith.constant 32 : index
    %1282 = memref.load %arg6[%c32_148] : memref<144xf32, #tpu.memory_space<smem>>
    %1283 = vector.broadcast %1282 : f32 to vector<8x16xf32>
    %1284 = arith.mulf %1283, %1281 : vector<8x16xf32>
    %1285 = arith.addf %1267, %1284 : vector<8x16xf32>
    %c68_149 = arith.constant 68 : index
    %1286 = memref.load %arg6[%c68_149] : memref<144xf32, #tpu.memory_space<smem>>
    %1287 = vector.broadcast %1286 : f32 to vector<8x16xf32>
    %1288 = arith.mulf %1287, %1281 : vector<8x16xf32>
    %1289 = arith.addf %1271, %1288 : vector<8x16xf32>
    %c104_150 = arith.constant 104 : index
    %1290 = memref.load %arg6[%c104_150] : memref<144xf32, #tpu.memory_space<smem>>
    %1291 = vector.broadcast %1290 : f32 to vector<8x16xf32>
    %1292 = arith.mulf %1291, %1281 : vector<8x16xf32>
    %1293 = arith.addf %1275, %1292 : vector<8x16xf32>
    %c140_151 = arith.constant 140 : index
    %1294 = memref.load %arg6[%c140_151] : memref<144xf32, #tpu.memory_space<smem>>
    %1295 = vector.broadcast %1294 : f32 to vector<8x16xf32>
    %1296 = arith.mulf %1295, %1281 : vector<8x16xf32>
    %1297 = arith.addf %1279, %1296 : vector<8x16xf32>
    %1298 = vector.extract_strided_slice %695 {offsets = [3, 2, 0], sizes = [1, 8, 16], strides = [1, 1, 1]} : vector<4x10x18xf32> to vector<1x8x16xf32>
    %1299 = vector.shape_cast %1298 : vector<1x8x16xf32> to vector<8x16xf32>
    %c33_152 = arith.constant 33 : index
    %1300 = memref.load %arg6[%c33_152] : memref<144xf32, #tpu.memory_space<smem>>
    %1301 = vector.broadcast %1300 : f32 to vector<8x16xf32>
    %1302 = arith.mulf %1301, %1299 : vector<8x16xf32>
    %1303 = arith.addf %1285, %1302 : vector<8x16xf32>
    %c69_153 = arith.constant 69 : index
    %1304 = memref.load %arg6[%c69_153] : memref<144xf32, #tpu.memory_space<smem>>
    %1305 = vector.broadcast %1304 : f32 to vector<8x16xf32>
    %1306 = arith.mulf %1305, %1299 : vector<8x16xf32>
    %1307 = arith.addf %1289, %1306 : vector<8x16xf32>
    %c105_154 = arith.constant 105 : index
    %1308 = memref.load %arg6[%c105_154] : memref<144xf32, #tpu.memory_space<smem>>
    %1309 = vector.broadcast %1308 : f32 to vector<8x16xf32>
    %1310 = arith.mulf %1309, %1299 : vector<8x16xf32>
    %1311 = arith.addf %1293, %1310 : vector<8x16xf32>
    %c141_155 = arith.constant 141 : index
    %1312 = memref.load %arg6[%c141_155] : memref<144xf32, #tpu.memory_space<smem>>
    %1313 = vector.broadcast %1312 : f32 to vector<8x16xf32>
    %1314 = arith.mulf %1313, %1299 : vector<8x16xf32>
    %1315 = arith.addf %1297, %1314 : vector<8x16xf32>
    %1316 = vector.extract_strided_slice %695 {offsets = [3, 2, 1], sizes = [1, 8, 16], strides = [1, 1, 1]} : vector<4x10x18xf32> to vector<1x8x16xf32>
    %1317 = vector.shape_cast %1316 : vector<1x8x16xf32> to vector<8x16xf32>
    %c34_156 = arith.constant 34 : index
    %1318 = memref.load %arg6[%c34_156] : memref<144xf32, #tpu.memory_space<smem>>
    %1319 = vector.broadcast %1318 : f32 to vector<8x16xf32>
    %1320 = arith.mulf %1319, %1317 : vector<8x16xf32>
    %1321 = arith.addf %1303, %1320 : vector<8x16xf32>
    %c70_157 = arith.constant 70 : index
    %1322 = memref.load %arg6[%c70_157] : memref<144xf32, #tpu.memory_space<smem>>
    %1323 = vector.broadcast %1322 : f32 to vector<8x16xf32>
    %1324 = arith.mulf %1323, %1317 : vector<8x16xf32>
    %1325 = arith.addf %1307, %1324 : vector<8x16xf32>
    %c106_158 = arith.constant 106 : index
    %1326 = memref.load %arg6[%c106_158] : memref<144xf32, #tpu.memory_space<smem>>
    %1327 = vector.broadcast %1326 : f32 to vector<8x16xf32>
    %1328 = arith.mulf %1327, %1317 : vector<8x16xf32>
    %1329 = arith.addf %1311, %1328 : vector<8x16xf32>
    %c142_159 = arith.constant 142 : index
    %1330 = memref.load %arg6[%c142_159] : memref<144xf32, #tpu.memory_space<smem>>
    %1331 = vector.broadcast %1330 : f32 to vector<8x16xf32>
    %1332 = arith.mulf %1331, %1317 : vector<8x16xf32>
    %1333 = arith.addf %1315, %1332 : vector<8x16xf32>
    %1334 = vector.extract_strided_slice %695 {offsets = [3, 2, 2], sizes = [1, 8, 16], strides = [1, 1, 1]} : vector<4x10x18xf32> to vector<1x8x16xf32>
    %1335 = vector.shape_cast %1334 : vector<1x8x16xf32> to vector<8x16xf32>
    %c35_160 = arith.constant 35 : index
    %1336 = memref.load %arg6[%c35_160] : memref<144xf32, #tpu.memory_space<smem>>
    %1337 = vector.broadcast %1336 : f32 to vector<8x16xf32>
    %1338 = arith.mulf %1337, %1335 : vector<8x16xf32>
    %1339 = arith.addf %1321, %1338 : vector<8x16xf32>
    %c71_161 = arith.constant 71 : index
    %1340 = memref.load %arg6[%c71_161] : memref<144xf32, #tpu.memory_space<smem>>
    %1341 = vector.broadcast %1340 : f32 to vector<8x16xf32>
    %1342 = arith.mulf %1341, %1335 : vector<8x16xf32>
    %1343 = arith.addf %1325, %1342 : vector<8x16xf32>
    %c107_162 = arith.constant 107 : index
    %1344 = memref.load %arg6[%c107_162] : memref<144xf32, #tpu.memory_space<smem>>
    %1345 = vector.broadcast %1344 : f32 to vector<8x16xf32>
    %1346 = arith.mulf %1345, %1335 : vector<8x16xf32>
    %1347 = arith.addf %1329, %1346 : vector<8x16xf32>
    %c143_163 = arith.constant 143 : index
    %1348 = memref.load %arg6[%c143_163] : memref<144xf32, #tpu.memory_space<smem>>
    %1349 = vector.broadcast %1348 : f32 to vector<8x16xf32>
    %1350 = arith.mulf %1349, %1335 : vector<8x16xf32>
    %1351 = arith.addf %1333, %1350 : vector<8x16xf32>
    %1352 = vector.shape_cast %1339 : vector<8x16xf32> to vector<1x8x16xf32>
    %1353 = vector.shape_cast %1343 : vector<8x16xf32> to vector<1x8x16xf32>
    %1354 = vector.shape_cast %1347 : vector<8x16xf32> to vector<1x8x16xf32>
    %1355 = vector.shape_cast %1351 : vector<8x16xf32> to vector<1x8x16xf32>
    %1356 = tpu.concatenate %1352, %1353, %1354, %1355 in 0 : vector<1x8x16xf32>, vector<1x8x16xf32>, vector<1x8x16xf32>, vector<1x8x16xf32> -> vector<4x8x16xf32>
    %1357 = vector.extract_strided_slice %5 {offsets = [0, 2, 2], sizes = [4, 8, 16], strides = [1, 1, 1]} : vector<4x12x20xf32> to vector<4x8x16xf32>
    %1358 = arith.addf %1356, %1357 : vector<4x8x16xf32>
    %c0_164 = arith.constant 0 : index
    %c0_165 = arith.constant 0 : index
    %c0_166 = arith.constant 0 : index
    %c0_167 = arith.constant 0 : index
    %1359 = vector.load %arg8[%c0_164, %c0_165, %c0_166, %c0_167] : memref<1x4x8x16xf32, #tpu.memory_space<vmem>>, vector<1x4x8x16xf32>
    %1360 = vector.shape_cast %1359 : vector<1x4x8x16xf32> to vector<4x8x16xf32>
    %1361 = vector.shape_cast %1358 : vector<4x8x16xf32> to vector<1x4x8x16xf32>
    tpu.vector_store %arg8[%c0_164, %c0_165, %c0_166, %c0_167], %1361 {strides = array<i32>} : memref<1x4x8x16xf32, #tpu.memory_space<vmem>>, vector<1x4x8x16xf32>,
    return
  }
  func.func @transform_0(%arg0: i32, %arg1: i32) -> (i32, i32, i32, i32) {
    %c0_i32 = arith.constant 0 : i32
    %c0_i32_0 = arith.constant 0 : i32
    %c0_i32_1 = arith.constant 0 : i32
    return %arg0, %c0_i32, %arg1, %c0_i32_0 : i32, i32, i32, i32
  }
  func.func @transform_1(%arg0: i32, %arg1: i32) -> (i32, i32, i32, i32) {
    %c1_i32 = arith.constant 1 : i32
    %0 = arith.addi %arg1, %c1_i32 : i32
    %c1_i32_0 = arith.constant 1 : i32
    %1 = arith.muli %0, %c1_i32_0 : i32
    %c0_i32 = arith.constant 0 : i32
    %c0_i32_1 = arith.constant 0 : i32
    %c0_i32_2 = arith.constant 0 : i32
    return %arg0, %c0_i32, %1, %c0_i32_1 : i32, i32, i32, i32
  }
  func.func @transform_2(%arg0: i32, %arg1: i32) -> i32 {
    %c0_i32 = arith.constant 0 : i32
    %c0_i32_0 = arith.constant 0 : i32
    return %c0_i32 : i32
  }
  func.func @transform_3(%arg0: i32, %arg1: i32) -> i32 {
    %c0_i32 = arith.constant 0 : i32
    %c0_i32_0 = arith.constant 0 : i32
    return %c0_i32 : i32
  }
  func.func @transform_4(%arg0: i32, %arg1: i32) -> i32 {
    %c0_i32 = arith.constant 0 : i32
    %c0_i32_0 = arith.constant 0 : i32
    return %c0_i32 : i32
  }
  func.func @transform_5(%arg0: i32, %arg1: i32) -> i32 {
    %c0_i32 = arith.constant 0 : i32
    %c0_i32_0 = arith.constant 0 : i32
    return %c0_i32 : i32
  }
  func.func @transform_6(%arg0: i32, %arg1: i32) -> (i32, i32, i32, i32) {
    %c0_i32 = arith.constant 0 : i32
    %c0_i32_0 = arith.constant 0 : i32
    %c0_i32_1 = arith.constant 0 : i32
    return %arg0, %c0_i32, %arg1, %c0_i32_0 : i32, i32, i32, i32
  }
}

</mosaic_0001>

<llo_original>
// kernel: residual_conv_unit.1
$region0: #{residual_conv_unit.1}
  #allocation0 [shape = 'u32[]', space=smem, size = 0x4, offset = 0x4, fixed_abs, tag = 'smem constant byte address 0x4 - core index']
  #allocation1 [shape = 'u32[144,128]{1,0:T(1,128)}', space=vmem, size = 0x12000, scoped, tag = 'internal scratch']
  %s0 = inlined_call_operand.vmem [shape: f32[2,4,24,20], index: 0, kind: input, shape index: {}, may-alias: {0,1}]
  %s1 = inlined_call_operand.vmem [shape: f32[2,4,24,20], index: 1, kind: input, shape index: {}, may-alias: {0,1}]
  %s2 = inlined_call_operand.vmem [shape: f32[144], index: 2, kind: input, shape index: {}]
  %s3 = inlined_call_operand.vmem [shape: f32[4], index: 3, kind: input, shape index: {}]
  %s4 = inlined_call_operand.vmem [shape: f32[144], index: 4, kind: input, shape index: {}]
  %s5 = inlined_call_operand.vmem [shape: f32[4], index: 5, kind: input, shape index: {}]
  %s6 = inlined_call_operand.hbm [shape: f32[2,4,16,16], index: 6, kind: output, shape index: {}]
  %s7 = sld [smem:[#allocation0]]
  $region149: #{residual_conv_unit.1} parent=0
    _
  %s9 = ssub.s32 1, %s7
  %s10 = scalar_select 0, %s9, %s7
  $region1: #{residual_conv_unit.1} parent=0
    #allocation2 [shape = 'u8[32768]{0}', space=vmem, size = 0x8000, scoped, tag = 'input window, operand 0']
    #allocation3 [shape = 'u8[32768]{0}', space=vmem, size = 0x8000, scoped, tag = 'input window, operand 1']
    #allocation4 [shape = 'u8[1024]{0}', space=smem, size = 0x400, scoped, tag = 'input window, operand 2, single buffered']
    #allocation5 [shape = 's32[2]{0}', space=sflag, size = 0x8, scoped, tag = 'scoped memory for residual_conv_unit.1']
    #allocation6 [shape = 's32[2]{0}', space=sflag, size = 0x8, scoped, tag = 'scoped memory for residual_conv_unit.1']
    #allocation7 [shape = 'u8[512]{0}', space=smem, size = 0x200, scoped, tag = 'input window, operand 3, single buffered']
    #allocation8 [shape = 's32[1]{0}', space=sflag, size = 0x4, scoped, tag = 'scoped memory for residual_conv_unit.1']
    #allocation9 [shape = 'u8[1024]{0}', space=smem, size = 0x400, scoped, tag = 'input window, operand 4, single buffered']
    #allocation10 [shape = 'u8[512]{0}', space=smem, size = 0x200, scoped, tag = 'input window, operand 5, single buffered']
    #allocation11 [shape = 's32[1]{0}', space=sflag, size = 0x4, scoped, tag = 'scoped memory for residual_conv_unit.1']
    #allocation12 [shape = 'u8[32768]{0}', space=vmem, size = 0x8000, scoped, tag = 'output window, operand 0']
    %11 = vsyncpa [#allocation6], 0
    %12 = vsyncpa [#allocation8], 0
    %13 = vsyncpa [#allocation11], 0
    %14 = vsyncpa [#allocation5], 0
    %s15 = scalar_lea.sflag [#allocation5], 1
    %16 = vsyncpa %s15, 0
    loop: start=0, step=1, limit=6
    $region2: #{residual_conv_unit.1} parent=1 // loop_pre_header
      _
    $region3: #{residual_conv_unit.1} parent=1 // loop_header
      %s18 = sphi 0, %s22
      %p19 = scmp.ge.s32.totalorder %s18, 6
      %s25 = sphi 0, %s37
      %s26 = sphi 0, %s33
      %s27 = sphi 0, %s25
      %s28 = sphi 0, %s26
      %s29 = sphi 0, %s27
      %s30 = sphi 0, %s28
      %s42 = sphi 0, %s44
      %s45 = sphi 0, %s42
      %s46 = sphi 0, %s45
      %s62 = sphi 0, %s46
      %s72 = sphi 0, %s74
      %s75 = sphi 0, %s72
      %s76 = sphi 0, %s75
      %s92 = sphi 0, %s76
      %s96 = sphi 0, %s96
      %s98 = sphi 0, %s96
      %s99 = sphi 0, %s98
      %s113 = sphi 0, %s99
      %s117 = sphi 0, %s117
      %s119 = sphi 0, %s117
      %s120 = sphi 0, %s119
      %s134 = sphi 0, %s120
      %s138 = sphi 0, %s138
      %s140 = sphi 0, %s138
      %s141 = sphi 0, %s140
      %s155 = sphi 0, %s141
      %s159 = sphi 0, %s159
      %s161 = sphi 0, %s159
      %s162 = sphi 0, %s161
      %s176 = sphi 0, %s162
      %s184 = sphi 0, %s186
      %s187 = sphi 0, %s184
      %s188 = sphi 0, %s187
      %s204 = sphi 0, %s188
    $region4: #{residual_conv_unit.1} parent=1 // loop_header_branch
      %21 = sbr.rel (%p19) target = $region8
    $region5: #{residual_conv_unit.1} parent=1 // loop_body
      %s23 = ssub.s32 %s18, 1
      %s24 = ssub.s32 %s18, 2
      %s31 = sadd.s32 1, %s26
      %p32 = scmp.ge.s32.totalorder %s31, 2
      %s33 = scalar_select %p32, 0, %s31
      %s34 = sadd.s32 1, %s25
      %s35 = scalar_select %p32, %s34, %s25
      %p36 = scmp.ge.s32.totalorder %s35, 2
      %s37 = scalar_select %p36, 0, %s35
      %s38 = ssub.s32 %s25, %s37
      %s39 = ssub.s32 %s26, %s33
      %s40 = sor.u32 %s38, %s39
      %p41 = scmp.eq.s32.totalorder %s40, 0
      %s43 = sadd.s32 %s42, 1
      %s44 = scalar_select %p41, %s42, %s43
      %p47 = pneg %p41
      %p48 = scmp.eq.s32.totalorder %s18, 3
      %p49 = por %p47, %p48
      %p50 = scmp.ne.s32.totalorder %s42, %s45
      %p51 = scmp.eq.s32.totalorder %s18, 0
      %p52 = por %p50, %p51
      %p53 = scmp.ne.s32.totalorder %s42, %s45
      %p54 = scmp.eq.s32.totalorder %s23, 3
      %p55 = por %p53, %p54
      %p56 = scmp.ne.s32.totalorder %s45, %s46
      %p57 = scmp.eq.s32.totalorder %s23, 0
      %p58 = por %p56, %p57
      %p59 = scmp.ne.s32.totalorder %s45, %s46
      %p60 = scmp.eq.s32.totalorder %s24, 3
      %p61 = por %p59, %p60
      %p63 = scmp.ne.s32.totalorder %s46, %s62
      %p64 = scmp.eq.s32.totalorder %s24, 0
      %p65 = por %p63, %p64
      %s66 = sadd.s32 %s26, 1
      %s67 = sadd.s32 %s33, 1
      %s68 = ssub.s32 %s25, %s37
      %s69 = ssub.s32 %s66, %s67
      %s70 = sor.u32 %s68, %s69
      %p71 = scmp.eq.s32.totalorder %s70, 0
      %s73 = sadd.s32 %s72, 1
      %s74 = scalar_select %p71, %s72, %s73
      %p77 = pneg %p71
      %p78 = scmp.eq.s32.totalorder %s18, 3
      %p79 = por %p77, %p78
      %p80 = scmp.ne.s32.totalorder %s72, %s75
      %p81 = scmp.eq.s32.totalorder %s18, 0
      %p82 = por %p80, %p81
      %p83 = scmp.ne.s32.totalorder %s72, %s75
      %p84 = scmp.eq.s32.totalorder %s23, 3
      %p85 = por %p83, %p84
      %p86 = scmp.ne.s32.totalorder %s75, %s76
      %p87 = scmp.eq.s32.totalorder %s23, 0
      %p88 = por %p86, %p87
      %p89 = scmp.ne.s32.totalorder %s75, %s76
      %p90 = scmp.eq.s32.totalorder %s24, 3
      %p91 = por %p89, %p90
      %p93 = scmp.ne.s32.totalorder %s76, %s92
      %p94 = scmp.eq.s32.totalorder %s24, 0
      %p95 = por %p93, %p94
      %s97 = sadd.s32 %s96, 1
      %p100 = scmp.eq.s32.totalorder %s18, 3
      %p101 = scmp.ne.s32.totalorder %s96, %s98
      %p102 = scmp.eq.s32.totalorder %s18, 0
      %p103 = por %p101, %p102
      %p104 = scmp.ne.s32.totalorder %s96, %s98
      %p105 = scmp.eq.s32.totalorder %s23, 3
      %p106 = por %p104, %p105
      %p107 = scmp.ne.s32.totalorder %s98, %s99
      %p108 = scmp.eq.s32.totalorder %s23, 0
      %p109 = por %p107, %p108
      %p110 = scmp.ne.s32.totalorder %s98, %s99
      %p111 = scmp.eq.s32.totalorder %s24, 3
      %p112 = por %p110, %p111
      %p114 = scmp.ne.s32.totalorder %s99, %s113
      %p115 = scmp.eq.s32.totalorder %s24, 0
      %p116 = por %p114, %p115
      %s118 = sadd.s32 %s117, 1
      %p121 = scmp.eq.s32.totalorder %s18, 3
      %p122 = scmp.ne.s32.totalorder %s117, %s119
      %p123 = scmp.eq.s32.totalorder %s18, 0
      %p124 = por %p122, %p123
      %p125 = scmp.ne.s32.totalorder %s117, %s119
      %p126 = scmp.eq.s32.totalorder %s23, 3
      %p127 = por %p125, %p126
      %p128 = scmp.ne.s32.totalorder %s119, %s120
      %p129 = scmp.eq.s32.totalorder %s23, 0
      %p130 = por %p128, %p129
      %p131 = scmp.ne.s32.totalorder %s119, %s120
      %p132 = scmp.eq.s32.totalorder %s24, 3
      %p133 = por %p131, %p132
      %p135 = scmp.ne.s32.totalorder %s120, %s134
      %p136 = scmp.eq.s32.totalorder %s24, 0
      %p137 = por %p135, %p136
      %s139 = sadd.s32 %s138, 1
      %p142 = scmp.eq.s32.totalorder %s18, 3
      %p143 = scmp.ne.s32.totalorder %s138, %s140
      %p144 = scmp.eq.s32.totalorder %s18, 0
      %p145 = por %p143, %p144
      %p146 = scmp.ne.s32.totalorder %s138, %s140
      %p147 = scmp.eq.s32.totalorder %s23, 3
      %p148 = por %p146, %p147
      %p149 = scmp.ne.s32.totalorder %s140, %s141
      %p150 = scmp.eq.s32.totalorder %s23, 0
      %p151 = por %p149, %p150
      %p152 = scmp.ne.s32.totalorder %s140, %s141
      %p153 = scmp.eq.s32.totalorder %s24, 3
      %p154 = por %p152, %p153
      %p156 = scmp.ne.s32.totalorder %s141, %s155
      %p157 = scmp.eq.s32.totalorder %s24, 0
      %p158 = por %p156, %p157
      %s160 = sadd.s32 %s159, 1
      %p163 = scmp.eq.s32.totalorder %s18, 3
      %p164 = scmp.ne.s32.totalorder %s159, %s161
      %p165 = scmp.eq.s32.totalorder %s18, 0
      %p166 = por %p164, %p165
      %p167 = scmp.ne.s32.totalorder %s159, %s161
      %p168 = scmp.eq.s32.totalorder %s23, 3
      %p169 = por %p167, %p168
      %p170 = scmp.ne.s32.totalorder %s161, %s162
      %p171 = scmp.eq.s32.totalorder %s23, 0
      %p172 = por %p170, %p171
      %p173 = scmp.ne.s32.totalorder %s161, %s162
      %p174 = scmp.eq.s32.totalorder %s24, 3
      %p175 = por %p173, %p174
      %p177 = scmp.ne.s32.totalorder %s162, %s176
      %p178 = scmp.eq.s32.totalorder %s24, 0
      %p179 = por %p177, %p178
      %s180 = ssub.s32 %s25, %s37
      %s181 = ssub.s32 %s26, %s33
      %s182 = sor.u32 %s180, %s181
      %p183 = scmp.eq.s32.totalorder %s182, 0
      %s185 = sadd.s32 %s184, 1
      %s186 = scalar_select %p183, %s184, %s185
      %p189 = pneg %p183
      %p190 = scmp.eq.s32.totalorder %s18, 3
      %p191 = por %p189, %p190
      %p192 = scmp.ne.s32.totalorder %s184, %s187
      %p193 = scmp.eq.s32.totalorder %s18, 0
      %p194 = por %p192, %p193
      %p195 = scmp.ne.s32.totalorder %s184, %s187
      %p196 = scmp.eq.s32.totalorder %s23, 3
      %p197 = por %p195, %p196
      %p198 = scmp.ne.s32.totalorder %s187, %s188
      %p199 = scmp.eq.s32.totalorder %s23, 0
      %p200 = por %p198, %p199
      %p201 = scmp.ne.s32.totalorder %s187, %s188
      %p202 = scmp.eq.s32.totalorder %s24, 3
      %p203 = por %p201, %p202
      %p205 = scmp.ne.s32.totalorder %s188, %s204
      %p206 = scmp.eq.s32.totalorder %s24, 0
      %p207 = por %p205, %p206
      %p208 = scmp.le.s32.totalorder 1, %s18
      %p209 = scmp.lt.s32.totalorder %s18, 5
      %p210 = pnand %p208, %p209
      %p211 = pneg %p210
      // Predicated region
      $region9: #{residual_conv_unit.1} parent=5 // pred_check
        _
      $region10: #{residual_conv_unit.1} parent=5 // pred_check_branch
        %213 = sbr.rel (%p210) target = $region12
      $region11: #{residual_conv_unit.1} parent=5 // pred_region
        %s214 = ssub.s32 %s18, 1
        // Predicated region
        $region13: #{residual_conv_unit.1} parent=11 // pred_check
          %p215 = pneg %p109
        $region14: #{residual_conv_unit.1} parent=11 // pred_check_branch
          %217 = sbr.rel (%p215) target = $region16
        $region15: #{residual_conv_unit.1} parent=11 // pred_region
          %s219 = ssub.s32 32, 32
          %220 = vsyncadd [#allocation6], %s219
          %s222 = sshll.u32 %s2, 4
          %s223 = int_to_ptr.vmem [resolvable:$true] %s222
          %225 = dma.vmem_to_smem %s223, 32, [#allocation4], [#allocation6]
        $region16: #{residual_conv_unit.1} parent=11 // pred_fallthru
          _
        // Predicated region
        $region17: #{residual_conv_unit.1} parent=11 // pred_check
          %p226 = pneg %p130
        $region18: #{residual_conv_unit.1} parent=11 // pred_check_branch
          %228 = sbr.rel (%p226) target = $region20
        $region19: #{residual_conv_unit.1} parent=11 // pred_region
          %s230 = ssub.s32 16, 16
          %231 = vsyncadd [#allocation8], %s230
          %s233 = sshll.u32 %s3, 4
          %s234 = int_to_ptr.vmem [resolvable:$true] %s233
          %236 = dma.vmem_to_smem %s234, 16, [#allocation7], [#allocation8]
        $region20: #{residual_conv_unit.1} parent=11 // pred_fallthru
          _
        // Predicated region
        $region21: #{residual_conv_unit.1} parent=11 // pred_check
          %p237 = pneg %p151
        $region22: #{residual_conv_unit.1} parent=11 // pred_check_branch
          %239 = sbr.rel (%p237) target = $region24
        $region23: #{residual_conv_unit.1} parent=11 // pred_region
          %s241 = ssub.s32 32, 32
          %242 = vsyncadd [#allocation8], %s241
          %s244 = sshll.u32 %s4, 4
          %s245 = int_to_ptr.vmem [resolvable:$true] %s244
          %247 = dma.vmem_to_smem %s245, 32, [#allocation9], [#allocation8]
        $region24: #{residual_conv_unit.1} parent=11 // pred_fallthru
          _
        // Predicated region
        $region25: #{residual_conv_unit.1} parent=11 // pred_check
          %p248 = pneg %p172
        $region26: #{residual_conv_unit.1} parent=11 // pred_check_branch
          %250 = sbr.rel (%p248) target = $region28
        $region27: #{residual_conv_unit.1} parent=11 // pred_region
          %s252 = ssub.s32 16, 16
          %253 = vsyncadd [#allocation11], %s252
          %s255 = sshll.u32 %s5, 4
          %s256 = int_to_ptr.vmem [resolvable:$true] %s255
          %258 = dma.vmem_to_smem %s256, 16, [#allocation10], [#allocation11]
        $region28: #{residual_conv_unit.1} parent=11 // pred_fallthru
          _
      $region12: #{residual_conv_unit.1} parent=5 // pred_fallthru
        _
      %p259 = scmp.lt.s32.totalorder %s18, 4
      // Predicated region
      $region29: #{residual_conv_unit.1} parent=5 // pred_check
        %p260 = pneg %p259
      $region30: #{residual_conv_unit.1} parent=5 // pred_check_branch
        %262 = sbr.rel (%p260) target = $region32
      $region31: #{residual_conv_unit.1} parent=5 // pred_region
        // Predicated region
        $region33: #{residual_conv_unit.1} parent=31 // pred_check
          %p263 = pneg %p52
        $region34: #{residual_conv_unit.1} parent=31 // pred_check_branch
          %265 = sbr.rel (%p263) target = $region36
        $region35: #{residual_conv_unit.1} parent=31 // pred_region
          %s266 = sand.u32 %s42, 1
          %s267 = sand.u32 %s42, 1
          %s268 = smul.addr %s267, 32
          %s269 = scalar_lea.vmem [#allocation2], %s268
          %s270 = smul.addr %s25, 12
          %s271 = sadd.s32 %s26, %s270
          %s272 = smul.addr %s271, 8
          %s273 = scalar_lea.vmem %s0, %s272
          // Predicated region
          $region37: #{residual_conv_unit.1} parent=35 // pred_check
            _
          $region38: #{residual_conv_unit.1} parent=35 // pred_check_branch
            %275 = sbr.rel (0) target = $region40
          $region39: #{residual_conv_unit.1} parent=35 // pred_region
            // Predicated region
            $region41: #{residual_conv_unit.1} parent=39 // pred_check
              _
            $region42: #{residual_conv_unit.1} parent=39 // pred_check_branch
              %277 = sbr.rel (0) target = $region44
            $region43: #{residual_conv_unit.1} parent=39 // pred_region
              // Predicated region
              $region56: #{residual_conv_unit.1} parent=43 // pred_check
                _
              $region57: #{residual_conv_unit.1} parent=43 // pred_check_branch
                %298 = sbr.rel (0) target = $region59
              $region58: #{residual_conv_unit.1} parent=43 // pred_region
                loop: start=0, step=1, limit=1
                $region60: #{residual_conv_unit.1} parent=58 // loop_pre_header
                  _
                $region61: #{residual_conv_unit.1} parent=58 // loop_header
                  %s300 = sphi 0, %s304
                  %p301 = scmp.ge.s32.totalorder %s300, 1
                  %s305 = sphi %s273, %s273
                  %s306 = sphi %s269, %s269
                $region62: #{residual_conv_unit.1} parent=58 // loop_header_branch
                  %303 = sbr.rel (%p301) target = $region66
                $region63: #{residual_conv_unit.1} parent=58 // loop_body
                  %v307 = vld [vmem:[%s305] sm:$0xff]
                  %308 = vst [vmem:[%s306] sm:$0xff] %v307
                  %v309 = vld [vmem:[%s305 + $0x18] sm:$0xff]
                  %310 = vst [vmem:[%s306 + $0x8] sm:$0xff] %v309
                  %v311 = vld [vmem:[%s305 + $0x30] sm:$0xff]
                  %312 = vst [vmem:[%s306 + $0x10] sm:$0xff] %v311
                  %v313 = vld [vmem:[%s305 + $0x48] sm:$0xff]
                  %314 = vst [vmem:[%s306 + $0x18] sm:$0xff] %v313
                $region64: #{residual_conv_unit.1} parent=58 // loop_footer
                  %s304 = sadd.s32 1, %s300
                $region65: #{residual_conv_unit.1} parent=58 // loop_footer_branch
                  %299 = sbr.rel target = $region61
                $region66: #{residual_conv_unit.1} parent=58 // loop_exit
                  _
              $region59: #{residual_conv_unit.1} parent=43 // pred_fallthru
                _
              // Predicated region
              $region67: #{residual_conv_unit.1} parent=43 // pred_check
                _
              $region68: #{residual_conv_unit.1} parent=43 // pred_check_branch
                %316 = sbr.rel target = $region70
              $region69: #{residual_conv_unit.1} parent=43 // pred_region
                _
              $region70: #{residual_conv_unit.1} parent=43 // pred_fallthru
                _
            $region44: #{residual_conv_unit.1} parent=39 // pred_fallthru
              _
            // Predicated region
            $region45: #{residual_conv_unit.1} parent=39 // pred_check
              _
            $region46: #{residual_conv_unit.1} parent=39 // pred_check_branch
              %279 = sbr.rel target = $region48
            $region47: #{residual_conv_unit.1} parent=39 // pred_region
              loop: start=0, step=1, limit=1
              $region49: #{residual_conv_unit.1} parent=47 // loop_pre_header
                _
              $region50: #{residual_conv_unit.1} parent=47 // loop_header
                %s282 = sphi 0, %s286
                %p283 = scmp.ge.s32.totalorder %s282, 1
                %s287 = sphi %s273, %s273
                %s288 = sphi %s269, %s269
              $region51: #{residual_conv_unit.1} parent=47 // loop_header_branch
                %285 = sbr.rel (%p283) target = $region55
              $region52: #{residual_conv_unit.1} parent=47 // loop_body
                %v289 = vld [vmem:[%s287] sm:$0xff]
                %290 = vst [vmem:[%s288] sm:$0xff] %v289
                %v291 = vld [vmem:[%s287 + $0x18] sm:$0xff]
                %292 = vst [vmem:[%s288 + $0x8] sm:$0xff] %v291
                %v293 = vld [vmem:[%s287 + $0x30] sm:$0xff]
                %294 = vst [vmem:[%s288 + $0x10] sm:$0xff] %v293
                %v295 = vld [vmem:[%s287 + $0x48] sm:$0xff]
                %296 = vst [vmem:[%s288 + $0x18] sm:$0xff] %v295
              $region53: #{residual_conv_unit.1} parent=47 // loop_footer
                %s286 = sadd.s32 1, %s282
              $region54: #{residual_conv_unit.1} parent=47 // loop_footer_branch
                %281 = sbr.rel target = $region50
              $region55: #{residual_conv_unit.1} parent=47 // loop_exit
                _
            $region48: #{residual_conv_unit.1} parent=39 // pred_fallthru
              _
          $region40: #{residual_conv_unit.1} parent=35 // pred_fallthru
            _
          %317 = vnop
        $region36: #{residual_conv_unit.1} parent=31 // pred_fallthru
          _
        // Predicated region
        $region71: #{residual_conv_unit.1} parent=31 // pred_check
          %p318 = pneg %p82
        $region72: #{residual_conv_unit.1} parent=31 // pred_check_branch
          %320 = sbr.rel (%p318) target = $region74
        $region73: #{residual_conv_unit.1} parent=31 // pred_region
          %s321 = sand.u32 %s72, 1
          %s322 = sand.u32 %s72, 1
          %s323 = smul.addr %s322, 32
          %s324 = scalar_lea.vmem [#allocation3], %s323
          %s325 = sadd.s32 %s26, 1
          %s326 = smul.addr %s25, 12
          %s327 = sadd.s32 %s325, %s326
          %s328 = smul.addr %s327, 8
          %s329 = scalar_lea.vmem %s1, %s328
          // Predicated region
          $region75: #{residual_conv_unit.1} parent=73 // pred_check
            _
          $region76: #{residual_conv_unit.1} parent=73 // pred_check_branch
            %331 = sbr.rel (0) target = $region78
          $region77: #{residual_conv_unit.1} parent=73 // pred_region
            // Predicated region
            $region79: #{residual_conv_unit.1} parent=77 // pred_check
              _
            $region80: #{residual_conv_unit.1} parent=77 // pred_check_branch
              %333 = sbr.rel (0) target = $region82
            $region81: #{residual_conv_unit.1} parent=77 // pred_region
              // Predicated region
              $region94: #{residual_conv_unit.1} parent=81 // pred_check
                _
              $region95: #{residual_conv_unit.1} parent=81 // pred_check_branch
                %354 = sbr.rel (0) target = $region97
              $region96: #{residual_conv_unit.1} parent=81 // pred_region
                loop: start=0, step=1, limit=1
                $region98: #{residual_conv_unit.1} parent=96 // loop_pre_header
                  _
                $region99: #{residual_conv_unit.1} parent=96 // loop_header
                  %s356 = sphi 0, %s360
                  %p357 = scmp.ge.s32.totalorder %s356, 1
                  %s361 = sphi %s329, %s329
                  %s362 = sphi %s324, %s324
                $region100: #{residual_conv_unit.1} parent=96 // loop_header_branch
                  %359 = sbr.rel (%p357) target = $region104
                $region101: #{residual_conv_unit.1} parent=96 // loop_body
                  %v363 = vld [vmem:[%s361] sm:$0xff]
                  %364 = vst [vmem:[%s362] sm:$0xff] %v363
                  %v365 = vld [vmem:[%s361 + $0x18] sm:$0xff]
                  %366 = vst [vmem:[%s362 + $0x8] sm:$0xff] %v365
                  %v367 = vld [vmem:[%s361 + $0x30] sm:$0xff]
                  %368 = vst [vmem:[%s362 + $0x10] sm:$0xff] %v367
                  %v369 = vld [vmem:[%s361 + $0x48] sm:$0xff]
                  %370 = vst [vmem:[%s362 + $0x18] sm:$0xff] %v369
                $region102: #{residual_conv_unit.1} parent=96 // loop_footer
                  %s360 = sadd.s32 1, %s356
                $region103: #{residual_conv_unit.1} parent=96 // loop_footer_branch
                  %355 = sbr.rel target = $region99
                $region104: #{residual_conv_unit.1} parent=96 // loop_exit
                  _
              $region97: #{residual_conv_unit.1} parent=81 // pred_fallthru
                _
              // Predicated region
              $region105: #{residual_conv_unit.1} parent=81 // pred_check
                _
              $region106: #{residual_conv_unit.1} parent=81 // pred_check_branch
                %372 = sbr.rel target = $region108
              $region107: #{residual_conv_unit.1} parent=81 // pred_region
                _
              $region108: #{residual_conv_unit.1} parent=81 // pred_fallthru
                _
            $region82: #{residual_conv_unit.1} parent=77 // pred_fallthru
              _
            // Predicated region
            $region83: #{residual_conv_unit.1} parent=77 // pred_check
              _
            $region84: #{residual_conv_unit.1} parent=77 // pred_check_branch
              %335 = sbr.rel target = $region86
            $region85: #{residual_conv_unit.1} parent=77 // pred_region
              loop: start=0, step=1, limit=1
              $region87: #{residual_conv_unit.1} parent=85 // loop_pre_header
                _
              $region88: #{residual_conv_unit.1} parent=85 // loop_header
                %s338 = sphi 0, %s342
                %p339 = scmp.ge.s32.totalorder %s338, 1
                %s343 = sphi %s329, %s329
                %s344 = sphi %s324, %s324
              $region89: #{residual_conv_unit.1} parent=85 // loop_header_branch
                %341 = sbr.rel (%p339) target = $region93
              $region90: #{residual_conv_unit.1} parent=85 // loop_body
                %v345 = vld [vmem:[%s343] sm:$0xff]
                %346 = vst [vmem:[%s344] sm:$0xff] %v345
                %v347 = vld [vmem:[%s343 + $0x18] sm:$0xff]
                %348 = vst [vmem:[%s344 + $0x8] sm:$0xff] %v347
                %v349 = vld [vmem:[%s343 + $0x30] sm:$0xff]
                %350 = vst [vmem:[%s344 + $0x10] sm:$0xff] %v349
                %v351 = vld [vmem:[%s343 + $0x48] sm:$0xff]
                %352 = vst [vmem:[%s344 + $0x18] sm:$0xff] %v351
              $region91: #{residual_conv_unit.1} parent=85 // loop_footer
                %s342 = sadd.s32 1, %s338
              $region92: #{residual_conv_unit.1} parent=85 // loop_footer_branch
                %337 = sbr.rel target = $region88
              $region93: #{residual_conv_unit.1} parent=85 // loop_exit
                _
            $region86: #{residual_conv_unit.1} parent=77 // pred_fallthru
              _
          $region78: #{residual_conv_unit.1} parent=73 // pred_fallthru
            _
          %373 = vnop
        $region74: #{residual_conv_unit.1} parent=31 // pred_fallthru
          _
      $region32: #{residual_conv_unit.1} parent=5 // pred_fallthru
        _
      %p374 = scmp.le.s32.totalorder 1, %s18
      %p375 = scmp.lt.s32.totalorder %s18, 5
      %p376 = pnand %p374, %p375
      %p377 = pneg %p376
      // Predicated region
      $region109: #{residual_conv_unit.1} parent=5 // pred_check
        _
      $region110: #{residual_conv_unit.1} parent=5 // pred_check_branch
        %379 = sbr.rel (%p376) target = $region112
      $region111: #{residual_conv_unit.1} parent=5 // pred_region
        %s380 = ssub.s32 %s18, 1
        %s381 = sand.u32 %s45, 1
        %s382 = sand.u32 %s45, 1
        %s383 = smul.addr %s382, 32
        %s384 = scalar_lea.vmem [#allocation2], %s383
        // Predicated region
        $region113: #{residual_conv_unit.1} parent=111 // pred_check
          %p385 = pneg %p58
        $region114: #{residual_conv_unit.1} parent=111 // pred_check_branch
          %387 = sbr.rel (%p385) target = $region116
        $region115: #{residual_conv_unit.1} parent=111 // pred_region
          _
        $region116: #{residual_conv_unit.1} parent=111 // pred_fallthru
          _
        %s388 = sand.u32 %s75, 1
        %s389 = sand.u32 %s75, 1
        %s390 = smul.addr %s389, 32
        %s391 = scalar_lea.vmem [#allocation3], %s390
        // Predicated region
        $region117: #{residual_conv_unit.1} parent=111 // pred_check
          %p392 = pneg %p88
        $region118: #{residual_conv_unit.1} parent=111 // pred_check_branch
          %394 = sbr.rel (%p392) target = $region120
        $region119: #{residual_conv_unit.1} parent=111 // pred_region
          _
        $region120: #{residual_conv_unit.1} parent=111 // pred_fallthru
          _
        // Predicated region
        $region121: #{residual_conv_unit.1} parent=111 // pred_check
          %p395 = pneg %p109
        $region122: #{residual_conv_unit.1} parent=111 // pred_check_branch
          %397 = sbr.rel (%p395) target = $region124
        $region123: #{residual_conv_unit.1} parent=111 // pred_region
          %398 = dma.done [#allocation6], 32
        $region124: #{residual_conv_unit.1} parent=111 // pred_fallthru
          _
        // Predicated region
        $region125: #{residual_conv_unit.1} parent=111 // pred_check
          %p399 = pneg %p130
        $region126: #{residual_conv_unit.1} parent=111 // pred_check_branch
          %401 = sbr.rel (%p399) target = $region128
        $region127: #{residual_conv_unit.1} parent=111 // pred_region
          %402 = dma.done [#allocation8], 16
        $region128: #{residual_conv_unit.1} parent=111 // pred_fallthru
          _
        // Predicated region
        $region129: #{residual_conv_unit.1} parent=111 // pred_check
          %p403 = pneg %p151
        $region130: #{residual_conv_unit.1} parent=111 // pred_check_branch
          %405 = sbr.rel (%p403) target = $region132
        $region131: #{residual_conv_unit.1} parent=111 // pred_region
          %406 = dma.done [#allocation8], 32
        $region132: #{residual_conv_unit.1} parent=111 // pred_fallthru
          _
        // Predicated region
        $region133: #{residual_conv_unit.1} parent=111 // pred_check
          %p407 = pneg %p172
        $region134: #{residual_conv_unit.1} parent=111 // pred_check_branch
          %409 = sbr.rel (%p407) target = $region136
        $region135: #{residual_conv_unit.1} parent=111 // pred_region
          %410 = dma.done [#allocation11], 16
        $region136: #{residual_conv_unit.1} parent=111 // pred_fallthru
          _
        %411 = sfence
        %s412 = sand.u32 %s45, 1
        %s413 = sand.u32 %s45, 1
        %s414 = smul.addr %s413, 32
        %s415 = scalar_lea.vmem [#allocation2], %s414
        %p416 = pneg %p58
        %p417 = pneg %p55
        %s418 = sand.u32 %s75, 1
        %s419 = sand.u32 %s75, 1
        %s420 = smul.addr %s419, 32
        %s421 = scalar_lea.vmem [#allocation3], %s420
        %p422 = pneg %p88
        %p423 = pneg %p85
        %p424 = pneg %p109
        %p425 = pneg %p106
        %p426 = pneg %p130
        %p427 = pneg %p127
        %p428 = pneg %p151
        %p429 = pneg %p148
        %p430 = pneg %p172
        %p431 = pneg %p169
        %p432 = pneg %p200
        %p433 = pneg %p197
        %s434 = sand.u32 %s187, 1
        %s435 = scalar_lea.sflag [#allocation5], %s434
        %s436 = sand.u32 %s187, 1
        %s437 = smul.addr %s436, 32
        %s438 = scalar_lea.vmem [#allocation12], %s437
        %s439 = sadd.s32 %s28, 1
        %v440 = vld [vmem:[%s391] sm:$0xff]
        %v441 = vld [vmem:[%s391 + $0x8] sm:$0xff]
        %v442 = vld [vmem:[%s391 + $0x10] sm:$0xff]
        %v443 = vld [vmem:[%s391 + $0x18] sm:$0xff]
        %v444 = vld [vmem:[%s384] sm:$0xff]
        %v445 = vld [vmem:[%s384 + $0x8] sm:$0xff]
        %v446 = vld [vmem:[%s384 + $0x10] sm:$0xff]
        %v447 = vld [vmem:[%s384 + $0x18] sm:$0xff]
        %v448 = vmax.f32 %v444, 0.0
        %v449 = vmax.f32 %v440, 0.0
        %v450 = vmax.f32 %v445, 0.0
        %v451 = vmax.f32 %v441, 0.0
        %v452 = vmax.f32 %v446, 0.0
        %v453 = vmax.f32 %v442, 0.0
        %v454 = vmax.f32 %v447, 0.0
        %v455 = vmax.f32 %v443, 0.0
        %s456 = sld [smem:[#allocation7]]
        %v457 = vstv %s456
        %s458 = sld [smem:[#allocation7 + $0x1]]
        %v459 = vstv %s458
        %s460 = sld [smem:[#allocation7 + $0x2]]
        %v461 = vstv %s460
        %s462 = sld [smem:[#allocation7 + $0x3]]
        %v463 = vstv %s462
        %s464 = sld [smem:[#allocation4]]
        %v465 = vstv %s464
        %v466 = vmul.f32 %v465, %v448
        %v467 = vmul.f32 %v465, %v449
        %v468 = vadd.f32 %v457, %v466
        %v469 = vadd.f32 %v457, %v467
        %s470 = sld [smem:[#allocation4 + $0x24]]
        %v471 = vstv %s470
        %v472 = vmul.f32 %v471, %v448
        %v473 = vmul.f32 %v471, %v449
        %v474 = vadd.f32 %v459, %v472
        %v475 = vadd.f32 %v459, %v473
        %s476 = sld [smem:[#allocation4 + $0x48]]
        %v477 = vstv %s476
        %v478 = vmul.f32 %v477, %v448
        %v479 = vmul.f32 %v477, %v449
        %v480 = vadd.f32 %v461, %v478
        %v481 = vadd.f32 %v461, %v479
        %s482 = sld [smem:[#allocation4 + $0x6c]]
        %v483 = vstv %s482
        %v484 = vmul.f32 %v483, %v448
        %v485 = vmul.f32 %v483, %v449
        %v486 = vadd.f32 %v463, %v484
        %v487 = vadd.f32 %v463, %v485
        %s488 = sld [smem:[#allocation4 + $0x1]]
        %v489 = vstv %s488
        %v490 = vmul.f32 %v489, %v448
        %v491 = vmul.f32 %v489, %v449
        %494 = vrot.lane.b32.xlu0 %v490, 127
        %v495 = vpop.permute.xlu0 %494
        %496 = vrot.lane.b32.xlu0 %v491, 127
        %v497 = vpop.permute.xlu0 %496
        %v500 = vadd.f32 %v468, %v495
        %v501 = vadd.f32 %v469, %v497
        %s502 = sld [smem:[#allocation4 + $0x25]]
        %v503 = vstv %s502
        %v504 = vmul.f32 %v503, %v448
        %v505 = vmul.f32 %v503, %v449
        %508 = vrot.lane.b32.xlu0 %v504, 127
        %v509 = vpop.permute.xlu0 %508
        %510 = vrot.lane.b32.xlu0 %v505, 127
        %v511 = vpop.permute.xlu0 %510
        %v514 = vadd.f32 %v474, %v509
        %v515 = vadd.f32 %v475, %v511
        %s516 = sld [smem:[#allocation4 + $0x49]]
        %v517 = vstv %s516
        %v518 = vmul.f32 %v517, %v448
        %v519 = vmul.f32 %v517, %v449
        %522 = vrot.lane.b32.xlu0 %v518, 127
        %v523 = vpop.permute.xlu0 %522
        %524 = vrot.lane.b32.xlu0 %v519, 127
        %v525 = vpop.permute.xlu0 %524
        %v528 = vadd.f32 %v480, %v523
        %v529 = vadd.f32 %v481, %v525
        %s530 = sld [smem:[#allocation4 + $0x6d]]
        %v531 = vstv %s530
        %v532 = vmul.f32 %v531, %v448
        %v533 = vmul.f32 %v531, %v449
        %536 = vrot.lane.b32.xlu0 %v532, 127
        %v537 = vpop.permute.xlu0 %536
        %538 = vrot.lane.b32.xlu0 %v533, 127
        %v539 = vpop.permute.xlu0 %538
        %v542 = vadd.f32 %v486, %v537
        %v543 = vadd.f32 %v487, %v539
        %s544 = sld [smem:[#allocation4 + $0x2]]
        %v545 = vstv %s544
        %v546 = vmul.f32 %v545, %v448
        %v547 = vmul.f32 %v545, %v449
        %550 = vrot.lane.b32.xlu0 %v546, 126
        %v551 = vpop.permute.xlu0 %550
        %552 = vrot.lane.b32.xlu0 %v547, 126
        %v553 = vpop.permute.xlu0 %552
        %v556 = vadd.f32 %v500, %v551
        %v557 = vadd.f32 %v501, %v553
        %s558 = sld [smem:[#allocation4 + $0x26]]
        %v559 = vstv %s558
        %v560 = vmul.f32 %v559, %v448
        %v561 = vmul.f32 %v559, %v449
        %564 = vrot.lane.b32.xlu0 %v560, 126
        %v565 = vpop.permute.xlu0 %564
        %566 = vrot.lane.b32.xlu0 %v561, 126
        %v567 = vpop.permute.xlu0 %566
        %v570 = vadd.f32 %v514, %v565
        %v571 = vadd.f32 %v515, %v567
        %s572 = sld [smem:[#allocation4 + $0x4a]]
        %v573 = vstv %s572
        %v574 = vmul.f32 %v573, %v448
        %v575 = vmul.f32 %v573, %v449
        %578 = vrot.lane.b32.xlu0 %v574, 126
        %v579 = vpop.permute.xlu0 %578
        %580 = vrot.lane.b32.xlu0 %v575, 126
        %v581 = vpop.permute.xlu0 %580
        %v584 = vadd.f32 %v528, %v579
        %v585 = vadd.f32 %v529, %v581
        %s586 = sld [smem:[#allocation4 + $0x6e]]
        %v587 = vstv %s586
        %v588 = vmul.f32 %v587, %v448
        %v589 = vmul.f32 %v587, %v449
        %592 = vrot.lane.b32.xlu0 %v588, 126
        %v593 = vpop.permute.xlu0 %592
        %594 = vrot.lane.b32.xlu0 %v589, 126
        %v595 = vpop.permute.xlu0 %594
        %v598 = vadd.f32 %v542, %v593
        %v599 = vadd.f32 %v543, %v595
        %s600 = sld [smem:[#allocation4 + $0x3]]
        %v601 = vstv %s600
        %v602 = vmul.f32 %v601, %v448
        %v603 = vmul.f32 %v601, %v449
        %vm606 = vcmask 1046528
        %v607 = vrot.slane %v602, 1
        %v608 = vrot.slane %v603, 1
        %v609 = vsel %vm606, %v607, %v608
        %v612 = vadd.f32 %v556, %v609
        %v613 = vadd.f32 %v557, %v608
        %s614 = sld [smem:[#allocation4 + $0x27]]
        %v615 = vstv %s614
        %v616 = vmul.f32 %v615, %v448
        %v617 = vmul.f32 %v615, %v449
        %v620 = vrot.slane %v616, 1
        %v621 = vrot.slane %v617, 1
        %v622 = vsel %vm606, %v620, %v621
        %v625 = vadd.f32 %v570, %v622
        %v626 = vadd.f32 %v571, %v621
        %s627 = sld [smem:[#allocation4 + $0x4b]]
        %v628 = vstv %s627
        %v629 = vmul.f32 %v628, %v448
        %v630 = vmul.f32 %v628, %v449
        %v633 = vrot.slane %v629, 1
        %v634 = vrot.slane %v630, 1
        %v635 = vsel %vm606, %v633, %v634
        %v638 = vadd.f32 %v584, %v635
        %v639 = vadd.f32 %v585, %v634
        %s640 = sld [smem:[#allocation4 + $0x6f]]
        %v641 = vstv %s640
        %v642 = vmul.f32 %v641, %v448
        %v643 = vmul.f32 %v641, %v449
        %v646 = vrot.slane %v642, 1
        %v647 = vrot.slane %v643, 1
        %v648 = vsel %vm606, %v646, %v647
        %v651 = vadd.f32 %v598, %v648
        %v652 = vadd.f32 %v599, %v647
        %s653 = sld [smem:[#allocation4 + $0x4]]
        %v654 = vstv %s653
        %v655 = vmul.f32 %v654, %v448
        %v656 = vmul.f32 %v654, %v449
        %v659 = vrot.slane %v655, 1
        %v660 = vrot.slane %v656, 1
        %v661 = vsel %vm606, %v659, %v660
        %662 = vrot.lane.b32.xlu0 %v661, 127
        %v663 = vpop.permute.xlu0 %662
        %664 = vrot.lane.b32.xlu0 %v660, 127
        %v665 = vpop.permute.xlu0 %664
        %v668 = vadd.f32 %v612, %v663
        %v669 = vadd.f32 %v613, %v665
        %s670 = sld [smem:[#allocation4 + $0x28]]
        %v671 = vstv %s670
        %v672 = vmul.f32 %v671, %v448
        %v673 = vmul.f32 %v671, %v449
        %v676 = vrot.slane %v672, 1
        %v677 = vrot.slane %v673, 1
        %v678 = vsel %vm606, %v676, %v677
        %679 = vrot.lane.b32.xlu0 %v678, 127
        %v680 = vpop.permute.xlu0 %679
        %681 = vrot.lane.b32.xlu0 %v677, 127
        %v682 = vpop.permute.xlu0 %681
        %v685 = vadd.f32 %v625, %v680
        %v686 = vadd.f32 %v626, %v682
        %s687 = sld [smem:[#allocation4 + $0x4c]]
        %v688 = vstv %s687
        %v689 = vmul.f32 %v688, %v448
        %v690 = vmul.f32 %v688, %v449
        %v693 = vrot.slane %v689, 1
        %v694 = vrot.slane %v690, 1
        %v695 = vsel %vm606, %v693, %v694
        %696 = vrot.lane.b32.xlu0 %v695, 127
        %v697 = vpop.permute.xlu0 %696
        %698 = vrot.lane.b32.xlu0 %v694, 127
        %v699 = vpop.permute.xlu0 %698
        %v702 = vadd.f32 %v638, %v697
        %v703 = vadd.f32 %v639, %v699
        %s704 = sld [smem:[#allocation4 + $0x70]]
        %v705 = vstv %s704
        %v706 = vmul.f32 %v705, %v448
        %v707 = vmul.f32 %v705, %v449
        %v710 = vrot.slane %v706, 1
        %v711 = vrot.slane %v707, 1
        %v712 = vsel %vm606, %v710, %v711
        %713 = vrot.lane.b32.xlu0 %v712, 127
        %v714 = vpop.permute.xlu0 %713
        %715 = vrot.lane.b32.xlu0 %v711, 127
        %v716 = vpop.permute.xlu0 %715
        %v719 = vadd.f32 %v651, %v714
        %v720 = vadd.f32 %v652, %v716
        %s721 = sld [smem:[#allocation4 + $0x5]]
        %v722 = vstv %s721
        %v723 = vmul.f32 %v722, %v448
        %v724 = vmul.f32 %v722, %v449
        %v727 = vrot.slane %v723, 1
        %v728 = vrot.slane %v724, 1
        %v729 = vsel %vm606, %v727, %v728
        %730 = vrot.lane.b32.xlu0 %v729, 126
        %v731 = vpop.permute.xlu0 %730
        %732 = vrot.lane.b32.xlu0 %v728, 126
        %v733 = vpop.permute.xlu0 %732
        %v736 = vadd.f32 %v668, %v731
        %v737 = vadd.f32 %v669, %v733
        %s738 = sld [smem:[#allocation4 + $0x29]]
        %v739 = vstv %s738
        %v740 = vmul.f32 %v739, %v448
        %v741 = vmul.f32 %v739, %v449
        %v744 = vrot.slane %v740, 1
        %v745 = vrot.slane %v741, 1
        %v746 = vsel %vm606, %v744, %v745
        %747 = vrot.lane.b32.xlu0 %v746, 126
        %v748 = vpop.permute.xlu0 %747
        %749 = vrot.lane.b32.xlu0 %v745, 126
        %v750 = vpop.permute.xlu0 %749
        %v753 = vadd.f32 %v685, %v748
        %v754 = vadd.f32 %v686, %v750
        %s755 = sld [smem:[#allocation4 + $0x4d]]
        %v756 = vstv %s755
        %v757 = vmul.f32 %v756, %v448
        %v758 = vmul.f32 %v756, %v449
        %v761 = vrot.slane %v757, 1
        %v762 = vrot.slane %v758, 1
        %v763 = vsel %vm606, %v761, %v762
        %764 = vrot.lane.b32.xlu0 %v763, 126
        %v765 = vpop.permute.xlu0 %764
        %766 = vrot.lane.b32.xlu0 %v762, 126
        %v767 = vpop.permute.xlu0 %766
        %v770 = vadd.f32 %v702, %v765
        %v771 = vadd.f32 %v703, %v767
        %s772 = sld [smem:[#allocation4 + $0x71]]
        %v773 = vstv %s772
        %v774 = vmul.f32 %v773, %v448
        %v775 = vmul.f32 %v773, %v449
        %v778 = vrot.slane %v774, 1
        %v779 = vrot.slane %v775, 1
        %v780 = vsel %vm606, %v778, %v779
        %781 = vrot.lane.b32.xlu0 %v780, 126
        %v782 = vpop.permute.xlu0 %781
        %783 = vrot.lane.b32.xlu0 %v779, 126
        %v784 = vpop.permute.xlu0 %783
        %v787 = vadd.f32 %v719, %v782
        %v788 = vadd.f32 %v720, %v784
        %s789 = sld [smem:[#allocation4 + $0x6]]
        %v790 = vstv %s789
        %v791 = vmul.f32 %v790, %v448
        %v792 = vmul.f32 %v790, %v449
        %vm795 = vcmask 1045504
        %v796 = vrot.slane %v791, 2
        %v797 = vrot.slane %v792, 2
        %v798 = vsel %vm795, %v796, %v797
        %v801 = vadd.f32 %v736, %v798
        %v802 = vadd.f32 %v737, %v797
        %s803 = sld [smem:[#allocation4 + $0x2a]]
        %v804 = vstv %s803
        %v805 = vmul.f32 %v804, %v448
        %v806 = vmul.f32 %v804, %v449
        %v809 = vrot.slane %v805, 2
        %v810 = vrot.slane %v806, 2
        %v811 = vsel %vm795, %v809, %v810
        %v814 = vadd.f32 %v753, %v811
        %v815 = vadd.f32 %v754, %v810
        %s816 = sld [smem:[#allocation4 + $0x4e]]
        %v817 = vstv %s816
        %v818 = vmul.f32 %v817, %v448
        %v819 = vmul.f32 %v817, %v449
        %v822 = vrot.slane %v818, 2
        %v823 = vrot.slane %v819, 2
        %v824 = vsel %vm795, %v822, %v823
        %v827 = vadd.f32 %v770, %v824
        %v828 = vadd.f32 %v771, %v823
        %s829 = sld [smem:[#allocation4 + $0x72]]
        %v830 = vstv %s829
        %v831 = vmul.f32 %v830, %v448
        %v832 = vmul.f32 %v830, %v449
        %v835 = vrot.slane %v831, 2
        %v836 = vrot.slane %v832, 2
        %v837 = vsel %vm795, %v835, %v836
        %v840 = vadd.f32 %v787, %v837
        %v841 = vadd.f32 %v788, %v836
        %s842 = sld [smem:[#allocation4 + $0x7]]
        %v843 = vstv %s842
        %v844 = vmul.f32 %v843, %v448
        %v845 = vmul.f32 %v843, %v449
        %v848 = vrot.slane %v844, 2
        %v849 = vrot.slane %v845, 2
        %v850 = vsel %vm795, %v848, %v849
        %851 = vrot.lane.b32.xlu0 %v850, 127
        %v852 = vpop.permute.xlu0 %851
        %853 = vrot.lane.b32.xlu0 %v849, 127
        %v854 = vpop.permute.xlu0 %853
        %v857 = vadd.f32 %v801, %v852
        %v858 = vadd.f32 %v802, %v854
        %s859 = sld [smem:[#allocation4 + $0x2b]]
        %v860 = vstv %s859
        %v861 = vmul.f32 %v860, %v448
        %v862 = vmul.f32 %v860, %v449
        %v865 = vrot.slane %v861, 2
        %v866 = vrot.slane %v862, 2
        %v867 = vsel %vm795, %v865, %v866
        %868 = vrot.lane.b32.xlu0 %v867, 127
        %v869 = vpop.permute.xlu0 %868
        %870 = vrot.lane.b32.xlu0 %v866, 127
        %v871 = vpop.permute.xlu0 %870
        %v874 = vadd.f32 %v814, %v869
        %v875 = vadd.f32 %v815, %v871
        %s876 = sld [smem:[#allocation4 + $0x4f]]
        %v877 = vstv %s876
        %v878 = vmul.f32 %v877, %v448
        %v879 = vmul.f32 %v877, %v449
        %v882 = vrot.slane %v878, 2
        %v883 = vrot.slane %v879, 2
        %v884 = vsel %vm795, %v882, %v883
        %885 = vrot.lane.b32.xlu0 %v884, 127
        %v886 = vpop.permute.xlu0 %885
        %887 = vrot.lane.b32.xlu0 %v883, 127
        %v888 = vpop.permute.xlu0 %887
        %v891 = vadd.f32 %v827, %v886
        %v892 = vadd.f32 %v828, %v888
        %s893 = sld [smem:[#allocation4 + $0x73]]
        %v894 = vstv %s893
        %v895 = vmul.f32 %v894, %v448
        %v896 = vmul.f32 %v894, %v449
        %v899 = vrot.slane %v895, 2
        %v900 = vrot.slane %v896, 2
        %v901 = vsel %vm795, %v899, %v900
        %902 = vrot.lane.b32.xlu0 %v901, 127
        %v903 = vpop.permute.xlu0 %902
        %904 = vrot.lane.b32.xlu0 %v900, 127
        %v905 = vpop.permute.xlu0 %904
        %v908 = vadd.f32 %v840, %v903
        %v909 = vadd.f32 %v841, %v905
        %s910 = sld [smem:[#allocation4 + $0x8]]
        %v911 = vstv %s910
        %v912 = vmul.f32 %v911, %v448
        %v913 = vmul.f32 %v911, %v449
        %v916 = vrot.slane %v912, 2
        %v917 = vrot.slane %v913, 2
        %v918 = vsel %vm795, %v916, %v917
        %919 = vrot.lane.b32.xlu0 %v918, 126
        %v920 = vpop.permute.xlu0 %919
        %921 = vrot.lane.b32.xlu0 %v917, 126
        %v922 = vpop.permute.xlu0 %921
        %v925 = vadd.f32 %v857, %v920
        %v926 = vadd.f32 %v858, %v922
        %s927 = sld [smem:[#allocation4 + $0x2c]]
        %v928 = vstv %s927
        %v929 = vmul.f32 %v928, %v448
        %v930 = vmul.f32 %v928, %v449
        %v933 = vrot.slane %v929, 2
        %v934 = vrot.slane %v930, 2
        %v935 = vsel %vm795, %v933, %v934
        %936 = vrot.lane.b32.xlu0 %v935, 126
        %v937 = vpop.permute.xlu0 %936
        %938 = vrot.lane.b32.xlu0 %v934, 126
        %v939 = vpop.permute.xlu0 %938
        %v942 = vadd.f32 %v874, %v937
        %v943 = vadd.f32 %v875, %v939
        %s944 = sld [smem:[#allocation4 + $0x50]]
        %v945 = vstv %s944
        %v946 = vmul.f32 %v945, %v448
        %v947 = vmul.f32 %v945, %v449
        %v950 = vrot.slane %v946, 2
        %v951 = vrot.slane %v947, 2
        %v952 = vsel %vm795, %v950, %v951
        %953 = vrot.lane.b32.xlu0 %v952, 126
        %v954 = vpop.permute.xlu0 %953
        %955 = vrot.lane.b32.xlu0 %v951, 126
        %v956 = vpop.permute.xlu0 %955
        %v959 = vadd.f32 %v891, %v954
        %v960 = vadd.f32 %v892, %v956
        %s961 = sld [smem:[#allocation4 + $0x74]]
        %v962 = vstv %s961
        %v963 = vmul.f32 %v962, %v448
        %v964 = vmul.f32 %v962, %v449
        %v967 = vrot.slane %v963, 2
        %v968 = vrot.slane %v964, 2
        %v969 = vsel %vm795, %v967, %v968
        %970 = vrot.lane.b32.xlu0 %v969, 126
        %v971 = vpop.permute.xlu0 %970
        %972 = vrot.lane.b32.xlu0 %v968, 126
        %v973 = vpop.permute.xlu0 %972
        %v976 = vadd.f32 %v908, %v971
        %v977 = vadd.f32 %v909, %v973
        %s978 = sld [smem:[#allocation4 + $0x9]]
        %v979 = vstv %s978
        %v980 = vmul.f32 %v979, %v450
        %v981 = vmul.f32 %v979, %v451
        %v982 = vadd.f32 %v925, %v980
        %v983 = vadd.f32 %v926, %v981
        %s984 = sld [smem:[#allocation4 + $0x2d]]
        %v985 = vstv %s984
        %v986 = vmul.f32 %v985, %v450
        %v987 = vmul.f32 %v985, %v451
        %v988 = vadd.f32 %v942, %v986
        %v989 = vadd.f32 %v943, %v987
        %s990 = sld [smem:[#allocation4 + $0x51]]
        %v991 = vstv %s990
        %v992 = vmul.f32 %v991, %v450
        %v993 = vmul.f32 %v991, %v451
        %v994 = vadd.f32 %v959, %v992
        %v995 = vadd.f32 %v960, %v993
        %s996 = sld [smem:[#allocation4 + $0x75]]
        %v997 = vstv %s996
        %v998 = vmul.f32 %v997, %v450
        %v999 = vmul.f32 %v997, %v451
        %v1000 = vadd.f32 %v976, %v998
        %v1001 = vadd.f32 %v977, %v999
        %s1002 = sld [smem:[#allocation4 + $0xa]]
        %v1003 = vstv %s1002
        %v1004 = vmul.f32 %v1003, %v450
        %v1005 = vmul.f32 %v1003, %v451
        %1008 = vrot.lane.b32.xlu0 %v1004, 127
        %v1009 = vpop.permute.xlu0 %1008
        %1010 = vrot.lane.b32.xlu0 %v1005, 127
        %v1011 = vpop.permute.xlu0 %1010
        %v1014 = vadd.f32 %v982, %v1009
        %v1015 = vadd.f32 %v983, %v1011
        %s1016 = sld [smem:[#allocation4 + $0x2e]]
        %v1017 = vstv %s1016
        %v1018 = vmul.f32 %v1017, %v450
        %v1019 = vmul.f32 %v1017, %v451
        %1022 = vrot.lane.b32.xlu0 %v1018, 127
        %v1023 = vpop.permute.xlu0 %1022
        %1024 = vrot.lane.b32.xlu0 %v1019, 127
        %v1025 = vpop.permute.xlu0 %1024
        %v1028 = vadd.f32 %v988, %v1023
        %v1029 = vadd.f32 %v989, %v1025
        %s1030 = sld [smem:[#allocation4 + $0x52]]
        %v1031 = vstv %s1030
        %v1032 = vmul.f32 %v1031, %v450
        %v1033 = vmul.f32 %v1031, %v451
        %1036 = vrot.lane.b32.xlu0 %v1032, 127
        %v1037 = vpop.permute.xlu0 %1036
        %1038 = vrot.lane.b32.xlu0 %v1033, 127
        %v1039 = vpop.permute.xlu0 %1038
        %v1042 = vadd.f32 %v994, %v1037
        %v1043 = vadd.f32 %v995, %v1039
        %s1044 = sld [smem:[#allocation4 + $0x76]]
        %v1045 = vstv %s1044
        %v1046 = vmul.f32 %v1045, %v450
        %v1047 = vmul.f32 %v1045, %v451
        %1050 = vrot.lane.b32.xlu0 %v1046, 127
        %v1051 = vpop.permute.xlu0 %1050
        %1052 = vrot.lane.b32.xlu0 %v1047, 127
        %v1053 = vpop.permute.xlu0 %1052
        %v1056 = vadd.f32 %v1000, %v1051
        %v1057 = vadd.f32 %v1001, %v1053
        %s1058 = sld [smem:[#allocation4 + $0xb]]
        %v1059 = vstv %s1058
        %v1060 = vmul.f32 %v1059, %v450
        %v1061 = vmul.f32 %v1059, %v451
        %1064 = vrot.lane.b32.xlu0 %v1060, 126
        %v1065 = vpop.permute.xlu0 %1064
        %1066 = vrot.lane.b32.xlu0 %v1061, 126
        %v1067 = vpop.permute.xlu0 %1066
        %v1070 = vadd.f32 %v1014, %v1065
        %v1071 = vadd.f32 %v1015, %v1067
        %s1072 = sld [smem:[#allocation4 + $0x2f]]
        %v1073 = vstv %s1072
        %v1074 = vmul.f32 %v1073, %v450
        %v1075 = vmul.f32 %v1073, %v451
        %1078 = vrot.lane.b32.xlu0 %v1074, 126
        %v1079 = vpop.permute.xlu0 %1078
        %1080 = vrot.lane.b32.xlu0 %v1075, 126
        %v1081 = vpop.permute.xlu0 %1080
        %v1084 = vadd.f32 %v1028, %v1079
        %v1085 = vadd.f32 %v1029, %v1081
        %s1086 = sld [smem:[#allocation4 + $0x53]]
        %v1087 = vstv %s1086
        %v1088 = vmul.f32 %v1087, %v450
        %v1089 = vmul.f32 %v1087, %v451
        %1092 = vrot.lane.b32.xlu0 %v1088, 126
        %v1093 = vpop.permute.xlu0 %1092
        %1094 = vrot.lane.b32.xlu0 %v1089, 126
        %v1095 = vpop.permute.xlu0 %1094
        %v1098 = vadd.f32 %v1042, %v1093
        %v1099 = vadd.f32 %v1043, %v1095
        %s1100 = sld [smem:[#allocation4 + $0x77]]
        %v1101 = vstv %s1100
        %v1102 = vmul.f32 %v1101, %v450
        %v1103 = vmul.f32 %v1101, %v451
        %1106 = vrot.lane.b32.xlu0 %v1102, 126
        %v1107 = vpop.permute.xlu0 %1106
        %1108 = vrot.lane.b32.xlu0 %v1103, 126
        %v1109 = vpop.permute.xlu0 %1108
        %v1112 = vadd.f32 %v1056, %v1107
        %v1113 = vadd.f32 %v1057, %v1109
        %s1114 = sld [smem:[#allocation4 + $0xc]]
        %v1115 = vstv %s1114
        %v1116 = vmul.f32 %v1115, %v450
        %v1117 = vmul.f32 %v1115, %v451
        %v1120 = vrot.slane %v1116, 1
        %v1121 = vrot.slane %v1117, 1
        %v1122 = vsel %vm606, %v1120, %v1121
        %v1125 = vadd.f32 %v1070, %v1122
        %v1126 = vadd.f32 %v1071, %v1121
        %s1127 = sld [smem:[#allocation4 + $0x30]]
        %v1128 = vstv %s1127
        %v1129 = vmul.f32 %v1128, %v450
        %v1130 = vmul.f32 %v1128, %v451
        %v1133 = vrot.slane %v1129, 1
        %v1134 = vrot.slane %v1130, 1
        %v1135 = vsel %vm606, %v1133, %v1134
        %v1138 = vadd.f32 %v1084, %v1135
        %v1139 = vadd.f32 %v1085, %v1134
        %s1140 = sld [smem:[#allocation4 + $0x54]]
        %v1141 = vstv %s1140
        %v1142 = vmul.f32 %v1141, %v450
        %v1143 = vmul.f32 %v1141, %v451
        %v1146 = vrot.slane %v1142, 1
        %v1147 = vrot.slane %v1143, 1
        %v1148 = vsel %vm606, %v1146, %v1147
        %v1151 = vadd.f32 %v1098, %v1148
        %v1152 = vadd.f32 %v1099, %v1147
        %s1153 = sld [smem:[#allocation4 + $0x78]]
        %v1154 = vstv %s1153
        %v1155 = vmul.f32 %v1154, %v450
        %v1156 = vmul.f32 %v1154, %v451
        %v1159 = vrot.slane %v1155, 1
        %v1160 = vrot.slane %v1156, 1
        %v1161 = vsel %vm606, %v1159, %v1160
        %v1164 = vadd.f32 %v1112, %v1161
        %v1165 = vadd.f32 %v1113, %v1160
        %s1166 = sld [smem:[#allocation4 + $0xd]]
        %v1167 = vstv %s1166
        %v1168 = vmul.f32 %v1167, %v450
        %v1169 = vmul.f32 %v1167, %v451
        %v1172 = vrot.slane %v1168, 1
        %v1173 = vrot.slane %v1169, 1
        %v1174 = vsel %vm606, %v1172, %v1173
        %1175 = vrot.lane.b32.xlu0 %v1174, 127
        %v1176 = vpop.permute.xlu0 %1175
        %1177 = vrot.lane.b32.xlu0 %v1173, 127
        %v1178 = vpop.permute.xlu0 %1177
        %v1181 = vadd.f32 %v1125, %v1176
        %v1182 = vadd.f32 %v1126, %v1178
        %s1183 = sld [smem:[#allocation4 + $0x31]]
        %v1184 = vstv %s1183
        %v1185 = vmul.f32 %v1184, %v450
        %v1186 = vmul.f32 %v1184, %v451
        %v1189 = vrot.slane %v1185, 1
        %v1190 = vrot.slane %v1186, 1
        %v1191 = vsel %vm606, %v1189, %v1190
        %1192 = vrot.lane.b32.xlu0 %v1191, 127
        %v1193 = vpop.permute.xlu0 %1192
        %1194 = vrot.lane.b32.xlu0 %v1190, 127
        %v1195 = vpop.permute.xlu0 %1194
        %v1198 = vadd.f32 %v1138, %v1193
        %v1199 = vadd.f32 %v1139, %v1195
        %s1200 = sld [smem:[#allocation4 + $0x55]]
        %v1201 = vstv %s1200
        %v1202 = vmul.f32 %v1201, %v450
        %v1203 = vmul.f32 %v1201, %v451
        %v1206 = vrot.slane %v1202, 1
        %v1207 = vrot.slane %v1203, 1
        %v1208 = vsel %vm606, %v1206, %v1207
        %1209 = vrot.lane.b32.xlu0 %v1208, 127
        %v1210 = vpop.permute.xlu0 %1209
        %1211 = vrot.lane.b32.xlu0 %v1207, 127
        %v1212 = vpop.permute.xlu0 %1211
        %v1215 = vadd.f32 %v1151, %v1210
        %v1216 = vadd.f32 %v1152, %v1212
        %s1217 = sld [smem:[#allocation4 + $0x79]]
        %v1218 = vstv %s1217
        %v1219 = vmul.f32 %v1218, %v450
        %v1220 = vmul.f32 %v1218, %v451
        %v1223 = vrot.slane %v1219, 1
        %v1224 = vrot.slane %v1220, 1
        %v1225 = vsel %vm606, %v1223, %v1224
        %1226 = vrot.lane.b32.xlu0 %v1225, 127
        %v1227 = vpop.permute.xlu0 %1226
        %1228 = vrot.lane.b32.xlu0 %v1224, 127
        %v1229 = vpop.permute.xlu0 %1228
        %v1232 = vadd.f32 %v1164, %v1227
        %v1233 = vadd.f32 %v1165, %v1229
        %s1234 = sld [smem:[#allocation4 + $0xe]]
        %v1235 = vstv %s1234
        %v1236 = vmul.f32 %v1235, %v450
        %v1237 = vmul.f32 %v1235, %v451
        %v1240 = vrot.slane %v1236, 1
        %v1241 = vrot.slane %v1237, 1
        %v1242 = vsel %vm606, %v1240, %v1241
        %1243 = vrot.lane.b32.xlu0 %v1242, 126
        %v1244 = vpop.permute.xlu0 %1243
        %1245 = vrot.lane.b32.xlu0 %v1241, 126
        %v1246 = vpop.permute.xlu0 %1245
        %v1249 = vadd.f32 %v1181, %v1244
        %v1250 = vadd.f32 %v1182, %v1246
        %s1251 = sld [smem:[#allocation4 + $0x32]]
        %v1252 = vstv %s1251
        %v1253 = vmul.f32 %v1252, %v450
        %v1254 = vmul.f32 %v1252, %v451
        %v1257 = vrot.slane %v1253, 1
        %v1258 = vrot.slane %v1254, 1
        %v1259 = vsel %vm606, %v1257, %v1258
        %1260 = vrot.lane.b32.xlu0 %v1259, 126
        %v1261 = vpop.permute.xlu0 %1260
        %1262 = vrot.lane.b32.xlu0 %v1258, 126
        %v1263 = vpop.permute.xlu0 %1262
        %v1266 = vadd.f32 %v1198, %v1261
        %v1267 = vadd.f32 %v1199, %v1263
        %s1268 = sld [smem:[#allocation4 + $0x56]]
        %v1269 = vstv %s1268
        %v1270 = vmul.f32 %v1269, %v450
        %v1271 = vmul.f32 %v1269, %v451
        %v1274 = vrot.slane %v1270, 1
        %v1275 = vrot.slane %v1271, 1
        %v1276 = vsel %vm606, %v1274, %v1275
        %1277 = vrot.lane.b32.xlu0 %v1276, 126
        %v1278 = vpop.permute.xlu0 %1277
        %1279 = vrot.lane.b32.xlu0 %v1275, 126
        %v1280 = vpop.permute.xlu0 %1279
        %v1283 = vadd.f32 %v1215, %v1278
        %v1284 = vadd.f32 %v1216, %v1280
        %s1285 = sld [smem:[#allocation4 + $0x7a]]
        %v1286 = vstv %s1285
        %v1287 = vmul.f32 %v1286, %v450
        %v1288 = vmul.f32 %v1286, %v451
        %v1291 = vrot.slane %v1287, 1
        %v1292 = vrot.slane %v1288, 1
        %v1293 = vsel %vm606, %v1291, %v1292
        %1294 = vrot.lane.b32.xlu0 %v1293, 126
        %v1295 = vpop.permute.xlu0 %1294
        %1296 = vrot.lane.b32.xlu0 %v1292, 126
        %v1297 = vpop.permute.xlu0 %1296
        %v1300 = vadd.f32 %v1232, %v1295
        %v1301 = vadd.f32 %v1233, %v1297
        %s1302 = sld [smem:[#allocation4 + $0xf]]
        %v1303 = vstv %s1302
        %v1304 = vmul.f32 %v1303, %v450
        %v1305 = vmul.f32 %v1303, %v451
        %v1308 = vrot.slane %v1304, 2
        %v1309 = vrot.slane %v1305, 2
        %v1310 = vsel %vm795, %v1308, %v1309
        %v1313 = vadd.f32 %v1249, %v1310
        %v1314 = vadd.f32 %v1250, %v1309
        %s1315 = sld [smem:[#allocation4 + $0x33]]
        %v1316 = vstv %s1315
        %v1317 = vmul.f32 %v1316, %v450
        %v1318 = vmul.f32 %v1316, %v451
        %v1321 = vrot.slane %v1317, 2
        %v1322 = vrot.slane %v1318, 2
        %v1323 = vsel %vm795, %v1321, %v1322
        %v1326 = vadd.f32 %v1266, %v1323
        %v1327 = vadd.f32 %v1267, %v1322
        %s1328 = sld [smem:[#allocation4 + $0x57]]
        %v1329 = vstv %s1328
        %v1330 = vmul.f32 %v1329, %v450
        %v1331 = vmul.f32 %v1329, %v451
        %v1334 = vrot.slane %v1330, 2
        %v1335 = vrot.slane %v1331, 2
        %v1336 = vsel %vm795, %v1334, %v1335
        %v1339 = vadd.f32 %v1283, %v1336
        %v1340 = vadd.f32 %v1284, %v1335
        %s1341 = sld [smem:[#allocation4 + $0x7b]]
        %v1342 = vstv %s1341
        %v1343 = vmul.f32 %v1342, %v450
        %v1344 = vmul.f32 %v1342, %v451
        %v1347 = vrot.slane %v1343, 2
        %v1348 = vrot.slane %v1344, 2
        %v1349 = vsel %vm795, %v1347, %v1348
        %v1352 = vadd.f32 %v1300, %v1349
        %v1353 = vadd.f32 %v1301, %v1348
        %s1354 = sld [smem:[#allocation4 + $0x10]]
        %v1355 = vstv %s1354
        %v1356 = vmul.f32 %v1355, %v450
        %v1357 = vmul.f32 %v1355, %v451
        %v1360 = vrot.slane %v1356, 2
        %v1361 = vrot.slane %v1357, 2
        %v1362 = vsel %vm795, %v1360, %v1361
        %1363 = vrot.lane.b32.xlu0 %v1362, 127
        %v1364 = vpop.permute.xlu0 %1363
        %1365 = vrot.lane.b32.xlu0 %v1361, 127
        %v1366 = vpop.permute.xlu0 %1365
        %v1369 = vadd.f32 %v1313, %v1364
        %v1370 = vadd.f32 %v1314, %v1366
        %s1371 = sld [smem:[#allocation4 + $0x34]]
        %v1372 = vstv %s1371
        %v1373 = vmul.f32 %v1372, %v450
        %v1374 = vmul.f32 %v1372, %v451
        %v1377 = vrot.slane %v1373, 2
        %v1378 = vrot.slane %v1374, 2
        %v1379 = vsel %vm795, %v1377, %v1378
        %1380 = vrot.lane.b32.xlu0 %v1379, 127
        %v1381 = vpop.permute.xlu0 %1380
        %1382 = vrot.lane.b32.xlu0 %v1378, 127
        %v1383 = vpop.permute.xlu0 %1382
        %v1386 = vadd.f32 %v1326, %v1381
        %v1387 = vadd.f32 %v1327, %v1383
        %s1388 = sld [smem:[#allocation4 + $0x58]]
        %v1389 = vstv %s1388
        %v1390 = vmul.f32 %v1389, %v450
        %v1391 = vmul.f32 %v1389, %v451
        %v1394 = vrot.slane %v1390, 2
        %v1395 = vrot.slane %v1391, 2
        %v1396 = vsel %vm795, %v1394, %v1395
        %1397 = vrot.lane.b32.xlu0 %v1396, 127
        %v1398 = vpop.permute.xlu0 %1397
        %1399 = vrot.lane.b32.xlu0 %v1395, 127
        %v1400 = vpop.permute.xlu0 %1399
        %v1403 = vadd.f32 %v1339, %v1398
        %v1404 = vadd.f32 %v1340, %v1400
        %s1405 = sld [smem:[#allocation4 + $0x7c]]
        %v1406 = vstv %s1405
        %v1407 = vmul.f32 %v1406, %v450
        %v1408 = vmul.f32 %v1406, %v451
        %v1411 = vrot.slane %v1407, 2
        %v1412 = vrot.slane %v1408, 2
        %v1413 = vsel %vm795, %v1411, %v1412
        %1414 = vrot.lane.b32.xlu0 %v1413, 127
        %v1415 = vpop.permute.xlu0 %1414
        %1416 = vrot.lane.b32.xlu0 %v1412, 127
        %v1417 = vpop.permute.xlu0 %1416
        %v1420 = vadd.f32 %v1352, %v1415
        %v1421 = vadd.f32 %v1353, %v1417
        %s1422 = sld [smem:[#allocation4 + $0x11]]
        %v1423 = vstv %s1422
        %v1424 = vmul.f32 %v1423, %v450
        %v1425 = vmul.f32 %v1423, %v451
        %v1428 = vrot.slane %v1424, 2
        %v1429 = vrot.slane %v1425, 2
        %v1430 = vsel %vm795, %v1428, %v1429
        %1431 = vrot.lane.b32.xlu0 %v1430, 126
        %v1432 = vpop.permute.xlu0 %1431
        %1433 = vrot.lane.b32.xlu0 %v1429, 126
        %v1434 = vpop.permute.xlu0 %1433
        %v1437 = vadd.f32 %v1369, %v1432
        %v1438 = vadd.f32 %v1370, %v1434
        %s1439 = sld [smem:[#allocation4 + $0x35]]
        %v1440 = vstv %s1439
        %v1441 = vmul.f32 %v1440, %v450
        %v1442 = vmul.f32 %v1440, %v451
        %v1445 = vrot.slane %v1441, 2
        %v1446 = vrot.slane %v1442, 2
        %v1447 = vsel %vm795, %v1445, %v1446
        %1448 = vrot.lane.b32.xlu0 %v1447, 126
        %v1449 = vpop.permute.xlu0 %1448
        %1450 = vrot.lane.b32.xlu0 %v1446, 126
        %v1451 = vpop.permute.xlu0 %1450
        %v1454 = vadd.f32 %v1386, %v1449
        %v1455 = vadd.f32 %v1387, %v1451
        %s1456 = sld [smem:[#allocation4 + $0x59]]
        %v1457 = vstv %s1456
        %v1458 = vmul.f32 %v1457, %v450
        %v1459 = vmul.f32 %v1457, %v451
        %v1462 = vrot.slane %v1458, 2
        %v1463 = vrot.slane %v1459, 2
        %v1464 = vsel %vm795, %v1462, %v1463
        %1465 = vrot.lane.b32.xlu0 %v1464, 126
        %v1466 = vpop.permute.xlu0 %1465
        %1467 = vrot.lane.b32.xlu0 %v1463, 126
        %v1468 = vpop.permute.xlu0 %1467
        %v1471 = vadd.f32 %v1403, %v1466
        %v1472 = vadd.f32 %v1404, %v1468
        %s1473 = sld [smem:[#allocation4 + $0x7d]]
        %v1474 = vstv %s1473
        %v1475 = vmul.f32 %v1474, %v450
        %v1476 = vmul.f32 %v1474, %v451
        %v1479 = vrot.slane %v1475, 2
        %v1480 = vrot.slane %v1476, 2
        %v1481 = vsel %vm795, %v1479, %v1480
        %1482 = vrot.lane.b32.xlu0 %v1481, 126
        %v1483 = vpop.permute.xlu0 %1482
        %1484 = vrot.lane.b32.xlu0 %v1480, 126
        %v1485 = vpop.permute.xlu0 %1484
        %v1488 = vadd.f32 %v1420, %v1483
        %v1489 = vadd.f32 %v1421, %v1485
        %s1490 = sld [smem:[#allocation4 + $0x12]]
        %v1491 = vstv %s1490
        %v1492 = vmul.f32 %v1491, %v452
        %v1493 = vmul.f32 %v1491, %v453
        %v1494 = vadd.f32 %v1437, %v1492
        %v1495 = vadd.f32 %v1438, %v1493
        %s1496 = sld [smem:[#allocation4 + $0x36]]
        %v1497 = vstv %s1496
        %v1498 = vmul.f32 %v1497, %v452
        %v1499 = vmul.f32 %v1497, %v453
        %v1500 = vadd.f32 %v1454, %v1498
        %v1501 = vadd.f32 %v1455, %v1499
        %s1502 = sld [smem:[#allocation4 + $0x5a]]
        %v1503 = vstv %s1502
        %v1504 = vmul.f32 %v1503, %v452
        %v1505 = vmul.f32 %v1503, %v453
        %v1506 = vadd.f32 %v1471, %v1504
        %v1507 = vadd.f32 %v1472, %v1505
        %s1508 = sld [smem:[#allocation4 + $0x7e]]
        %v1509 = vstv %s1508
        %v1510 = vmul.f32 %v1509, %v452
        %v1511 = vmul.f32 %v1509, %v453
        %v1512 = vadd.f32 %v1488, %v1510
        %v1513 = vadd.f32 %v1489, %v1511
        %s1514 = sld [smem:[#allocation4 + $0x13]]
        %v1515 = vstv %s1514
        %v1516 = vmul.f32 %v1515, %v452
        %v1517 = vmul.f32 %v1515, %v453
        %1520 = vrot.lane.b32.xlu0 %v1516, 127
        %v1521 = vpop.permute.xlu0 %1520
        %1522 = vrot.lane.b32.xlu0 %v1517, 127
        %v1523 = vpop.permute.xlu0 %1522
        %v1526 = vadd.f32 %v1494, %v1521
        %v1527 = vadd.f32 %v1495, %v1523
        %s1528 = sld [smem:[#allocation4 + $0x37]]
        %v1529 = vstv %s1528
        %v1530 = vmul.f32 %v1529, %v452
        %v1531 = vmul.f32 %v1529, %v453
        %1534 = vrot.lane.b32.xlu0 %v1530, 127
        %v1535 = vpop.permute.xlu0 %1534
        %1536 = vrot.lane.b32.xlu0 %v1531, 127
        %v1537 = vpop.permute.xlu0 %1536
        %v1540 = vadd.f32 %v1500, %v1535
        %v1541 = vadd.f32 %v1501, %v1537
        %s1542 = sld [smem:[#allocation4 + $0x5b]]
        %v1543 = vstv %s1542
        %v1544 = vmul.f32 %v1543, %v452
        %v1545 = vmul.f32 %v1543, %v453
        %1548 = vrot.lane.b32.xlu0 %v1544, 127
        %v1549 = vpop.permute.xlu0 %1548
        %1550 = vrot.lane.b32.xlu0 %v1545, 127
        %v1551 = vpop.permute.xlu0 %1550
        %v1554 = vadd.f32 %v1506, %v1549
        %v1555 = vadd.f32 %v1507, %v1551
        %s1556 = sld [smem:[#allocation4 + $0x7f]]
        %v1557 = vstv %s1556
        %v1558 = vmul.f32 %v1557, %v452
        %v1559 = vmul.f32 %v1557, %v453
        %1562 = vrot.lane.b32.xlu0 %v1558, 127
        %v1563 = vpop.permute.xlu0 %1562
        %1564 = vrot.lane.b32.xlu0 %v1559, 127
        %v1565 = vpop.permute.xlu0 %1564
        %v1568 = vadd.f32 %v1512, %v1563
        %v1569 = vadd.f32 %v1513, %v1565
        %s1570 = sld [smem:[#allocation4 + $0x14]]
        %v1571 = vstv %s1570
        %v1572 = vmul.f32 %v1571, %v452
        %v1573 = vmul.f32 %v1571, %v453
        %1576 = vrot.lane.b32.xlu0 %v1572, 126
        %v1577 = vpop.permute.xlu0 %1576
        %1578 = vrot.lane.b32.xlu0 %v1573, 126
        %v1579 = vpop.permute.xlu0 %1578
        %v1582 = vadd.f32 %v1526, %v1577
        %v1583 = vadd.f32 %v1527, %v1579
        %s1584 = sld [smem:[#allocation4 + $0x38]]
        %v1585 = vstv %s1584
        %v1586 = vmul.f32 %v1585, %v452
        %v1587 = vmul.f32 %v1585, %v453
        %1590 = vrot.lane.b32.xlu0 %v1586, 126
        %v1591 = vpop.permute.xlu0 %1590
        %1592 = vrot.lane.b32.xlu0 %v1587, 126
        %v1593 = vpop.permute.xlu0 %1592
        %v1596 = vadd.f32 %v1540, %v1591
        %v1597 = vadd.f32 %v1541, %v1593
        %s1598 = sld [smem:[#allocation4 + $0x5c]]
        %v1599 = vstv %s1598
        %v1600 = vmul.f32 %v1599, %v452
        %v1601 = vmul.f32 %v1599, %v453
        %1604 = vrot.lane.b32.xlu0 %v1600, 126
        %v1605 = vpop.permute.xlu0 %1604
        %1606 = vrot.lane.b32.xlu0 %v1601, 126
        %v1607 = vpop.permute.xlu0 %1606
        %v1610 = vadd.f32 %v1554, %v1605
        %v1611 = vadd.f32 %v1555, %v1607
        %s1612 = sld [smem:[#allocation4 + $0x80]]
        %v1613 = vstv %s1612
        %v1614 = vmul.f32 %v1613, %v452
        %v1615 = vmul.f32 %v1613, %v453
        %1618 = vrot.lane.b32.xlu0 %v1614, 126
        %v1619 = vpop.permute.xlu0 %1618
        %1620 = vrot.lane.b32.xlu0 %v1615, 126
        %v1621 = vpop.permute.xlu0 %1620
        %v1624 = vadd.f32 %v1568, %v1619
        %v1625 = vadd.f32 %v1569, %v1621
        %s1626 = sld [smem:[#allocation4 + $0x15]]
        %v1627 = vstv %s1626
        %v1628 = vmul.f32 %v1627, %v452
        %v1629 = vmul.f32 %v1627, %v453
        %v1632 = vrot.slane %v1628, 1
        %v1633 = vrot.slane %v1629, 1
        %v1634 = vsel %vm606, %v1632, %v1633
        %v1637 = vadd.f32 %v1582, %v1634
        %v1638 = vadd.f32 %v1583, %v1633
        %s1639 = sld [smem:[#allocation4 + $0x39]]
        %v1640 = vstv %s1639
        %v1641 = vmul.f32 %v1640, %v452
        %v1642 = vmul.f32 %v1640, %v453
        %v1645 = vrot.slane %v1641, 1
        %v1646 = vrot.slane %v1642, 1
        %v1647 = vsel %vm606, %v1645, %v1646
        %v1650 = vadd.f32 %v1596, %v1647
        %v1651 = vadd.f32 %v1597, %v1646
        %s1652 = sld [smem:[#allocation4 + $0x5d]]
        %v1653 = vstv %s1652
        %v1654 = vmul.f32 %v1653, %v452
        %v1655 = vmul.f32 %v1653, %v453
        %v1658 = vrot.slane %v1654, 1
        %v1659 = vrot.slane %v1655, 1
        %v1660 = vsel %vm606, %v1658, %v1659
        %v1663 = vadd.f32 %v1610, %v1660
        %v1664 = vadd.f32 %v1611, %v1659
        %s1665 = sld [smem:[#allocation4 + $0x81]]
        %v1666 = vstv %s1665
        %v1667 = vmul.f32 %v1666, %v452
        %v1668 = vmul.f32 %v1666, %v453
        %v1671 = vrot.slane %v1667, 1
        %v1672 = vrot.slane %v1668, 1
        %v1673 = vsel %vm606, %v1671, %v1672
        %v1676 = vadd.f32 %v1624, %v1673
        %v1677 = vadd.f32 %v1625, %v1672
        %s1678 = sld [smem:[#allocation4 + $0x16]]
        %v1679 = vstv %s1678
        %v1680 = vmul.f32 %v1679, %v452
        %v1681 = vmul.f32 %v1679, %v453
        %v1684 = vrot.slane %v1680, 1
        %v1685 = vrot.slane %v1681, 1
        %v1686 = vsel %vm606, %v1684, %v1685
        %1687 = vrot.lane.b32.xlu0 %v1686, 127
        %v1688 = vpop.permute.xlu0 %1687
        %1689 = vrot.lane.b32.xlu0 %v1685, 127
        %v1690 = vpop.permute.xlu0 %1689
        %v1693 = vadd.f32 %v1637, %v1688
        %v1694 = vadd.f32 %v1638, %v1690
        %s1695 = sld [smem:[#allocation4 + $0x3a]]
        %v1696 = vstv %s1695
        %v1697 = vmul.f32 %v1696, %v452
        %v1698 = vmul.f32 %v1696, %v453
        %v1701 = vrot.slane %v1697, 1
        %v1702 = vrot.slane %v1698, 1
        %v1703 = vsel %vm606, %v1701, %v1702
        %1704 = vrot.lane.b32.xlu0 %v1703, 127
        %v1705 = vpop.permute.xlu0 %1704
        %1706 = vrot.lane.b32.xlu0 %v1702, 127
        %v1707 = vpop.permute.xlu0 %1706
        %v1710 = vadd.f32 %v1650, %v1705
        %v1711 = vadd.f32 %v1651, %v1707
        %s1712 = sld [smem:[#allocation4 + $0x5e]]
        %v1713 = vstv %s1712
        %v1714 = vmul.f32 %v1713, %v452
        %v1715 = vmul.f32 %v1713, %v453
        %v1718 = vrot.slane %v1714, 1
        %v1719 = vrot.slane %v1715, 1
        %v1720 = vsel %vm606, %v1718, %v1719
        %1721 = vrot.lane.b32.xlu0 %v1720, 127
        %v1722 = vpop.permute.xlu0 %1721
        %1723 = vrot.lane.b32.xlu0 %v1719, 127
        %v1724 = vpop.permute.xlu0 %1723
        %v1727 = vadd.f32 %v1663, %v1722
        %v1728 = vadd.f32 %v1664, %v1724
        %s1729 = sld [smem:[#allocation4 + $0x82]]
        %v1730 = vstv %s1729
        %v1731 = vmul.f32 %v1730, %v452
        %v1732 = vmul.f32 %v1730, %v453
        %v1735 = vrot.slane %v1731, 1
        %v1736 = vrot.slane %v1732, 1
        %v1737 = vsel %vm606, %v1735, %v1736
        %1738 = vrot.lane.b32.xlu0 %v1737, 127
        %v1739 = vpop.permute.xlu0 %1738
        %1740 = vrot.lane.b32.xlu0 %v1736, 127
        %v1741 = vpop.permute.xlu0 %1740
        %v1744 = vadd.f32 %v1676, %v1739
        %v1745 = vadd.f32 %v1677, %v1741
        %s1746 = sld [smem:[#allocation4 + $0x17]]
        %v1747 = vstv %s1746
        %v1748 = vmul.f32 %v1747, %v452
        %v1749 = vmul.f32 %v1747, %v453
        %v1752 = vrot.slane %v1748, 1
        %v1753 = vrot.slane %v1749, 1
        %v1754 = vsel %vm606, %v1752, %v1753
        %1755 = vrot.lane.b32.xlu0 %v1754, 126
        %v1756 = vpop.permute.xlu0 %1755
        %1757 = vrot.lane.b32.xlu0 %v1753, 126
        %v1758 = vpop.permute.xlu0 %1757
        %v1761 = vadd.f32 %v1693, %v1756
        %v1762 = vadd.f32 %v1694, %v1758
        %s1763 = sld [smem:[#allocation4 + $0x3b]]
        %v1764 = vstv %s1763
        %v1765 = vmul.f32 %v1764, %v452
        %v1766 = vmul.f32 %v1764, %v453
        %v1769 = vrot.slane %v1765, 1
        %v1770 = vrot.slane %v1766, 1
        %v1771 = vsel %vm606, %v1769, %v1770
        %1772 = vrot.lane.b32.xlu0 %v1771, 126
        %v1773 = vpop.permute.xlu0 %1772
        %1774 = vrot.lane.b32.xlu0 %v1770, 126
        %v1775 = vpop.permute.xlu0 %1774
        %v1778 = vadd.f32 %v1710, %v1773
        %v1779 = vadd.f32 %v1711, %v1775
        %s1780 = sld [smem:[#allocation4 + $0x5f]]
        %v1781 = vstv %s1780
        %v1782 = vmul.f32 %v1781, %v452
        %v1783 = vmul.f32 %v1781, %v453
        %v1786 = vrot.slane %v1782, 1
        %v1787 = vrot.slane %v1783, 1
        %v1788 = vsel %vm606, %v1786, %v1787
        %1789 = vrot.lane.b32.xlu0 %v1788, 126
        %v1790 = vpop.permute.xlu0 %1789
        %1791 = vrot.lane.b32.xlu0 %v1787, 126
        %v1792 = vpop.permute.xlu0 %1791
        %v1795 = vadd.f32 %v1727, %v1790
        %v1796 = vadd.f32 %v1728, %v1792
        %s1797 = sld [smem:[#allocation4 + $0x83]]
        %v1798 = vstv %s1797
        %v1799 = vmul.f32 %v1798, %v452
        %v1800 = vmul.f32 %v1798, %v453
        %v1803 = vrot.slane %v1799, 1
        %v1804 = vrot.slane %v1800, 1
        %v1805 = vsel %vm606, %v1803, %v1804
        %1806 = vrot.lane.b32.xlu0 %v1805, 126
        %v1807 = vpop.permute.xlu0 %1806
        %1808 = vrot.lane.b32.xlu0 %v1804, 126
        %v1809 = vpop.permute.xlu0 %1808
        %v1812 = vadd.f32 %v1744, %v1807
        %v1813 = vadd.f32 %v1745, %v1809
        %s1814 = sld [smem:[#allocation4 + $0x18]]
        %v1815 = vstv %s1814
        %v1816 = vmul.f32 %v1815, %v452
        %v1817 = vmul.f32 %v1815, %v453
        %v1820 = vrot.slane %v1816, 2
        %v1821 = vrot.slane %v1817, 2
        %v1822 = vsel %vm795, %v1820, %v1821
        %v1825 = vadd.f32 %v1761, %v1822
        %v1826 = vadd.f32 %v1762, %v1821
        %s1827 = sld [smem:[#allocation4 + $0x3c]]
        %v1828 = vstv %s1827
        %v1829 = vmul.f32 %v1828, %v452
        %v1830 = vmul.f32 %v1828, %v453
        %v1833 = vrot.slane %v1829, 2
        %v1834 = vrot.slane %v1830, 2
        %v1835 = vsel %vm795, %v1833, %v1834
        %v1838 = vadd.f32 %v1778, %v1835
        %v1839 = vadd.f32 %v1779, %v1834
        %s1840 = sld [smem:[#allocation4 + $0x60]]
        %v1841 = vstv %s1840
        %v1842 = vmul.f32 %v1841, %v452
        %v1843 = vmul.f32 %v1841, %v453
        %v1846 = vrot.slane %v1842, 2
        %v1847 = vrot.slane %v1843, 2
        %v1848 = vsel %vm795, %v1846, %v1847
        %v1851 = vadd.f32 %v1795, %v1848
        %v1852 = vadd.f32 %v1796, %v1847
        %s1853 = sld [smem:[#allocation4 + $0x84]]
        %v1854 = vstv %s1853
        %v1855 = vmul.f32 %v1854, %v452
        %v1856 = vmul.f32 %v1854, %v453
        %v1859 = vrot.slane %v1855, 2
        %v1860 = vrot.slane %v1856, 2
        %v1861 = vsel %vm795, %v1859, %v1860
        %v1864 = vadd.f32 %v1812, %v1861
        %v1865 = vadd.f32 %v1813, %v1860
        %s1866 = sld [smem:[#allocation4 + $0x19]]
        %v1867 = vstv %s1866
        %v1868 = vmul.f32 %v1867, %v452
        %v1869 = vmul.f32 %v1867, %v453
        %v1872 = vrot.slane %v1868, 2
        %v1873 = vrot.slane %v1869, 2
        %v1874 = vsel %vm795, %v1872, %v1873
        %1875 = vrot.lane.b32.xlu0 %v1874, 127
        %v1876 = vpop.permute.xlu0 %1875
        %1877 = vrot.lane.b32.xlu0 %v1873, 127
        %v1878 = vpop.permute.xlu0 %1877
        %v1881 = vadd.f32 %v1825, %v1876
        %v1882 = vadd.f32 %v1826, %v1878
        %s1883 = sld [smem:[#allocation4 + $0x3d]]
        %v1884 = vstv %s1883
        %v1885 = vmul.f32 %v1884, %v452
        %v1886 = vmul.f32 %v1884, %v453
        %v1889 = vrot.slane %v1885, 2
        %v1890 = vrot.slane %v1886, 2
        %v1891 = vsel %vm795, %v1889, %v1890
        %1892 = vrot.lane.b32.xlu0 %v1891, 127
        %v1893 = vpop.permute.xlu0 %1892
        %1894 = vrot.lane.b32.xlu0 %v1890, 127
        %v1895 = vpop.permute.xlu0 %1894
        %v1898 = vadd.f32 %v1838, %v1893
        %v1899 = vadd.f32 %v1839, %v1895
        %s1900 = sld [smem:[#allocation4 + $0x61]]
        %v1901 = vstv %s1900
        %v1902 = vmul.f32 %v1901, %v452
        %v1903 = vmul.f32 %v1901, %v453
        %v1906 = vrot.slane %v1902, 2
        %v1907 = vrot.slane %v1903, 2
        %v1908 = vsel %vm795, %v1906, %v1907
        %1909 = vrot.lane.b32.xlu0 %v1908, 127
        %v1910 = vpop.permute.xlu0 %1909
        %1911 = vrot.lane.b32.xlu0 %v1907, 127
        %v1912 = vpop.permute.xlu0 %1911
        %v1915 = vadd.f32 %v1851, %v1910
        %v1916 = vadd.f32 %v1852, %v1912
        %s1917 = sld [smem:[#allocation4 + $0x85]]
        %v1918 = vstv %s1917
        %v1919 = vmul.f32 %v1918, %v452
        %v1920 = vmul.f32 %v1918, %v453
        %v1923 = vrot.slane %v1919, 2
        %v1924 = vrot.slane %v1920, 2
        %v1925 = vsel %vm795, %v1923, %v1924
        %1926 = vrot.lane.b32.xlu0 %v1925, 127
        %v1927 = vpop.permute.xlu0 %1926
        %1928 = vrot.lane.b32.xlu0 %v1924, 127
        %v1929 = vpop.permute.xlu0 %1928
        %v1932 = vadd.f32 %v1864, %v1927
        %v1933 = vadd.f32 %v1865, %v1929
        %s1934 = sld [smem:[#allocation4 + $0x1a]]
        %v1935 = vstv %s1934
        %v1936 = vmul.f32 %v1935, %v452
        %v1937 = vmul.f32 %v1935, %v453
        %v1940 = vrot.slane %v1936, 2
        %v1941 = vrot.slane %v1937, 2
        %v1942 = vsel %vm795, %v1940, %v1941
        %1943 = vrot.lane.b32.xlu0 %v1942, 126
        %v1944 = vpop.permute.xlu0 %1943
        %1945 = vrot.lane.b32.xlu0 %v1941, 126
        %v1946 = vpop.permute.xlu0 %1945
        %v1949 = vadd.f32 %v1881, %v1944
        %v1950 = vadd.f32 %v1882, %v1946
        %s1951 = sld [smem:[#allocation4 + $0x3e]]
        %v1952 = vstv %s1951
        %v1953 = vmul.f32 %v1952, %v452
        %v1954 = vmul.f32 %v1952, %v453
        %v1957 = vrot.slane %v1953, 2
        %v1958 = vrot.slane %v1954, 2
        %v1959 = vsel %vm795, %v1957, %v1958
        %1960 = vrot.lane.b32.xlu0 %v1959, 126
        %v1961 = vpop.permute.xlu0 %1960
        %1962 = vrot.lane.b32.xlu0 %v1958, 126
        %v1963 = vpop.permute.xlu0 %1962
        %v1966 = vadd.f32 %v1898, %v1961
        %v1967 = vadd.f32 %v1899, %v1963
        %s1968 = sld [smem:[#allocation4 + $0x62]]
        %v1969 = vstv %s1968
        %v1970 = vmul.f32 %v1969, %v452
        %v1971 = vmul.f32 %v1969, %v453
        %v1974 = vrot.slane %v1970, 2
        %v1975 = vrot.slane %v1971, 2
        %v1976 = vsel %vm795, %v1974, %v1975
        %1977 = vrot.lane.b32.xlu0 %v1976, 126
        %v1978 = vpop.permute.xlu0 %1977
        %1979 = vrot.lane.b32.xlu0 %v1975, 126
        %v1980 = vpop.permute.xlu0 %1979
        %v1983 = vadd.f32 %v1915, %v1978
        %v1984 = vadd.f32 %v1916, %v1980
        %s1985 = sld [smem:[#allocation4 + $0x86]]
        %v1986 = vstv %s1985
        %v1987 = vmul.f32 %v1986, %v452
        %v1988 = vmul.f32 %v1986, %v453
        %v1991 = vrot.slane %v1987, 2
        %v1992 = vrot.slane %v1988, 2
        %v1993 = vsel %vm795, %v1991, %v1992
        %1994 = vrot.lane.b32.xlu0 %v1993, 126
        %v1995 = vpop.permute.xlu0 %1994
        %1996 = vrot.lane.b32.xlu0 %v1992, 126
        %v1997 = vpop.permute.xlu0 %1996
        %v2000 = vadd.f32 %v1932, %v1995
        %v2001 = vadd.f32 %v1933, %v1997
        %s2002 = sld [smem:[#allocation4 + $0x1b]]
        %v2003 = vstv %s2002
        %v2004 = vmul.f32 %v2003, %v454
        %v2005 = vmul.f32 %v2003, %v455
        %v2006 = vadd.f32 %v1949, %v2004
        %v2007 = vadd.f32 %v1950, %v2005
        %s2008 = sld [smem:[#allocation4 + $0x3f]]
        %v2009 = vstv %s2008
        %v2010 = vmul.f32 %v2009, %v454
        %v2011 = vmul.f32 %v2009, %v455
        %v2012 = vadd.f32 %v1966, %v2010
        %v2013 = vadd.f32 %v1967, %v2011
        %s2014 = sld [smem:[#allocation4 + $0x63]]
        %v2015 = vstv %s2014
        %v2016 = vmul.f32 %v2015, %v454
        %v2017 = vmul.f32 %v2015, %v455
        %v2018 = vadd.f32 %v1983, %v2016
        %v2019 = vadd.f32 %v1984, %v2017
        %s2020 = sld [smem:[#allocation4 + $0x87]]
        %v2021 = vstv %s2020
        %v2022 = vmul.f32 %v2021, %v454
        %v2023 = vmul.f32 %v2021, %v455
        %v2024 = vadd.f32 %v2000, %v2022
        %v2025 = vadd.f32 %v2001, %v2023
        %s2026 = sld [smem:[#allocation4 + $0x1c]]
        %v2027 = vstv %s2026
        %v2028 = vmul.f32 %v2027, %v454
        %v2029 = vmul.f32 %v2027, %v455
        %2032 = vrot.lane.b32.xlu0 %v2028, 127
        %v2033 = vpop.permute.xlu0 %2032
        %2034 = vrot.lane.b32.xlu0 %v2029, 127
        %v2035 = vpop.permute.xlu0 %2034
        %v2038 = vadd.f32 %v2006, %v2033
        %v2039 = vadd.f32 %v2007, %v2035
        %s2040 = sld [smem:[#allocation4 + $0x40]]
        %v2041 = vstv %s2040
        %v2042 = vmul.f32 %v2041, %v454
        %v2043 = vmul.f32 %v2041, %v455
        %2046 = vrot.lane.b32.xlu0 %v2042, 127
        %v2047 = vpop.permute.xlu0 %2046
        %2048 = vrot.lane.b32.xlu0 %v2043, 127
        %v2049 = vpop.permute.xlu0 %2048
        %v2052 = vadd.f32 %v2012, %v2047
        %v2053 = vadd.f32 %v2013, %v2049
        %s2054 = sld [smem:[#allocation4 + $0x64]]
        %v2055 = vstv %s2054
        %v2056 = vmul.f32 %v2055, %v454
        %v2057 = vmul.f32 %v2055, %v455
        %2060 = vrot.lane.b32.xlu0 %v2056, 127
        %v2061 = vpop.permute.xlu0 %2060
        %2062 = vrot.lane.b32.xlu0 %v2057, 127
        %v2063 = vpop.permute.xlu0 %2062
        %v2066 = vadd.f32 %v2018, %v2061
        %v2067 = vadd.f32 %v2019, %v2063
        %s2068 = sld [smem:[#allocation4 + $0x88]]
        %v2069 = vstv %s2068
        %v2070 = vmul.f32 %v2069, %v454
        %v2071 = vmul.f32 %v2069, %v455
        %2074 = vrot.lane.b32.xlu0 %v2070, 127
        %v2075 = vpop.permute.xlu0 %2074
        %2076 = vrot.lane.b32.xlu0 %v2071, 127
        %v2077 = vpop.permute.xlu0 %2076
        %v2080 = vadd.f32 %v2024, %v2075
        %v2081 = vadd.f32 %v2025, %v2077
        %s2082 = sld [smem:[#allocation4 + $0x1d]]
        %v2083 = vstv %s2082
        %v2084 = vmul.f32 %v2083, %v454
        %v2085 = vmul.f32 %v2083, %v455
        %2088 = vrot.lane.b32.xlu0 %v2084, 126
        %v2089 = vpop.permute.xlu0 %2088
        %2090 = vrot.lane.b32.xlu0 %v2085, 126
        %v2091 = vpop.permute.xlu0 %2090
        %v2094 = vadd.f32 %v2038, %v2089
        %v2095 = vadd.f32 %v2039, %v2091
        %s2096 = sld [smem:[#allocation4 + $0x41]]
        %v2097 = vstv %s2096
        %v2098 = vmul.f32 %v2097, %v454
        %v2099 = vmul.f32 %v2097, %v455
        %2102 = vrot.lane.b32.xlu0 %v2098, 126
        %v2103 = vpop.permute.xlu0 %2102
        %2104 = vrot.lane.b32.xlu0 %v2099, 126
        %v2105 = vpop.permute.xlu0 %2104
        %v2108 = vadd.f32 %v2052, %v2103
        %v2109 = vadd.f32 %v2053, %v2105
        %s2110 = sld [smem:[#allocation4 + $0x65]]
        %v2111 = vstv %s2110
        %v2112 = vmul.f32 %v2111, %v454
        %v2113 = vmul.f32 %v2111, %v455
        %2116 = vrot.lane.b32.xlu0 %v2112, 126
        %v2117 = vpop.permute.xlu0 %2116
        %2118 = vrot.lane.b32.xlu0 %v2113, 126
        %v2119 = vpop.permute.xlu0 %2118
        %v2122 = vadd.f32 %v2066, %v2117
        %v2123 = vadd.f32 %v2067, %v2119
        %s2124 = sld [smem:[#allocation4 + $0x89]]
        %v2125 = vstv %s2124
        %v2126 = vmul.f32 %v2125, %v454
        %v2127 = vmul.f32 %v2125, %v455
        %2130 = vrot.lane.b32.xlu0 %v2126, 126
        %v2131 = vpop.permute.xlu0 %2130
        %2132 = vrot.lane.b32.xlu0 %v2127, 126
        %v2133 = vpop.permute.xlu0 %2132
        %v2136 = vadd.f32 %v2080, %v2131
        %v2137 = vadd.f32 %v2081, %v2133
        %s2138 = sld [smem:[#allocation4 + $0x1e]]
        %v2139 = vstv %s2138
        %v2140 = vmul.f32 %v2139, %v454
        %v2141 = vmul.f32 %v2139, %v455
        %v2144 = vrot.slane %v2140, 1
        %v2145 = vrot.slane %v2141, 1
        %v2146 = vsel %vm606, %v2144, %v2145
        %v2149 = vadd.f32 %v2094, %v2146
        %v2150 = vadd.f32 %v2095, %v2145
        %s2151 = sld [smem:[#allocation4 + $0x42]]
        %v2152 = vstv %s2151
        %v2153 = vmul.f32 %v2152, %v454
        %v2154 = vmul.f32 %v2152, %v455
        %v2157 = vrot.slane %v2153, 1
        %v2158 = vrot.slane %v2154, 1
        %v2159 = vsel %vm606, %v2157, %v2158
        %v2162 = vadd.f32 %v2108, %v2159
        %v2163 = vadd.f32 %v2109, %v2158
        %s2164 = sld [smem:[#allocation4 + $0x66]]
        %v2165 = vstv %s2164
        %v2166 = vmul.f32 %v2165, %v454
        %v2167 = vmul.f32 %v2165, %v455
        %v2170 = vrot.slane %v2166, 1
        %v2171 = vrot.slane %v2167, 1
        %v2172 = vsel %vm606, %v2170, %v2171
        %v2175 = vadd.f32 %v2122, %v2172
        %v2176 = vadd.f32 %v2123, %v2171
        %s2177 = sld [smem:[#allocation4 + $0x8a]]
        %v2178 = vstv %s2177
        %v2179 = vmul.f32 %v2178, %v454
        %v2180 = vmul.f32 %v2178, %v455
        %v2183 = vrot.slane %v2179, 1
        %v2184 = vrot.slane %v2180, 1
        %v2185 = vsel %vm606, %v2183, %v2184
        %v2188 = vadd.f32 %v2136, %v2185
        %v2189 = vadd.f32 %v2137, %v2184
        %s2190 = sld [smem:[#allocation4 + $0x1f]]
        %v2191 = vstv %s2190
        %v2192 = vmul.f32 %v2191, %v454
        %v2193 = vmul.f32 %v2191, %v455
        %v2196 = vrot.slane %v2192, 1
        %v2197 = vrot.slane %v2193, 1
        %v2198 = vsel %vm606, %v2196, %v2197
        %2199 = vrot.lane.b32.xlu0 %v2198, 127
        %v2200 = vpop.permute.xlu0 %2199
        %2201 = vrot.lane.b32.xlu0 %v2197, 127
        %v2202 = vpop.permute.xlu0 %2201
        %v2205 = vadd.f32 %v2149, %v2200
        %v2206 = vadd.f32 %v2150, %v2202
        %s2207 = sld [smem:[#allocation4 + $0x43]]
        %v2208 = vstv %s2207
        %v2209 = vmul.f32 %v2208, %v454
        %v2210 = vmul.f32 %v2208, %v455
        %v2213 = vrot.slane %v2209, 1
        %v2214 = vrot.slane %v2210, 1
        %v2215 = vsel %vm606, %v2213, %v2214
        %2216 = vrot.lane.b32.xlu0 %v2215, 127
        %v2217 = vpop.permute.xlu0 %2216
        %2218 = vrot.lane.b32.xlu0 %v2214, 127
        %v2219 = vpop.permute.xlu0 %2218
        %v2222 = vadd.f32 %v2162, %v2217
        %v2223 = vadd.f32 %v2163, %v2219
        %s2224 = sld [smem:[#allocation4 + $0x67]]
        %v2225 = vstv %s2224
        %v2226 = vmul.f32 %v2225, %v454
        %v2227 = vmul.f32 %v2225, %v455
        %v2230 = vrot.slane %v2226, 1
        %v2231 = vrot.slane %v2227, 1
        %v2232 = vsel %vm606, %v2230, %v2231
        %2233 = vrot.lane.b32.xlu0 %v2232, 127
        %v2234 = vpop.permute.xlu0 %2233
        %2235 = vrot.lane.b32.xlu0 %v2231, 127
        %v2236 = vpop.permute.xlu0 %2235
        %v2239 = vadd.f32 %v2175, %v2234
        %v2240 = vadd.f32 %v2176, %v2236
        %s2241 = sld [smem:[#allocation4 + $0x8b]]
        %v2242 = vstv %s2241
        %v2243 = vmul.f32 %v2242, %v454
        %v2244 = vmul.f32 %v2242, %v455
        %v2247 = vrot.slane %v2243, 1
        %v2248 = vrot.slane %v2244, 1
        %v2249 = vsel %vm606, %v2247, %v2248
        %2250 = vrot.lane.b32.xlu0 %v2249, 127
        %v2251 = vpop.permute.xlu0 %2250
        %2252 = vrot.lane.b32.xlu0 %v2248, 127
        %v2253 = vpop.permute.xlu0 %2252
        %v2256 = vadd.f32 %v2188, %v2251
        %v2257 = vadd.f32 %v2189, %v2253
        %s2258 = sld [smem:[#allocation4 + $0x20]]
        %v2259 = vstv %s2258
        %v2260 = vmul.f32 %v2259, %v454
        %v2261 = vmul.f32 %v2259, %v455
        %v2264 = vrot.slane %v2260, 1
        %v2265 = vrot.slane %v2261, 1
        %v2266 = vsel %vm606, %v2264, %v2265
        %2267 = vrot.lane.b32.xlu0 %v2266, 126
        %v2268 = vpop.permute.xlu0 %2267
        %2269 = vrot.lane.b32.xlu0 %v2265, 126
        %v2270 = vpop.permute.xlu0 %2269
        %v2273 = vadd.f32 %v2205, %v2268
        %v2274 = vadd.f32 %v2206, %v2270
        %s2275 = sld [smem:[#allocation4 + $0x44]]
        %v2276 = vstv %s2275
        %v2277 = vmul.f32 %v2276, %v454
        %v2278 = vmul.f32 %v2276, %v455
        %v2281 = vrot.slane %v2277, 1
        %v2282 = vrot.slane %v2278, 1
        %v2283 = vsel %vm606, %v2281, %v2282
        %2284 = vrot.lane.b32.xlu0 %v2283, 126
        %v2285 = vpop.permute.xlu0 %2284
        %2286 = vrot.lane.b32.xlu0 %v2282, 126
        %v2287 = vpop.permute.xlu0 %2286
        %v2290 = vadd.f32 %v2222, %v2285
        %v2291 = vadd.f32 %v2223, %v2287
        %s2292 = sld [smem:[#allocation4 + $0x68]]
        %v2293 = vstv %s2292
        %v2294 = vmul.f32 %v2293, %v454
        %v2295 = vmul.f32 %v2293, %v455
        %v2298 = vrot.slane %v2294, 1
        %v2299 = vrot.slane %v2295, 1
        %v2300 = vsel %vm606, %v2298, %v2299
        %2301 = vrot.lane.b32.xlu0 %v2300, 126
        %v2302 = vpop.permute.xlu0 %2301
        %2303 = vrot.lane.b32.xlu0 %v2299, 126
        %v2304 = vpop.permute.xlu0 %2303
        %v2307 = vadd.f32 %v2239, %v2302
        %v2308 = vadd.f32 %v2240, %v2304
        %s2309 = sld [smem:[#allocation4 + $0x8c]]
        %v2310 = vstv %s2309
        %v2311 = vmul.f32 %v2310, %v454
        %v2312 = vmul.f32 %v2310, %v455
        %v2315 = vrot.slane %v2311, 1
        %v2316 = vrot.slane %v2312, 1
        %v2317 = vsel %vm606, %v2315, %v2316
        %2318 = vrot.lane.b32.xlu0 %v2317, 126
        %v2319 = vpop.permute.xlu0 %2318
        %2320 = vrot.lane.b32.xlu0 %v2316, 126
        %v2321 = vpop.permute.xlu0 %2320
        %v2324 = vadd.f32 %v2256, %v2319
        %v2325 = vadd.f32 %v2257, %v2321
        %s2326 = sld [smem:[#allocation4 + $0x21]]
        %v2327 = vstv %s2326
        %v2328 = vmul.f32 %v2327, %v454
        %v2329 = vmul.f32 %v2327, %v455
        %v2332 = vrot.slane %v2328, 2
        %v2333 = vrot.slane %v2329, 2
        %v2334 = vsel %vm795, %v2332, %v2333
        %v2337 = vadd.f32 %v2273, %v2334
        %v2338 = vadd.f32 %v2274, %v2333
        %s2339 = sld [smem:[#allocation4 + $0x45]]
        %v2340 = vstv %s2339
        %v2341 = vmul.f32 %v2340, %v454
        %v2342 = vmul.f32 %v2340, %v455
        %v2345 = vrot.slane %v2341, 2
        %v2346 = vrot.slane %v2342, 2
        %v2347 = vsel %vm795, %v2345, %v2346
        %v2350 = vadd.f32 %v2290, %v2347
        %v2351 = vadd.f32 %v2291, %v2346
        %s2352 = sld [smem:[#allocation4 + $0x69]]
        %v2353 = vstv %s2352
        %v2354 = vmul.f32 %v2353, %v454
        %v2355 = vmul.f32 %v2353, %v455
        %v2358 = vrot.slane %v2354, 2
        %v2359 = vrot.slane %v2355, 2
        %v2360 = vsel %vm795, %v2358, %v2359
        %v2363 = vadd.f32 %v2307, %v2360
        %v2364 = vadd.f32 %v2308, %v2359
        %s2365 = sld [smem:[#allocation4 + $0x8d]]
        %v2366 = vstv %s2365
        %v2367 = vmul.f32 %v2366, %v454
        %v2368 = vmul.f32 %v2366, %v455
        %v2371 = vrot.slane %v2367, 2
        %v2372 = vrot.slane %v2368, 2
        %v2373 = vsel %vm795, %v2371, %v2372
        %v2376 = vadd.f32 %v2324, %v2373
        %v2377 = vadd.f32 %v2325, %v2372
        %s2378 = sld [smem:[#allocation4 + $0x22]]
        %v2379 = vstv %s2378
        %v2380 = vmul.f32 %v2379, %v454
        %v2381 = vmul.f32 %v2379, %v455
        %v2384 = vrot.slane %v2380, 2
        %v2385 = vrot.slane %v2381, 2
        %v2386 = vsel %vm795, %v2384, %v2385
        %2387 = vrot.lane.b32.xlu0 %v2386, 127
        %v2388 = vpop.permute.xlu0 %2387
        %2389 = vrot.lane.b32.xlu0 %v2385, 127
        %v2390 = vpop.permute.xlu0 %2389
        %v2393 = vadd.f32 %v2337, %v2388
        %v2394 = vadd.f32 %v2338, %v2390
        %s2395 = sld [smem:[#allocation4 + $0x46]]
        %v2396 = vstv %s2395
        %v2397 = vmul.f32 %v2396, %v454
        %v2398 = vmul.f32 %v2396, %v455
        %v2401 = vrot.slane %v2397, 2
        %v2402 = vrot.slane %v2398, 2
        %v2403 = vsel %vm795, %v2401, %v2402
        %2404 = vrot.lane.b32.xlu0 %v2403, 127
        %v2405 = vpop.permute.xlu0 %2404
        %2406 = vrot.lane.b32.xlu0 %v2402, 127
        %v2407 = vpop.permute.xlu0 %2406
        %v2410 = vadd.f32 %v2350, %v2405
        %v2411 = vadd.f32 %v2351, %v2407
        %s2412 = sld [smem:[#allocation4 + $0x6a]]
        %v2413 = vstv %s2412
        %v2414 = vmul.f32 %v2413, %v454
        %v2415 = vmul.f32 %v2413, %v455
        %v2418 = vrot.slane %v2414, 2
        %v2419 = vrot.slane %v2415, 2
        %v2420 = vsel %vm795, %v2418, %v2419
        %2421 = vrot.lane.b32.xlu0 %v2420, 127
        %v2422 = vpop.permute.xlu0 %2421
        %2423 = vrot.lane.b32.xlu0 %v2419, 127
        %v2424 = vpop.permute.xlu0 %2423
        %v2427 = vadd.f32 %v2363, %v2422
        %v2428 = vadd.f32 %v2364, %v2424
        %s2429 = sld [smem:[#allocation4 + $0x8e]]
        %v2430 = vstv %s2429
        %v2431 = vmul.f32 %v2430, %v454
        %v2432 = vmul.f32 %v2430, %v455
        %v2435 = vrot.slane %v2431, 2
        %v2436 = vrot.slane %v2432, 2
        %v2437 = vsel %vm795, %v2435, %v2436
        %2438 = vrot.lane.b32.xlu0 %v2437, 127
        %v2439 = vpop.permute.xlu0 %2438
        %2440 = vrot.lane.b32.xlu0 %v2436, 127
        %v2441 = vpop.permute.xlu0 %2440
        %v2444 = vadd.f32 %v2376, %v2439
        %v2445 = vadd.f32 %v2377, %v2441
        %s2446 = sld [smem:[#allocation4 + $0x23]]
        %v2447 = vstv %s2446
        %v2448 = vmul.f32 %v2447, %v454
        %v2449 = vmul.f32 %v2447, %v455
        %v2452 = vrot.slane %v2448, 2
        %v2453 = vrot.slane %v2449, 2
        %v2454 = vsel %vm795, %v2452, %v2453
        %2455 = vrot.lane.b32.xlu0 %v2454, 126
        %v2456 = vpop.permute.xlu0 %2455
        %2457 = vrot.lane.b32.xlu0 %v2453, 126
        %v2458 = vpop.permute.xlu0 %2457
        %v2461 = vadd.f32 %v2393, %v2456
        %v2462 = vadd.f32 %v2394, %v2458
        %s2463 = sld [smem:[#allocation4 + $0x47]]
        %v2464 = vstv %s2463
        %v2465 = vmul.f32 %v2464, %v454
        %v2466 = vmul.f32 %v2464, %v455
        %v2469 = vrot.slane %v2465, 2
        %v2470 = vrot.slane %v2466, 2
        %v2471 = vsel %vm795, %v2469, %v2470
        %2472 = vrot.lane.b32.xlu0 %v2471, 126
        %v2473 = vpop.permute.xlu0 %2472
        %2474 = vrot.lane.b32.xlu0 %v2470, 126
        %v2475 = vpop.permute.xlu0 %2474
        %v2478 = vadd.f32 %v2410, %v2473
        %v2479 = vadd.f32 %v2411, %v2475
        %s2480 = sld [smem:[#allocation4 + $0x6b]]
        %v2481 = vstv %s2480
        %v2482 = vmul.f32 %v2481, %v454
        %v2483 = vmul.f32 %v2481, %v455
        %v2486 = vrot.slane %v2482, 2
        %v2487 = vrot.slane %v2483, 2
        %v2488 = vsel %vm795, %v2486, %v2487
        %2489 = vrot.lane.b32.xlu0 %v2488, 126
        %v2490 = vpop.permute.xlu0 %2489
        %2491 = vrot.lane.b32.xlu0 %v2487, 126
        %v2492 = vpop.permute.xlu0 %2491
        %v2495 = vadd.f32 %v2427, %v2490
        %v2496 = vadd.f32 %v2428, %v2492
        %s2497 = sld [smem:[#allocation4 + $0x8f]]
        %v2498 = vstv %s2497
        %v2499 = vmul.f32 %v2498, %v454
        %v2500 = vmul.f32 %v2498, %v455
        %v2503 = vrot.slane %v2499, 2
        %v2504 = vrot.slane %v2500, 2
        %v2505 = vsel %vm795, %v2503, %v2504
        %2506 = vrot.lane.b32.xlu0 %v2505, 126
        %v2507 = vpop.permute.xlu0 %2506
        %2508 = vrot.lane.b32.xlu0 %v2504, 126
        %v2509 = vpop.permute.xlu0 %2508
        %v2512 = vadd.f32 %v2444, %v2507
        %v2513 = vadd.f32 %v2445, %v2509
        %v2514 = vlaneseq
        %v2515 = vshrl.u32 %v2514, 7
        %v2516 = vadd.s32 %v2515, 8
        %s2517 = smul.u32 %s28, 8
        %v2518 = vstv %s2517
        %v2519 = vadd.s32 %v2515, %v2518
        %v2520 = vadd.s32 %v2516, %v2518
        %v2521 = vsub.s32 %v2519, 1
        %v2522 = vsub.s32 %v2520, 1
        %v2523 = vlaneseq
        %v2524 = vand.u32 %v2523, 127
        %v2525 = vsub.s32 %v2524, 1
        %vm2526 = vcmp.ge.s32.totalorder %v2521, 0
        %vm2527 = vcmp.ge.s32.totalorder %v2522, 0
        %vm2528 = vcmp.lt.s32.totalorder %v2521, 16
        %vm2529 = vcmp.lt.s32.totalorder %v2522, 16
        %vm2530 = vmand %vm2526, %vm2528
        %vm2531 = vmand %vm2527, %vm2529
        %vm2532 = vcmp.ge.s32.totalorder %v2525, 0
        %vm2533 = vmand %vm2530, %vm2532
        %vm2534 = vmand %vm2531, %vm2532
        %vm2535 = vcmp.lt.s32.totalorder %v2525, 16
        %vm2536 = vmand %vm2533, %vm2535
        %vm2537 = vmand %vm2534, %vm2535
        %v2538 = vsel %vm2536, 1, 0
        %v2539 = vsel %vm2537, 1, 0
        %v2540 = vcvt.s32.f32 %v2538
        %v2541 = vcvt.s32.f32 %v2539
        %v2542 = vmax.f32 %v2461, 0.0
        %v2543 = vmax.f32 %v2462, 0.0
        %v2544 = vmax.f32 %v2478, 0.0
        %v2545 = vmax.f32 %v2479, 0.0
        %v2546 = vmax.f32 %v2495, 0.0
        %v2547 = vmax.f32 %v2496, 0.0
        %v2548 = vmax.f32 %v2512, 0.0
        %v2549 = vmax.f32 %v2513, 0.0
        %v2550 = vmul.f32 %v2542, %v2540
        %v2551 = vmul.f32 %v2543, %v2541
        %v2552 = vmul.f32 %v2544, %v2540
        %v2553 = vmul.f32 %v2545, %v2541
        %v2554 = vmul.f32 %v2546, %v2540
        %v2555 = vmul.f32 %v2547, %v2541
        %v2556 = vmul.f32 %v2548, %v2540
        %v2557 = vmul.f32 %v2549, %v2541
        %s2558 = sld [smem:[#allocation10]]
        %v2559 = vstv %s2558
        %s2560 = sld [smem:[#allocation10 + $0x1]]
        %v2561 = vstv %s2560
        %s2562 = sld [smem:[#allocation10 + $0x2]]
        %v2563 = vstv %s2562
        %s2564 = sld [smem:[#allocation10 + $0x3]]
        %v2565 = vstv %s2564
        %s2566 = sld [smem:[#allocation9]]
        %v2567 = vstv %s2566
        %v2568 = vmul.f32 %v2567, %v2550
        %v2569 = vadd.f32 %v2559, %v2568
        %s2570 = sld [smem:[#allocation9 + $0x24]]
        %v2571 = vstv %s2570
        %v2572 = vmul.f32 %v2571, %v2550
        %v2573 = vadd.f32 %v2561, %v2572
        %s2574 = sld [smem:[#allocation9 + $0x48]]
        %v2575 = vstv %s2574
        %v2576 = vmul.f32 %v2575, %v2550
        %v2577 = vadd.f32 %v2563, %v2576
        %s2578 = sld [smem:[#allocation9 + $0x6c]]
        %v2579 = vstv %s2578
        %v2580 = vmul.f32 %v2579, %v2550
        %v2581 = vadd.f32 %v2565, %v2580
        %s2582 = sld [smem:[#allocation9 + $0x1]]
        %v2583 = vstv %s2582
        %v2584 = vmul.f32 %v2583, %v2550
        %2586 = vrot.lane.b32.xlu0 %v2584, 127
        %v2587 = vpop.permute.xlu0 %2586
        %v2589 = vadd.f32 %v2569, %v2587
        %s2590 = sld [smem:[#allocation9 + $0x25]]
        %v2591 = vstv %s2590
        %v2592 = vmul.f32 %v2591, %v2550
        %2594 = vrot.lane.b32.xlu0 %v2592, 127
        %v2595 = vpop.permute.xlu0 %2594
        %v2597 = vadd.f32 %v2573, %v2595
        %s2598 = sld [smem:[#allocation9 + $0x49]]
        %v2599 = vstv %s2598
        %v2600 = vmul.f32 %v2599, %v2550
        %2602 = vrot.lane.b32.xlu0 %v2600, 127
        %v2603 = vpop.permute.xlu0 %2602
        %v2605 = vadd.f32 %v2577, %v2603
        %s2606 = sld [smem:[#allocation9 + $0x6d]]
        %v2607 = vstv %s2606
        %v2608 = vmul.f32 %v2607, %v2550
        %2610 = vrot.lane.b32.xlu0 %v2608, 127
        %v2611 = vpop.permute.xlu0 %2610
        %v2613 = vadd.f32 %v2581, %v2611
        %s2614 = sld [smem:[#allocation9 + $0x2]]
        %v2615 = vstv %s2614
        %v2616 = vmul.f32 %v2615, %v2550
        %2618 = vrot.lane.b32.xlu0 %v2616, 126
        %v2619 = vpop.permute.xlu0 %2618
        %v2621 = vadd.f32 %v2589, %v2619
        %s2622 = sld [smem:[#allocation9 + $0x26]]
        %v2623 = vstv %s2622
        %v2624 = vmul.f32 %v2623, %v2550
        %2626 = vrot.lane.b32.xlu0 %v2624, 126
        %v2627 = vpop.permute.xlu0 %2626
        %v2629 = vadd.f32 %v2597, %v2627
        %s2630 = sld [smem:[#allocation9 + $0x4a]]
        %v2631 = vstv %s2630
        %v2632 = vmul.f32 %v2631, %v2550
        %2634 = vrot.lane.b32.xlu0 %v2632, 126
        %v2635 = vpop.permute.xlu0 %2634
        %v2637 = vadd.f32 %v2605, %v2635
        %s2638 = sld [smem:[#allocation9 + $0x6e]]
        %v2639 = vstv %s2638
        %v2640 = vmul.f32 %v2639, %v2550
        %2642 = vrot.lane.b32.xlu0 %v2640, 126
        %v2643 = vpop.permute.xlu0 %2642
        %v2645 = vadd.f32 %v2613, %v2643
        %s2646 = sld [smem:[#allocation9 + $0x3]]
        %v2647 = vstv %s2646
        %v2648 = vmul.f32 %v2647, %v2550
        %v2649 = vmul.f32 %v2647, %v2551
        %v2652 = vrot.slane %v2648, 1
        %v2653 = vrot.slane %v2649, 1
        %v2654 = vsel %vm606, %v2652, %v2653
        %v2656 = vadd.f32 %v2621, %v2654
        %s2657 = sld [smem:[#allocation9 + $0x27]]
        %v2658 = vstv %s2657
        %v2659 = vmul.f32 %v2658, %v2550
        %v2660 = vmul.f32 %v2658, %v2551
        %v2663 = vrot.slane %v2659, 1
        %v2664 = vrot.slane %v2660, 1
        %v2665 = vsel %vm606, %v2663, %v2664
        %v2667 = vadd.f32 %v2629, %v2665
        %s2668 = sld [smem:[#allocation9 + $0x4b]]
        %v2669 = vstv %s2668
        %v2670 = vmul.f32 %v2669, %v2550
        %v2671 = vmul.f32 %v2669, %v2551
        %v2674 = vrot.slane %v2670, 1
        %v2675 = vrot.slane %v2671, 1
        %v2676 = vsel %vm606, %v2674, %v2675
        %v2678 = vadd.f32 %v2637, %v2676
        %s2679 = sld [smem:[#allocation9 + $0x6f]]
        %v2680 = vstv %s2679
        %v2681 = vmul.f32 %v2680, %v2550
        %v2682 = vmul.f32 %v2680, %v2551
        %v2685 = vrot.slane %v2681, 1
        %v2686 = vrot.slane %v2682, 1
        %v2687 = vsel %vm606, %v2685, %v2686
        %v2689 = vadd.f32 %v2645, %v2687
        %s2690 = sld [smem:[#allocation9 + $0x4]]
        %v2691 = vstv %s2690
        %v2692 = vmul.f32 %v2691, %v2550
        %v2693 = vmul.f32 %v2691, %v2551
        %v2696 = vrot.slane %v2692, 1
        %v2697 = vrot.slane %v2693, 1
        %v2698 = vsel %vm606, %v2696, %v2697
        %2699 = vrot.lane.b32.xlu0 %v2698, 127
        %v2700 = vpop.permute.xlu0 %2699
        %v2702 = vadd.f32 %v2656, %v2700
        %s2703 = sld [smem:[#allocation9 + $0x28]]
        %v2704 = vstv %s2703
        %v2705 = vmul.f32 %v2704, %v2550
        %v2706 = vmul.f32 %v2704, %v2551
        %v2709 = vrot.slane %v2705, 1
        %v2710 = vrot.slane %v2706, 1
        %v2711 = vsel %vm606, %v2709, %v2710
        %2712 = vrot.lane.b32.xlu0 %v2711, 127
        %v2713 = vpop.permute.xlu0 %2712
        %v2715 = vadd.f32 %v2667, %v2713
        %s2716 = sld [smem:[#allocation9 + $0x4c]]
        %v2717 = vstv %s2716
        %v2718 = vmul.f32 %v2717, %v2550
        %v2719 = vmul.f32 %v2717, %v2551
        %v2722 = vrot.slane %v2718, 1
        %v2723 = vrot.slane %v2719, 1
        %v2724 = vsel %vm606, %v2722, %v2723
        %2725 = vrot.lane.b32.xlu0 %v2724, 127
        %v2726 = vpop.permute.xlu0 %2725
        %v2728 = vadd.f32 %v2678, %v2726
        %s2729 = sld [smem:[#allocation9 + $0x70]]
        %v2730 = vstv %s2729
        %v2731 = vmul.f32 %v2730, %v2550
        %v2732 = vmul.f32 %v2730, %v2551
        %v2735 = vrot.slane %v2731, 1
        %v2736 = vrot.slane %v2732, 1
        %v2737 = vsel %vm606, %v2735, %v2736
        %2738 = vrot.lane.b32.xlu0 %v2737, 127
        %v2739 = vpop.permute.xlu0 %2738
        %v2741 = vadd.f32 %v2689, %v2739
        %s2742 = sld [smem:[#allocation9 + $0x5]]
        %v2743 = vstv %s2742
        %v2744 = vmul.f32 %v2743, %v2550
        %v2745 = vmul.f32 %v2743, %v2551
        %v2748 = vrot.slane %v2744, 1
        %v2749 = vrot.slane %v2745, 1
        %v2750 = vsel %vm606, %v2748, %v2749
        %2751 = vrot.lane.b32.xlu0 %v2750, 126
        %v2752 = vpop.permute.xlu0 %2751
        %v2754 = vadd.f32 %v2702, %v2752
        %s2755 = sld [smem:[#allocation9 + $0x29]]
        %v2756 = vstv %s2755
        %v2757 = vmul.f32 %v2756, %v2550
        %v2758 = vmul.f32 %v2756, %v2551
        %v2761 = vrot.slane %v2757, 1
        %v2762 = vrot.slane %v2758, 1
        %v2763 = vsel %vm606, %v2761, %v2762
        %2764 = vrot.lane.b32.xlu0 %v2763, 126
        %v2765 = vpop.permute.xlu0 %2764
        %v2767 = vadd.f32 %v2715, %v2765
        %s2768 = sld [smem:[#allocation9 + $0x4d]]
        %v2769 = vstv %s2768
        %v2770 = vmul.f32 %v2769, %v2550
        %v2771 = vmul.f32 %v2769, %v2551
        %v2774 = vrot.slane %v2770, 1
        %v2775 = vrot.slane %v2771, 1
        %v2776 = vsel %vm606, %v2774, %v2775
        %2777 = vrot.lane.b32.xlu0 %v2776, 126
        %v2778 = vpop.permute.xlu0 %2777
        %v2780 = vadd.f32 %v2728, %v2778
        %s2781 = sld [smem:[#allocation9 + $0x71]]
        %v2782 = vstv %s2781
        %v2783 = vmul.f32 %v2782, %v2550
        %v2784 = vmul.f32 %v2782, %v2551
        %v2787 = vrot.slane %v2783, 1
        %v2788 = vrot.slane %v2784, 1
        %v2789 = vsel %vm606, %v2787, %v2788
        %2790 = vrot.lane.b32.xlu0 %v2789, 126
        %v2791 = vpop.permute.xlu0 %2790
        %v2793 = vadd.f32 %v2741, %v2791
        %s2794 = sld [smem:[#allocation9 + $0x6]]
        %v2795 = vstv %s2794
        %v2796 = vmul.f32 %v2795, %v2550
        %v2797 = vmul.f32 %v2795, %v2551
        %v2800 = vrot.slane %v2796, 2
        %v2801 = vrot.slane %v2797, 2
        %v2802 = vsel %vm795, %v2800, %v2801
        %v2804 = vadd.f32 %v2754, %v2802
        %s2805 = sld [smem:[#allocation9 + $0x2a]]
        %v2806 = vstv %s2805
        %v2807 = vmul.f32 %v2806, %v2550
        %v2808 = vmul.f32 %v2806, %v2551
        %v2811 = vrot.slane %v2807, 2
        %v2812 = vrot.slane %v2808, 2
        %v2813 = vsel %vm795, %v2811, %v2812
        %v2815 = vadd.f32 %v2767, %v2813
        %s2816 = sld [smem:[#allocation9 + $0x4e]]
        %v2817 = vstv %s2816
        %v2818 = vmul.f32 %v2817, %v2550
        %v2819 = vmul.f32 %v2817, %v2551
        %v2822 = vrot.slane %v2818, 2
        %v2823 = vrot.slane %v2819, 2
        %v2824 = vsel %vm795, %v2822, %v2823
        %v2826 = vadd.f32 %v2780, %v2824
        %s2827 = sld [smem:[#allocation9 + $0x72]]
        %v2828 = vstv %s2827
        %v2829 = vmul.f32 %v2828, %v2550
        %v2830 = vmul.f32 %v2828, %v2551
        %v2833 = vrot.slane %v2829, 2
        %v2834 = vrot.slane %v2830, 2
        %v2835 = vsel %vm795, %v2833, %v2834
        %v2837 = vadd.f32 %v2793, %v2835
        %s2838 = sld [smem:[#allocation9 + $0x7]]
        %v2839 = vstv %s2838
        %v2840 = vmul.f32 %v2839, %v2550
        %v2841 = vmul.f32 %v2839, %v2551
        %v2844 = vrot.slane %v2840, 2
        %v2845 = vrot.slane %v2841, 2
        %v2846 = vsel %vm795, %v2844, %v2845
        %2847 = vrot.lane.b32.xlu0 %v2846, 127
        %v2848 = vpop.permute.xlu0 %2847
        %v2850 = vadd.f32 %v2804, %v2848
        %s2851 = sld [smem:[#allocation9 + $0x2b]]
        %v2852 = vstv %s2851
        %v2853 = vmul.f32 %v2852, %v2550
        %v2854 = vmul.f32 %v2852, %v2551
        %v2857 = vrot.slane %v2853, 2
        %v2858 = vrot.slane %v2854, 2
        %v2859 = vsel %vm795, %v2857, %v2858
        %2860 = vrot.lane.b32.xlu0 %v2859, 127
        %v2861 = vpop.permute.xlu0 %2860
        %v2863 = vadd.f32 %v2815, %v2861
        %s2864 = sld [smem:[#allocation9 + $0x4f]]
        %v2865 = vstv %s2864
        %v2866 = vmul.f32 %v2865, %v2550
        %v2867 = vmul.f32 %v2865, %v2551
        %v2870 = vrot.slane %v2866, 2
        %v2871 = vrot.slane %v2867, 2
        %v2872 = vsel %vm795, %v2870, %v2871
        %2873 = vrot.lane.b32.xlu0 %v2872, 127
        %v2874 = vpop.permute.xlu0 %2873
        %v2876 = vadd.f32 %v2826, %v2874
        %s2877 = sld [smem:[#allocation9 + $0x73]]
        %v2878 = vstv %s2877
        %v2879 = vmul.f32 %v2878, %v2550
        %v2880 = vmul.f32 %v2878, %v2551
        %v2883 = vrot.slane %v2879, 2
        %v2884 = vrot.slane %v2880, 2
        %v2885 = vsel %vm795, %v2883, %v2884
        %2886 = vrot.lane.b32.xlu0 %v2885, 127
        %v2887 = vpop.permute.xlu0 %2886
        %v2889 = vadd.f32 %v2837, %v2887
        %s2890 = sld [smem:[#allocation9 + $0x8]]
        %v2891 = vstv %s2890
        %v2892 = vmul.f32 %v2891, %v2550
        %v2893 = vmul.f32 %v2891, %v2551
        %v2896 = vrot.slane %v2892, 2
        %v2897 = vrot.slane %v2893, 2
        %v2898 = vsel %vm795, %v2896, %v2897
        %2899 = vrot.lane.b32.xlu0 %v2898, 126
        %v2900 = vpop.permute.xlu0 %2899
        %v2902 = vadd.f32 %v2850, %v2900
        %s2903 = sld [smem:[#allocation9 + $0x2c]]
        %v2904 = vstv %s2903
        %v2905 = vmul.f32 %v2904, %v2550
        %v2906 = vmul.f32 %v2904, %v2551
        %v2909 = vrot.slane %v2905, 2
        %v2910 = vrot.slane %v2906, 2
        %v2911 = vsel %vm795, %v2909, %v2910
        %2912 = vrot.lane.b32.xlu0 %v2911, 126
        %v2913 = vpop.permute.xlu0 %2912
        %v2915 = vadd.f32 %v2863, %v2913
        %s2916 = sld [smem:[#allocation9 + $0x50]]
        %v2917 = vstv %s2916
        %v2918 = vmul.f32 %v2917, %v2550
        %v2919 = vmul.f32 %v2917, %v2551
        %v2922 = vrot.slane %v2918, 2
        %v2923 = vrot.slane %v2919, 2
        %v2924 = vsel %vm795, %v2922, %v2923
        %2925 = vrot.lane.b32.xlu0 %v2924, 126
        %v2926 = vpop.permute.xlu0 %2925
        %v2928 = vadd.f32 %v2876, %v2926
        %s2929 = sld [smem:[#allocation9 + $0x74]]
        %v2930 = vstv %s2929
        %v2931 = vmul.f32 %v2930, %v2550
        %v2932 = vmul.f32 %v2930, %v2551
        %v2935 = vrot.slane %v2931, 2
        %v2936 = vrot.slane %v2932, 2
        %v2937 = vsel %vm795, %v2935, %v2936
        %2938 = vrot.lane.b32.xlu0 %v2937, 126
        %v2939 = vpop.permute.xlu0 %2938
        %v2941 = vadd.f32 %v2889, %v2939
        %s2942 = sld [smem:[#allocation9 + $0x9]]
        %v2943 = vstv %s2942
        %v2944 = vmul.f32 %v2943, %v2552
        %v2945 = vadd.f32 %v2902, %v2944
        %s2946 = sld [smem:[#allocation9 + $0x2d]]
        %v2947 = vstv %s2946
        %v2948 = vmul.f32 %v2947, %v2552
        %v2949 = vadd.f32 %v2915, %v2948
        %s2950 = sld [smem:[#allocation9 + $0x51]]
        %v2951 = vstv %s2950
        %v2952 = vmul.f32 %v2951, %v2552
        %v2953 = vadd.f32 %v2928, %v2952
        %s2954 = sld [smem:[#allocation9 + $0x75]]
        %v2955 = vstv %s2954
        %v2956 = vmul.f32 %v2955, %v2552
        %v2957 = vadd.f32 %v2941, %v2956
        %s2958 = sld [smem:[#allocation9 + $0xa]]
        %v2959 = vstv %s2958
        %v2960 = vmul.f32 %v2959, %v2552
        %2962 = vrot.lane.b32.xlu0 %v2960, 127
        %v2963 = vpop.permute.xlu0 %2962
        %v2965 = vadd.f32 %v2945, %v2963
        %s2966 = sld [smem:[#allocation9 + $0x2e]]
        %v2967 = vstv %s2966
        %v2968 = vmul.f32 %v2967, %v2552
        %2970 = vrot.lane.b32.xlu0 %v2968, 127
        %v2971 = vpop.permute.xlu0 %2970
        %v2973 = vadd.f32 %v2949, %v2971
        %s2974 = sld [smem:[#allocation9 + $0x52]]
        %v2975 = vstv %s2974
        %v2976 = vmul.f32 %v2975, %v2552
        %2978 = vrot.lane.b32.xlu0 %v2976, 127
        %v2979 = vpop.permute.xlu0 %2978
        %v2981 = vadd.f32 %v2953, %v2979
        %s2982 = sld [smem:[#allocation9 + $0x76]]
        %v2983 = vstv %s2982
        %v2984 = vmul.f32 %v2983, %v2552
        %2986 = vrot.lane.b32.xlu0 %v2984, 127
        %v2987 = vpop.permute.xlu0 %2986
        %v2989 = vadd.f32 %v2957, %v2987
        %s2990 = sld [smem:[#allocation9 + $0xb]]
        %v2991 = vstv %s2990
        %v2992 = vmul.f32 %v2991, %v2552
        %2994 = vrot.lane.b32.xlu0 %v2992, 126
        %v2995 = vpop.permute.xlu0 %2994
        %v2997 = vadd.f32 %v2965, %v2995
        %s2998 = sld [smem:[#allocation9 + $0x2f]]
        %v2999 = vstv %s2998
        %v3000 = vmul.f32 %v2999, %v2552
        %3002 = vrot.lane.b32.xlu0 %v3000, 126
        %v3003 = vpop.permute.xlu0 %3002
        %v3005 = vadd.f32 %v2973, %v3003
        %s3006 = sld [smem:[#allocation9 + $0x53]]
        %v3007 = vstv %s3006
        %v3008 = vmul.f32 %v3007, %v2552
        %3010 = vrot.lane.b32.xlu0 %v3008, 126
        %v3011 = vpop.permute.xlu0 %3010
        %v3013 = vadd.f32 %v2981, %v3011
        %s3014 = sld [smem:[#allocation9 + $0x77]]
        %v3015 = vstv %s3014
        %v3016 = vmul.f32 %v3015, %v2552
        %3018 = vrot.lane.b32.xlu0 %v3016, 126
        %v3019 = vpop.permute.xlu0 %3018
        %v3021 = vadd.f32 %v2989, %v3019
        %s3022 = sld [smem:[#allocation9 + $0xc]]
        %v3023 = vstv %s3022
        %v3024 = vmul.f32 %v3023, %v2552
        %v3025 = vmul.f32 %v3023, %v2553
        %v3028 = vrot.slane %v3024, 1
        %v3029 = vrot.slane %v3025, 1
        %v3030 = vsel %vm606, %v3028, %v3029
        %v3032 = vadd.f32 %v2997, %v3030
        %s3033 = sld [smem:[#allocation9 + $0x30]]
        %v3034 = vstv %s3033
        %v3035 = vmul.f32 %v3034, %v2552
        %v3036 = vmul.f32 %v3034, %v2553
        %v3039 = vrot.slane %v3035, 1
        %v3040 = vrot.slane %v3036, 1
        %v3041 = vsel %vm606, %v3039, %v3040
        %v3043 = vadd.f32 %v3005, %v3041
        %s3044 = sld [smem:[#allocation9 + $0x54]]
        %v3045 = vstv %s3044
        %v3046 = vmul.f32 %v3045, %v2552
        %v3047 = vmul.f32 %v3045, %v2553
        %v3050 = vrot.slane %v3046, 1
        %v3051 = vrot.slane %v3047, 1
        %v3052 = vsel %vm606, %v3050, %v3051
        %v3054 = vadd.f32 %v3013, %v3052
        %s3055 = sld [smem:[#allocation9 + $0x78]]
        %v3056 = vstv %s3055
        %v3057 = vmul.f32 %v3056, %v2552
        %v3058 = vmul.f32 %v3056, %v2553
        %v3061 = vrot.slane %v3057, 1
        %v3062 = vrot.slane %v3058, 1
        %v3063 = vsel %vm606, %v3061, %v3062
        %v3065 = vadd.f32 %v3021, %v3063
        %s3066 = sld [smem:[#allocation9 + $0xd]]
        %v3067 = vstv %s3066
        %v3068 = vmul.f32 %v3067, %v2552
        %v3069 = vmul.f32 %v3067, %v2553
        %v3072 = vrot.slane %v3068, 1
        %v3073 = vrot.slane %v3069, 1
        %v3074 = vsel %vm606, %v3072, %v3073
        %3075 = vrot.lane.b32.xlu0 %v3074, 127
        %v3076 = vpop.permute.xlu0 %3075
        %v3078 = vadd.f32 %v3032, %v3076
        %s3079 = sld [smem:[#allocation9 + $0x31]]
        %v3080 = vstv %s3079
        %v3081 = vmul.f32 %v3080, %v2552
        %v3082 = vmul.f32 %v3080, %v2553
        %v3085 = vrot.slane %v3081, 1
        %v3086 = vrot.slane %v3082, 1
        %v3087 = vsel %vm606, %v3085, %v3086
        %3088 = vrot.lane.b32.xlu0 %v3087, 127
        %v3089 = vpop.permute.xlu0 %3088
        %v3091 = vadd.f32 %v3043, %v3089
        %s3092 = sld [smem:[#allocation9 + $0x55]]
        %v3093 = vstv %s3092
        %v3094 = vmul.f32 %v3093, %v2552
        %v3095 = vmul.f32 %v3093, %v2553
        %v3098 = vrot.slane %v3094, 1
        %v3099 = vrot.slane %v3095, 1
        %v3100 = vsel %vm606, %v3098, %v3099
        %3101 = vrot.lane.b32.xlu0 %v3100, 127
        %v3102 = vpop.permute.xlu0 %3101
        %v3104 = vadd.f32 %v3054, %v3102
        %s3105 = sld [smem:[#allocation9 + $0x79]]
        %v3106 = vstv %s3105
        %v3107 = vmul.f32 %v3106, %v2552
        %v3108 = vmul.f32 %v3106, %v2553
        %v3111 = vrot.slane %v3107, 1
        %v3112 = vrot.slane %v3108, 1
        %v3113 = vsel %vm606, %v3111, %v3112
        %3114 = vrot.lane.b32.xlu0 %v3113, 127
        %v3115 = vpop.permute.xlu0 %3114
        %v3117 = vadd.f32 %v3065, %v3115
        %s3118 = sld [smem:[#allocation9 + $0xe]]
        %v3119 = vstv %s3118
        %v3120 = vmul.f32 %v3119, %v2552
        %v3121 = vmul.f32 %v3119, %v2553
        %v3124 = vrot.slane %v3120, 1
        %v3125 = vrot.slane %v3121, 1
        %v3126 = vsel %vm606, %v3124, %v3125
        %3127 = vrot.lane.b32.xlu0 %v3126, 126
        %v3128 = vpop.permute.xlu0 %3127
        %v3130 = vadd.f32 %v3078, %v3128
        %s3131 = sld [smem:[#allocation9 + $0x32]]
        %v3132 = vstv %s3131
        %v3133 = vmul.f32 %v3132, %v2552
        %v3134 = vmul.f32 %v3132, %v2553
        %v3137 = vrot.slane %v3133, 1
        %v3138 = vrot.slane %v3134, 1
        %v3139 = vsel %vm606, %v3137, %v3138
        %3140 = vrot.lane.b32.xlu0 %v3139, 126
        %v3141 = vpop.permute.xlu0 %3140
        %v3143 = vadd.f32 %v3091, %v3141
        %s3144 = sld [smem:[#allocation9 + $0x56]]
        %v3145 = vstv %s3144
        %v3146 = vmul.f32 %v3145, %v2552
        %v3147 = vmul.f32 %v3145, %v2553
        %v3150 = vrot.slane %v3146, 1
        %v3151 = vrot.slane %v3147, 1
        %v3152 = vsel %vm606, %v3150, %v3151
        %3153 = vrot.lane.b32.xlu0 %v3152, 126
        %v3154 = vpop.permute.xlu0 %3153
        %v3156 = vadd.f32 %v3104, %v3154
        %s3157 = sld [smem:[#allocation9 + $0x7a]]
        %v3158 = vstv %s3157
        %v3159 = vmul.f32 %v3158, %v2552
        %v3160 = vmul.f32 %v3158, %v2553
        %v3163 = vrot.slane %v3159, 1
        %v3164 = vrot.slane %v3160, 1
        %v3165 = vsel %vm606, %v3163, %v3164
        %3166 = vrot.lane.b32.xlu0 %v3165, 126
        %v3167 = vpop.permute.xlu0 %3166
        %v3169 = vadd.f32 %v3117, %v3167
        %s3170 = sld [smem:[#allocation9 + $0xf]]
        %v3171 = vstv %s3170
        %v3172 = vmul.f32 %v3171, %v2552
        %v3173 = vmul.f32 %v3171, %v2553
        %v3176 = vrot.slane %v3172, 2
        %v3177 = vrot.slane %v3173, 2
        %v3178 = vsel %vm795, %v3176, %v3177
        %v3180 = vadd.f32 %v3130, %v3178
        %s3181 = sld [smem:[#allocation9 + $0x33]]
        %v3182 = vstv %s3181
        %v3183 = vmul.f32 %v3182, %v2552
        %v3184 = vmul.f32 %v3182, %v2553
        %v3187 = vrot.slane %v3183, 2
        %v3188 = vrot.slane %v3184, 2
        %v3189 = vsel %vm795, %v3187, %v3188
        %v3191 = vadd.f32 %v3143, %v3189
        %s3192 = sld [smem:[#allocation9 + $0x57]]
        %v3193 = vstv %s3192
        %v3194 = vmul.f32 %v3193, %v2552
        %v3195 = vmul.f32 %v3193, %v2553
        %v3198 = vrot.slane %v3194, 2
        %v3199 = vrot.slane %v3195, 2
        %v3200 = vsel %vm795, %v3198, %v3199
        %v3202 = vadd.f32 %v3156, %v3200
        %s3203 = sld [smem:[#allocation9 + $0x7b]]
        %v3204 = vstv %s3203
        %v3205 = vmul.f32 %v3204, %v2552
        %v3206 = vmul.f32 %v3204, %v2553
        %v3209 = vrot.slane %v3205, 2
        %v3210 = vrot.slane %v3206, 2
        %v3211 = vsel %vm795, %v3209, %v3210
        %v3213 = vadd.f32 %v3169, %v3211
        %s3214 = sld [smem:[#allocation9 + $0x10]]
        %v3215 = vstv %s3214
        %v3216 = vmul.f32 %v3215, %v2552
        %v3217 = vmul.f32 %v3215, %v2553
        %v3220 = vrot.slane %v3216, 2
        %v3221 = vrot.slane %v3217, 2
        %v3222 = vsel %vm795, %v3220, %v3221
        %3223 = vrot.lane.b32.xlu0 %v3222, 127
        %v3224 = vpop.permute.xlu0 %3223
        %v3226 = vadd.f32 %v3180, %v3224
        %s3227 = sld [smem:[#allocation9 + $0x34]]
        %v3228 = vstv %s3227
        %v3229 = vmul.f32 %v3228, %v2552
        %v3230 = vmul.f32 %v3228, %v2553
        %v3233 = vrot.slane %v3229, 2
        %v3234 = vrot.slane %v3230, 2
        %v3235 = vsel %vm795, %v3233, %v3234
        %3236 = vrot.lane.b32.xlu0 %v3235, 127
        %v3237 = vpop.permute.xlu0 %3236
        %v3239 = vadd.f32 %v3191, %v3237
        %s3240 = sld [smem:[#allocation9 + $0x58]]
        %v3241 = vstv %s3240
        %v3242 = vmul.f32 %v3241, %v2552
        %v3243 = vmul.f32 %v3241, %v2553
        %v3246 = vrot.slane %v3242, 2
        %v3247 = vrot.slane %v3243, 2
        %v3248 = vsel %vm795, %v3246, %v3247
        %3249 = vrot.lane.b32.xlu0 %v3248, 127
        %v3250 = vpop.permute.xlu0 %3249
        %v3252 = vadd.f32 %v3202, %v3250
        %s3253 = sld [smem:[#allocation9 + $0x7c]]
        %v3254 = vstv %s3253
        %v3255 = vmul.f32 %v3254, %v2552
        %v3256 = vmul.f32 %v3254, %v2553
        %v3259 = vrot.slane %v3255, 2
        %v3260 = vrot.slane %v3256, 2
        %v3261 = vsel %vm795, %v3259, %v3260
        %3262 = vrot.lane.b32.xlu0 %v3261, 127
        %v3263 = vpop.permute.xlu0 %3262
        %v3265 = vadd.f32 %v3213, %v3263
        %s3266 = sld [smem:[#allocation9 + $0x11]]
        %v3267 = vstv %s3266
        %v3268 = vmul.f32 %v3267, %v2552
        %v3269 = vmul.f32 %v3267, %v2553
        %v3272 = vrot.slane %v3268, 2
        %v3273 = vrot.slane %v3269, 2
        %v3274 = vsel %vm795, %v3272, %v3273
        %3275 = vrot.lane.b32.xlu0 %v3274, 126
        %v3276 = vpop.permute.xlu0 %3275
        %v3278 = vadd.f32 %v3226, %v3276
        %s3279 = sld [smem:[#allocation9 + $0x35]]
        %v3280 = vstv %s3279
        %v3281 = vmul.f32 %v3280, %v2552
        %v3282 = vmul.f32 %v3280, %v2553
        %v3285 = vrot.slane %v3281, 2
        %v3286 = vrot.slane %v3282, 2
        %v3287 = vsel %vm795, %v3285, %v3286
        %3288 = vrot.lane.b32.xlu0 %v3287, 126
        %v3289 = vpop.permute.xlu0 %3288
        %v3291 = vadd.f32 %v3239, %v3289
        %s3292 = sld [smem:[#allocation9 + $0x59]]
        %v3293 = vstv %s3292
        %v3294 = vmul.f32 %v3293, %v2552
        %v3295 = vmul.f32 %v3293, %v2553
        %v3298 = vrot.slane %v3294, 2
        %v3299 = vrot.slane %v3295, 2
        %v3300 = vsel %vm795, %v3298, %v3299
        %3301 = vrot.lane.b32.xlu0 %v3300, 126
        %v3302 = vpop.permute.xlu0 %3301
        %v3304 = vadd.f32 %v3252, %v3302
        %s3305 = sld [smem:[#allocation9 + $0x7d]]
        %v3306 = vstv %s3305
        %v3307 = vmul.f32 %v3306, %v2552
        %v3308 = vmul.f32 %v3306, %v2553
        %v3311 = vrot.slane %v3307, 2
        %v3312 = vrot.slane %v3308, 2
        %v3313 = vsel %vm795, %v3311, %v3312
        %3314 = vrot.lane.b32.xlu0 %v3313, 126
        %v3315 = vpop.permute.xlu0 %3314
        %v3317 = vadd.f32 %v3265, %v3315
        %s3318 = sld [smem:[#allocation9 + $0x12]]
        %v3319 = vstv %s3318
        %v3320 = vmul.f32 %v3319, %v2554
        %v3321 = vadd.f32 %v3278, %v3320
        %s3322 = sld [smem:[#allocation9 + $0x36]]
        %v3323 = vstv %s3322
        %v3324 = vmul.f32 %v3323, %v2554
        %v3325 = vadd.f32 %v3291, %v3324
        %s3326 = sld [smem:[#allocation9 + $0x5a]]
        %v3327 = vstv %s3326
        %v3328 = vmul.f32 %v3327, %v2554
        %v3329 = vadd.f32 %v3304, %v3328
        %s3330 = sld [smem:[#allocation9 + $0x7e]]
        %v3331 = vstv %s3330
        %v3332 = vmul.f32 %v3331, %v2554
        %v3333 = vadd.f32 %v3317, %v3332
        %s3334 = sld [smem:[#allocation9 + $0x13]]
        %v3335 = vstv %s3334
        %v3336 = vmul.f32 %v3335, %v2554
        %3338 = vrot.lane.b32.xlu0 %v3336, 127
        %v3339 = vpop.permute.xlu0 %3338
        %v3341 = vadd.f32 %v3321, %v3339
        %s3342 = sld [smem:[#allocation9 + $0x37]]
        %v3343 = vstv %s3342
        %v3344 = vmul.f32 %v3343, %v2554
        %3346 = vrot.lane.b32.xlu0 %v3344, 127
        %v3347 = vpop.permute.xlu0 %3346
        %v3349 = vadd.f32 %v3325, %v3347
        %s3350 = sld [smem:[#allocation9 + $0x5b]]
        %v3351 = vstv %s3350
        %v3352 = vmul.f32 %v3351, %v2554
        %3354 = vrot.lane.b32.xlu0 %v3352, 127
        %v3355 = vpop.permute.xlu0 %3354
        %v3357 = vadd.f32 %v3329, %v3355
        %s3358 = sld [smem:[#allocation9 + $0x7f]]
        %v3359 = vstv %s3358
        %v3360 = vmul.f32 %v3359, %v2554
        %3362 = vrot.lane.b32.xlu0 %v3360, 127
        %v3363 = vpop.permute.xlu0 %3362
        %v3365 = vadd.f32 %v3333, %v3363
        %s3366 = sld [smem:[#allocation9 + $0x14]]
        %v3367 = vstv %s3366
        %v3368 = vmul.f32 %v3367, %v2554
        %3370 = vrot.lane.b32.xlu0 %v3368, 126
        %v3371 = vpop.permute.xlu0 %3370
        %v3373 = vadd.f32 %v3341, %v3371
        %s3374 = sld [smem:[#allocation9 + $0x38]]
        %v3375 = vstv %s3374
        %v3376 = vmul.f32 %v3375, %v2554
        %3378 = vrot.lane.b32.xlu0 %v3376, 126
        %v3379 = vpop.permute.xlu0 %3378
        %v3381 = vadd.f32 %v3349, %v3379
        %s3382 = sld [smem:[#allocation9 + $0x5c]]
        %v3383 = vstv %s3382
        %v3384 = vmul.f32 %v3383, %v2554
        %3386 = vrot.lane.b32.xlu0 %v3384, 126
        %v3387 = vpop.permute.xlu0 %3386
        %v3389 = vadd.f32 %v3357, %v3387
        %s3390 = sld [smem:[#allocation9 + $0x80]]
        %v3391 = vstv %s3390
        %v3392 = vmul.f32 %v3391, %v2554
        %3394 = vrot.lane.b32.xlu0 %v3392, 126
        %v3395 = vpop.permute.xlu0 %3394
        %v3397 = vadd.f32 %v3365, %v3395
        %s3398 = sld [smem:[#allocation9 + $0x15]]
        %v3399 = vstv %s3398
        %v3400 = vmul.f32 %v3399, %v2554
        %v3401 = vmul.f32 %v3399, %v2555
        %v3404 = vrot.slane %v3400, 1
        %v3405 = vrot.slane %v3401, 1
        %v3406 = vsel %vm606, %v3404, %v3405
        %v3408 = vadd.f32 %v3373, %v3406
        %s3409 = sld [smem:[#allocation9 + $0x39]]
        %v3410 = vstv %s3409
        %v3411 = vmul.f32 %v3410, %v2554
        %v3412 = vmul.f32 %v3410, %v2555
        %v3415 = vrot.slane %v3411, 1
        %v3416 = vrot.slane %v3412, 1
        %v3417 = vsel %vm606, %v3415, %v3416
        %v3419 = vadd.f32 %v3381, %v3417
        %s3420 = sld [smem:[#allocation9 + $0x5d]]
        %v3421 = vstv %s3420
        %v3422 = vmul.f32 %v3421, %v2554
        %v3423 = vmul.f32 %v3421, %v2555
        %v3426 = vrot.slane %v3422, 1
        %v3427 = vrot.slane %v3423, 1
        %v3428 = vsel %vm606, %v3426, %v3427
        %v3430 = vadd.f32 %v3389, %v3428
        %s3431 = sld [smem:[#allocation9 + $0x81]]
        %v3432 = vstv %s3431
        %v3433 = vmul.f32 %v3432, %v2554
        %v3434 = vmul.f32 %v3432, %v2555
        %v3437 = vrot.slane %v3433, 1
        %v3438 = vrot.slane %v3434, 1
        %v3439 = vsel %vm606, %v3437, %v3438
        %v3441 = vadd.f32 %v3397, %v3439
        %s3442 = sld [smem:[#allocation9 + $0x16]]
        %v3443 = vstv %s3442
        %v3444 = vmul.f32 %v3443, %v2554
        %v3445 = vmul.f32 %v3443, %v2555
        %v3448 = vrot.slane %v3444, 1
        %v3449 = vrot.slane %v3445, 1
        %v3450 = vsel %vm606, %v3448, %v3449
        %3451 = vrot.lane.b32.xlu0 %v3450, 127
        %v3452 = vpop.permute.xlu0 %3451
        %v3454 = vadd.f32 %v3408, %v3452
        %s3455 = sld [smem:[#allocation9 + $0x3a]]
        %v3456 = vstv %s3455
        %v3457 = vmul.f32 %v3456, %v2554
        %v3458 = vmul.f32 %v3456, %v2555
        %v3461 = vrot.slane %v3457, 1
        %v3462 = vrot.slane %v3458, 1
        %v3463 = vsel %vm606, %v3461, %v3462
        %3464 = vrot.lane.b32.xlu0 %v3463, 127
        %v3465 = vpop.permute.xlu0 %3464
        %v3467 = vadd.f32 %v3419, %v3465
        %s3468 = sld [smem:[#allocation9 + $0x5e]]
        %v3469 = vstv %s3468
        %v3470 = vmul.f32 %v3469, %v2554
        %v3471 = vmul.f32 %v3469, %v2555
        %v3474 = vrot.slane %v3470, 1
        %v3475 = vrot.slane %v3471, 1
        %v3476 = vsel %vm606, %v3474, %v3475
        %3477 = vrot.lane.b32.xlu0 %v3476, 127
        %v3478 = vpop.permute.xlu0 %3477
        %v3480 = vadd.f32 %v3430, %v3478
        %s3481 = sld [smem:[#allocation9 + $0x82]]
        %v3482 = vstv %s3481
        %v3483 = vmul.f32 %v3482, %v2554
        %v3484 = vmul.f32 %v3482, %v2555
        %v3487 = vrot.slane %v3483, 1
        %v3488 = vrot.slane %v3484, 1
        %v3489 = vsel %vm606, %v3487, %v3488
        %3490 = vrot.lane.b32.xlu0 %v3489, 127
        %v3491 = vpop.permute.xlu0 %3490
        %v3493 = vadd.f32 %v3441, %v3491
        %s3494 = sld [smem:[#allocation9 + $0x17]]
        %v3495 = vstv %s3494
        %v3496 = vmul.f32 %v3495, %v2554
        %v3497 = vmul.f32 %v3495, %v2555
        %v3500 = vrot.slane %v3496, 1
        %v3501 = vrot.slane %v3497, 1
        %v3502 = vsel %vm606, %v3500, %v3501
        %3503 = vrot.lane.b32.xlu0 %v3502, 126
        %v3504 = vpop.permute.xlu0 %3503
        %v3506 = vadd.f32 %v3454, %v3504
        %s3507 = sld [smem:[#allocation9 + $0x3b]]
        %v3508 = vstv %s3507
        %v3509 = vmul.f32 %v3508, %v2554
        %v3510 = vmul.f32 %v3508, %v2555
        %v3513 = vrot.slane %v3509, 1
        %v3514 = vrot.slane %v3510, 1
        %v3515 = vsel %vm606, %v3513, %v3514
        %3516 = vrot.lane.b32.xlu0 %v3515, 126
        %v3517 = vpop.permute.xlu0 %3516
        %v3519 = vadd.f32 %v3467, %v3517
        %s3520 = sld [smem:[#allocation9 + $0x5f]]
        %v3521 = vstv %s3520
        %v3522 = vmul.f32 %v3521, %v2554
        %v3523 = vmul.f32 %v3521, %v2555
        %v3526 = vrot.slane %v3522, 1
        %v3527 = vrot.slane %v3523, 1
        %v3528 = vsel %vm606, %v3526, %v3527
        %3529 = vrot.lane.b32.xlu0 %v3528, 126
        %v3530 = vpop.permute.xlu0 %3529
        %v3532 = vadd.f32 %v3480, %v3530
        %s3533 = sld [smem:[#allocation9 + $0x83]]
        %v3534 = vstv %s3533
        %v3535 = vmul.f32 %v3534, %v2554
        %v3536 = vmul.f32 %v3534, %v2555
        %v3539 = vrot.slane %v3535, 1
        %v3540 = vrot.slane %v3536, 1
        %v3541 = vsel %vm606, %v3539, %v3540
        %3542 = vrot.lane.b32.xlu0 %v3541, 126
        %v3543 = vpop.permute.xlu0 %3542
        %v3545 = vadd.f32 %v3493, %v3543
        %s3546 = sld [smem:[#allocation9 + $0x18]]
        %v3547 = vstv %s3546
        %v3548 = vmul.f32 %v3547, %v2554
        %v3549 = vmul.f32 %v3547, %v2555
        %v3552 = vrot.slane %v3548, 2
        %v3553 = vrot.slane %v3549, 2
        %v3554 = vsel %vm795, %v3552, %v3553
        %v3556 = vadd.f32 %v3506, %v3554
        %s3557 = sld [smem:[#allocation9 + $0x3c]]
        %v3558 = vstv %s3557
        %v3559 = vmul.f32 %v3558, %v2554
        %v3560 = vmul.f32 %v3558, %v2555
        %v3563 = vrot.slane %v3559, 2
        %v3564 = vrot.slane %v3560, 2
        %v3565 = vsel %vm795, %v3563, %v3564
        %v3567 = vadd.f32 %v3519, %v3565
        %s3568 = sld [smem:[#allocation9 + $0x60]]
        %v3569 = vstv %s3568
        %v3570 = vmul.f32 %v3569, %v2554
        %v3571 = vmul.f32 %v3569, %v2555
        %v3574 = vrot.slane %v3570, 2
        %v3575 = vrot.slane %v3571, 2
        %v3576 = vsel %vm795, %v3574, %v3575
        %v3578 = vadd.f32 %v3532, %v3576
        %s3579 = sld [smem:[#allocation9 + $0x84]]
        %v3580 = vstv %s3579
        %v3581 = vmul.f32 %v3580, %v2554
        %v3582 = vmul.f32 %v3580, %v2555
        %v3585 = vrot.slane %v3581, 2
        %v3586 = vrot.slane %v3582, 2
        %v3587 = vsel %vm795, %v3585, %v3586
        %v3589 = vadd.f32 %v3545, %v3587
        %s3590 = sld [smem:[#allocation9 + $0x19]]
        %v3591 = vstv %s3590
        %v3592 = vmul.f32 %v3591, %v2554
        %v3593 = vmul.f32 %v3591, %v2555
        %v3596 = vrot.slane %v3592, 2
        %v3597 = vrot.slane %v3593, 2
        %v3598 = vsel %vm795, %v3596, %v3597
        %3599 = vrot.lane.b32.xlu0 %v3598, 127
        %v3600 = vpop.permute.xlu0 %3599
        %v3602 = vadd.f32 %v3556, %v3600
        %s3603 = sld [smem:[#allocation9 + $0x3d]]
        %v3604 = vstv %s3603
        %v3605 = vmul.f32 %v3604, %v2554
        %v3606 = vmul.f32 %v3604, %v2555
        %v3609 = vrot.slane %v3605, 2
        %v3610 = vrot.slane %v3606, 2
        %v3611 = vsel %vm795, %v3609, %v3610
        %3612 = vrot.lane.b32.xlu0 %v3611, 127
        %v3613 = vpop.permute.xlu0 %3612
        %v3615 = vadd.f32 %v3567, %v3613
        %s3616 = sld [smem:[#allocation9 + $0x61]]
        %v3617 = vstv %s3616
        %v3618 = vmul.f32 %v3617, %v2554
        %v3619 = vmul.f32 %v3617, %v2555
        %v3622 = vrot.slane %v3618, 2
        %v3623 = vrot.slane %v3619, 2
        %v3624 = vsel %vm795, %v3622, %v3623
        %3625 = vrot.lane.b32.xlu0 %v3624, 127
        %v3626 = vpop.permute.xlu0 %3625
        %v3628 = vadd.f32 %v3578, %v3626
        %s3629 = sld [smem:[#allocation9 + $0x85]]
        %v3630 = vstv %s3629
        %v3631 = vmul.f32 %v3630, %v2554
        %v3632 = vmul.f32 %v3630, %v2555
        %v3635 = vrot.slane %v3631, 2
        %v3636 = vrot.slane %v3632, 2
        %v3637 = vsel %vm795, %v3635, %v3636
        %3638 = vrot.lane.b32.xlu0 %v3637, 127
        %v3639 = vpop.permute.xlu0 %3638
        %v3641 = vadd.f32 %v3589, %v3639
        %s3642 = sld [smem:[#allocation9 + $0x1a]]
        %v3643 = vstv %s3642
        %v3644 = vmul.f32 %v3643, %v2554
        %v3645 = vmul.f32 %v3643, %v2555
        %v3648 = vrot.slane %v3644, 2
        %v3649 = vrot.slane %v3645, 2
        %v3650 = vsel %vm795, %v3648, %v3649
        %3651 = vrot.lane.b32.xlu0 %v3650, 126
        %v3652 = vpop.permute.xlu0 %3651
        %v3654 = vadd.f32 %v3602, %v3652
        %s3655 = sld [smem:[#allocation9 + $0x3e]]
        %v3656 = vstv %s3655
        %v3657 = vmul.f32 %v3656, %v2554
        %v3658 = vmul.f32 %v3656, %v2555
        %v3661 = vrot.slane %v3657, 2
        %v3662 = vrot.slane %v3658, 2
        %v3663 = vsel %vm795, %v3661, %v3662
        %3664 = vrot.lane.b32.xlu0 %v3663, 126
        %v3665 = vpop.permute.xlu0 %3664
        %v3667 = vadd.f32 %v3615, %v3665
        %s3668 = sld [smem:[#allocation9 + $0x62]]
        %v3669 = vstv %s3668
        %v3670 = vmul.f32 %v3669, %v2554
        %v3671 = vmul.f32 %v3669, %v2555
        %v3674 = vrot.slane %v3670, 2
        %v3675 = vrot.slane %v3671, 2
        %v3676 = vsel %vm795, %v3674, %v3675
        %3677 = vrot.lane.b32.xlu0 %v3676, 126
        %v3678 = vpop.permute.xlu0 %3677
        %v3680 = vadd.f32 %v3628, %v3678
        %s3681 = sld [smem:[#allocation9 + $0x86]]
        %v3682 = vstv %s3681
        %v3683 = vmul.f32 %v3682, %v2554
        %v3684 = vmul.f32 %v3682, %v2555
        %v3687 = vrot.slane %v3683, 2
        %v3688 = vrot.slane %v3684, 2
        %v3689 = vsel %vm795, %v3687, %v3688
        %3690 = vrot.lane.b32.xlu0 %v3689, 126
        %v3691 = vpop.permute.xlu0 %3690
        %v3693 = vadd.f32 %v3641, %v3691
        %s3694 = sld [smem:[#allocation9 + $0x1b]]
        %v3695 = vstv %s3694
        %v3696 = vmul.f32 %v3695, %v2556
        %v3697 = vadd.f32 %v3654, %v3696
        %s3698 = sld [smem:[#allocation9 + $0x3f]]
        %v3699 = vstv %s3698
        %v3700 = vmul.f32 %v3699, %v2556
        %v3701 = vadd.f32 %v3667, %v3700
        %s3702 = sld [smem:[#allocation9 + $0x63]]
        %v3703 = vstv %s3702
        %v3704 = vmul.f32 %v3703, %v2556
        %v3705 = vadd.f32 %v3680, %v3704
        %s3706 = sld [smem:[#allocation9 + $0x87]]
        %v3707 = vstv %s3706
        %v3708 = vmul.f32 %v3707, %v2556
        %v3709 = vadd.f32 %v3693, %v3708
        %s3710 = sld [smem:[#allocation9 + $0x1c]]
        %v3711 = vstv %s3710
        %v3712 = vmul.f32 %v3711, %v2556
        %3714 = vrot.lane.b32.xlu0 %v3712, 127
        %v3715 = vpop.permute.xlu0 %3714
        %v3717 = vadd.f32 %v3697, %v3715
        %s3718 = sld [smem:[#allocation9 + $0x40]]
        %v3719 = vstv %s3718
        %v3720 = vmul.f32 %v3719, %v2556
        %3722 = vrot.lane.b32.xlu0 %v3720, 127
        %v3723 = vpop.permute.xlu0 %3722
        %v3725 = vadd.f32 %v3701, %v3723
        %s3726 = sld [smem:[#allocation9 + $0x64]]
        %v3727 = vstv %s3726
        %v3728 = vmul.f32 %v3727, %v2556
        %3730 = vrot.lane.b32.xlu0 %v3728, 127
        %v3731 = vpop.permute.xlu0 %3730
        %v3733 = vadd.f32 %v3705, %v3731
        %s3734 = sld [smem:[#allocation9 + $0x88]]
        %v3735 = vstv %s3734
        %v3736 = vmul.f32 %v3735, %v2556
        %3738 = vrot.lane.b32.xlu0 %v3736, 127
        %v3739 = vpop.permute.xlu0 %3738
        %v3741 = vadd.f32 %v3709, %v3739
        %s3742 = sld [smem:[#allocation9 + $0x1d]]
        %v3743 = vstv %s3742
        %v3744 = vmul.f32 %v3743, %v2556
        %3746 = vrot.lane.b32.xlu0 %v3744, 126
        %v3747 = vpop.permute.xlu0 %3746
        %v3749 = vadd.f32 %v3717, %v3747
        %s3750 = sld [smem:[#allocation9 + $0x41]]
        %v3751 = vstv %s3750
        %v3752 = vmul.f32 %v3751, %v2556
        %3754 = vrot.lane.b32.xlu0 %v3752, 126
        %v3755 = vpop.permute.xlu0 %3754
        %v3757 = vadd.f32 %v3725, %v3755
        %s3758 = sld [smem:[#allocation9 + $0x65]]
        %v3759 = vstv %s3758
        %v3760 = vmul.f32 %v3759, %v2556
        %3762 = vrot.lane.b32.xlu0 %v3760, 126
        %v3763 = vpop.permute.xlu0 %3762
        %v3765 = vadd.f32 %v3733, %v3763
        %s3766 = sld [smem:[#allocation9 + $0x89]]
        %v3767 = vstv %s3766
        %v3768 = vmul.f32 %v3767, %v2556
        %3770 = vrot.lane.b32.xlu0 %v3768, 126
        %v3771 = vpop.permute.xlu0 %3770
        %v3773 = vadd.f32 %v3741, %v3771
        %s3774 = sld [smem:[#allocation9 + $0x1e]]
        %v3775 = vstv %s3774
        %v3776 = vmul.f32 %v3775, %v2556
        %v3777 = vmul.f32 %v3775, %v2557
        %v3780 = vrot.slane %v3776, 1
        %v3781 = vrot.slane %v3777, 1
        %v3782 = vsel %vm606, %v3780, %v3781
        %v3784 = vadd.f32 %v3749, %v3782
        %s3785 = sld [smem:[#allocation9 + $0x42]]
        %v3786 = vstv %s3785
        %v3787 = vmul.f32 %v3786, %v2556
        %v3788 = vmul.f32 %v3786, %v2557
        %v3791 = vrot.slane %v3787, 1
        %v3792 = vrot.slane %v3788, 1
        %v3793 = vsel %vm606, %v3791, %v3792
        %v3795 = vadd.f32 %v3757, %v3793
        %s3796 = sld [smem:[#allocation9 + $0x66]]
        %v3797 = vstv %s3796
        %v3798 = vmul.f32 %v3797, %v2556
        %v3799 = vmul.f32 %v3797, %v2557
        %v3802 = vrot.slane %v3798, 1
        %v3803 = vrot.slane %v3799, 1
        %v3804 = vsel %vm606, %v3802, %v3803
        %v3806 = vadd.f32 %v3765, %v3804
        %s3807 = sld [smem:[#allocation9 + $0x8a]]
        %v3808 = vstv %s3807
        %v3809 = vmul.f32 %v3808, %v2556
        %v3810 = vmul.f32 %v3808, %v2557
        %v3813 = vrot.slane %v3809, 1
        %v3814 = vrot.slane %v3810, 1
        %v3815 = vsel %vm606, %v3813, %v3814
        %v3817 = vadd.f32 %v3773, %v3815
        %s3818 = sld [smem:[#allocation9 + $0x1f]]
        %v3819 = vstv %s3818
        %v3820 = vmul.f32 %v3819, %v2556
        %v3821 = vmul.f32 %v3819, %v2557
        %v3824 = vrot.slane %v3820, 1
        %v3825 = vrot.slane %v3821, 1
        %v3826 = vsel %vm606, %v3824, %v3825
        %3827 = vrot.lane.b32.xlu0 %v3826, 127
        %v3828 = vpop.permute.xlu0 %3827
        %v3830 = vadd.f32 %v3784, %v3828
        %s3831 = sld [smem:[#allocation9 + $0x43]]
        %v3832 = vstv %s3831
        %v3833 = vmul.f32 %v3832, %v2556
        %v3834 = vmul.f32 %v3832, %v2557
        %v3837 = vrot.slane %v3833, 1
        %v3838 = vrot.slane %v3834, 1
        %v3839 = vsel %vm606, %v3837, %v3838
        %3840 = vrot.lane.b32.xlu0 %v3839, 127
        %v3841 = vpop.permute.xlu0 %3840
        %v3843 = vadd.f32 %v3795, %v3841
        %s3844 = sld [smem:[#allocation9 + $0x67]]
        %v3845 = vstv %s3844
        %v3846 = vmul.f32 %v3845, %v2556
        %v3847 = vmul.f32 %v3845, %v2557
        %v3850 = vrot.slane %v3846, 1
        %v3851 = vrot.slane %v3847, 1
        %v3852 = vsel %vm606, %v3850, %v3851
        %3853 = vrot.lane.b32.xlu0 %v3852, 127
        %v3854 = vpop.permute.xlu0 %3853
        %v3856 = vadd.f32 %v3806, %v3854
        %s3857 = sld [smem:[#allocation9 + $0x8b]]
        %v3858 = vstv %s3857
        %v3859 = vmul.f32 %v3858, %v2556
        %v3860 = vmul.f32 %v3858, %v2557
        %v3863 = vrot.slane %v3859, 1
        %v3864 = vrot.slane %v3860, 1
        %v3865 = vsel %vm606, %v3863, %v3864
        %3866 = vrot.lane.b32.xlu0 %v3865, 127
        %v3867 = vpop.permute.xlu0 %3866
        %v3869 = vadd.f32 %v3817, %v3867
        %s3870 = sld [smem:[#allocation9 + $0x20]]
        %v3871 = vstv %s3870
        %v3872 = vmul.f32 %v3871, %v2556
        %v3873 = vmul.f32 %v3871, %v2557
        %v3876 = vrot.slane %v3872, 1
        %v3877 = vrot.slane %v3873, 1
        %v3878 = vsel %vm606, %v3876, %v3877
        %3879 = vrot.lane.b32.xlu0 %v3878, 126
        %v3880 = vpop.permute.xlu0 %3879
        %v3882 = vadd.f32 %v3830, %v3880
        %s3883 = sld [smem:[#allocation9 + $0x44]]
        %v3884 = vstv %s3883
        %v3885 = vmul.f32 %v3884, %v2556
        %v3886 = vmul.f32 %v3884, %v2557
        %v3889 = vrot.slane %v3885, 1
        %v3890 = vrot.slane %v3886, 1
        %v3891 = vsel %vm606, %v3889, %v3890
        %3892 = vrot.lane.b32.xlu0 %v3891, 126
        %v3893 = vpop.permute.xlu0 %3892
        %v3895 = vadd.f32 %v3843, %v3893
        %s3896 = sld [smem:[#allocation9 + $0x68]]
        %v3897 = vstv %s3896
        %v3898 = vmul.f32 %v3897, %v2556
        %v3899 = vmul.f32 %v3897, %v2557
        %v3902 = vrot.slane %v3898, 1
        %v3903 = vrot.slane %v3899, 1
        %v3904 = vsel %vm606, %v3902, %v3903
        %3905 = vrot.lane.b32.xlu0 %v3904, 126
        %v3906 = vpop.permute.xlu0 %3905
        %v3908 = vadd.f32 %v3856, %v3906
        %s3909 = sld [smem:[#allocation9 + $0x8c]]
        %v3910 = vstv %s3909
        %v3911 = vmul.f32 %v3910, %v2556
        %v3912 = vmul.f32 %v3910, %v2557
        %v3915 = vrot.slane %v3911, 1
        %v3916 = vrot.slane %v3912, 1
        %v3917 = vsel %vm606, %v3915, %v3916
        %3918 = vrot.lane.b32.xlu0 %v3917, 126
        %v3919 = vpop.permute.xlu0 %3918
        %v3921 = vadd.f32 %v3869, %v3919
        %s3922 = sld [smem:[#allocation9 + $0x21]]
        %v3923 = vstv %s3922
        %v3924 = vmul.f32 %v3923, %v2556
        %v3925 = vmul.f32 %v3923, %v2557
        %v3928 = vrot.slane %v3924, 2
        %v3929 = vrot.slane %v3925, 2
        %v3930 = vsel %vm795, %v3928, %v3929
        %v3932 = vadd.f32 %v3882, %v3930
        %s3933 = sld [smem:[#allocation9 + $0x45]]
        %v3934 = vstv %s3933
        %v3935 = vmul.f32 %v3934, %v2556
        %v3936 = vmul.f32 %v3934, %v2557
        %v3939 = vrot.slane %v3935, 2
        %v3940 = vrot.slane %v3936, 2
        %v3941 = vsel %vm795, %v3939, %v3940
        %v3943 = vadd.f32 %v3895, %v3941
        %s3944 = sld [smem:[#allocation9 + $0x69]]
        %v3945 = vstv %s3944
        %v3946 = vmul.f32 %v3945, %v2556
        %v3947 = vmul.f32 %v3945, %v2557
        %v3950 = vrot.slane %v3946, 2
        %v3951 = vrot.slane %v3947, 2
        %v3952 = vsel %vm795, %v3950, %v3951
        %v3954 = vadd.f32 %v3908, %v3952
        %s3955 = sld [smem:[#allocation9 + $0x8d]]
        %v3956 = vstv %s3955
        %v3957 = vmul.f32 %v3956, %v2556
        %v3958 = vmul.f32 %v3956, %v2557
        %v3961 = vrot.slane %v3957, 2
        %v3962 = vrot.slane %v3958, 2
        %v3963 = vsel %vm795, %v3961, %v3962
        %v3965 = vadd.f32 %v3921, %v3963
        %s3966 = sld [smem:[#allocation9 + $0x22]]
        %v3967 = vstv %s3966
        %v3968 = vmul.f32 %v3967, %v2556
        %v3969 = vmul.f32 %v3967, %v2557
        %v3972 = vrot.slane %v3968, 2
        %v3973 = vrot.slane %v3969, 2
        %v3974 = vsel %vm795, %v3972, %v3973
        %3975 = vrot.lane.b32.xlu0 %v3974, 127
        %v3976 = vpop.permute.xlu0 %3975
        %v3978 = vadd.f32 %v3932, %v3976
        %s3979 = sld [smem:[#allocation9 + $0x46]]
        %v3980 = vstv %s3979
        %v3981 = vmul.f32 %v3980, %v2556
        %v3982 = vmul.f32 %v3980, %v2557
        %v3985 = vrot.slane %v3981, 2
        %v3986 = vrot.slane %v3982, 2
        %v3987 = vsel %vm795, %v3985, %v3986
        %3988 = vrot.lane.b32.xlu0 %v3987, 127
        %v3989 = vpop.permute.xlu0 %3988
        %v3991 = vadd.f32 %v3943, %v3989
        %s3992 = sld [smem:[#allocation9 + $0x6a]]
        %v3993 = vstv %s3992
        %v3994 = vmul.f32 %v3993, %v2556
        %v3995 = vmul.f32 %v3993, %v2557
        %v3998 = vrot.slane %v3994, 2
        %v3999 = vrot.slane %v3995, 2
        %v4000 = vsel %vm795, %v3998, %v3999
        %4001 = vrot.lane.b32.xlu0 %v4000, 127
        %v4002 = vpop.permute.xlu0 %4001
        %v4004 = vadd.f32 %v3954, %v4002
        %s4005 = sld [smem:[#allocation9 + $0x8e]]
        %v4006 = vstv %s4005
        %v4007 = vmul.f32 %v4006, %v2556
        %v4008 = vmul.f32 %v4006, %v2557
        %v4011 = vrot.slane %v4007, 2
        %v4012 = vrot.slane %v4008, 2
        %v4013 = vsel %vm795, %v4011, %v4012
        %4014 = vrot.lane.b32.xlu0 %v4013, 127
        %v4015 = vpop.permute.xlu0 %4014
        %v4017 = vadd.f32 %v3965, %v4015
        %s4018 = sld [smem:[#allocation9 + $0x23]]
        %v4019 = vstv %s4018
        %v4020 = vmul.f32 %v4019, %v2556
        %v4021 = vmul.f32 %v4019, %v2557
        %v4024 = vrot.slane %v4020, 2
        %v4025 = vrot.slane %v4021, 2
        %v4026 = vsel %vm795, %v4024, %v4025
        %4027 = vrot.lane.b32.xlu0 %v4026, 126
        %v4028 = vpop.permute.xlu0 %4027
        %v4030 = vadd.f32 %v3978, %v4028
        %s4031 = sld [smem:[#allocation9 + $0x47]]
        %v4032 = vstv %s4031
        %v4033 = vmul.f32 %v4032, %v2556
        %v4034 = vmul.f32 %v4032, %v2557
        %v4037 = vrot.slane %v4033, 2
        %v4038 = vrot.slane %v4034, 2
        %v4039 = vsel %vm795, %v4037, %v4038
        %4040 = vrot.lane.b32.xlu0 %v4039, 126
        %v4041 = vpop.permute.xlu0 %4040
        %v4043 = vadd.f32 %v3991, %v4041
        %s4044 = sld [smem:[#allocation9 + $0x6b]]
        %v4045 = vstv %s4044
        %v4046 = vmul.f32 %v4045, %v2556
        %v4047 = vmul.f32 %v4045, %v2557
        %v4050 = vrot.slane %v4046, 2
        %v4051 = vrot.slane %v4047, 2
        %v4052 = vsel %vm795, %v4050, %v4051
        %4053 = vrot.lane.b32.xlu0 %v4052, 126
        %v4054 = vpop.permute.xlu0 %4053
        %v4056 = vadd.f32 %v4004, %v4054
        %s4057 = sld [smem:[#allocation9 + $0x8f]]
        %v4058 = vstv %s4057
        %v4059 = vmul.f32 %v4058, %v2556
        %v4060 = vmul.f32 %v4058, %v2557
        %v4063 = vrot.slane %v4059, 2
        %v4064 = vrot.slane %v4060, 2
        %v4065 = vsel %vm795, %v4063, %v4064
        %4066 = vrot.lane.b32.xlu0 %v4065, 126
        %v4067 = vpop.permute.xlu0 %4066
        %v4069 = vadd.f32 %v4017, %v4067
        %v4078 = vrot.slane %v444, 2
        %v4079 = vrot.slane %v440, 2
        %v4080 = vsel %vm795, %v4078, %v4079
        %v4081 = vrot.slane %v445, 2
        %v4082 = vrot.slane %v441, 2
        %v4083 = vsel %vm795, %v4081, %v4082
        %v4084 = vrot.slane %v446, 2
        %v4085 = vrot.slane %v442, 2
        %v4086 = vsel %vm795, %v4084, %v4085
        %v4087 = vrot.slane %v447, 2
        %v4088 = vrot.slane %v443, 2
        %v4089 = vsel %vm795, %v4087, %v4088
        %4090 = vrot.lane.b32.xlu0 %v4080, 126
        %v4091 = vpop.permute.xlu0 %4090
        %4092 = vrot.lane.b32.xlu0 %v4083, 126
        %v4093 = vpop.permute.xlu0 %4092
        %4094 = vrot.lane.b32.xlu0 %v4086, 126
        %v4095 = vpop.permute.xlu0 %4094
        %4096 = vrot.lane.b32.xlu0 %v4089, 126
        %v4097 = vpop.permute.xlu0 %4096
        %v4102 = vadd.f32 %v4030, %v4091
        %v4103 = vadd.f32 %v4043, %v4093
        %v4104 = vadd.f32 %v4056, %v4095
        %v4105 = vadd.f32 %v4069, %v4097
        %vm4106 = vcmask 130048
        %4107 = vst.msk [vmem:[%s438] sm:$0xff] %vm4106, %v4102
        %4108 = vst.msk [vmem:[%s438 + $0x8] sm:$0xff] %vm4106, %v4103
        %4109 = vst.msk [vmem:[%s438 + $0x10] sm:$0xff] %vm4106, %v4104
        %4110 = vst.msk [vmem:[%s438 + $0x18] sm:$0xff] %vm4106, %v4105
        %s4111 = sand.u32 %s187, 1
        %s4112 = scalar_lea.sflag [#allocation5], %s4111
        %s4113 = sand.u32 %s187, 1
        %s4114 = smul.addr %s4113, 32
        %s4115 = scalar_lea.vmem [#allocation12], %s4114
        // Predicated region
        $region137: #{residual_conv_unit.1} parent=111 // pred_check
          %p4116 = pneg %p197
        $region138: #{residual_conv_unit.1} parent=111 // pred_check_branch
          %4118 = sbr.rel (%p4116) target = $region140
        $region139: #{residual_conv_unit.1} parent=111 // pred_region
          %s4120 = ssub.s32 512, 512
          %4121 = vsyncadd %s4112, %s4120
          %s4122 = smul.addr %s27, 8
          %s4123 = sadd.s32 %s28, %s4122
          %s4124 = smul.addr %s4123, 128
          %s4125 = scalar_lea.hbm %s6, %s4124
          %s4126 = sshll.u32 %s4115, 4
          %s4127 = int_to_ptr.vmem [resolvable:$true] %s4126
          %4132 = dma.vmem_to_hbm [thread:$0]  %s4127, 512, %s4125, %s4112, 128, 256, 8
        $region140: #{residual_conv_unit.1} parent=111 // pred_fallthru
          _
      $region112: #{residual_conv_unit.1} parent=5 // pred_fallthru
        _
      %p4133 = scmp.le.s32.totalorder 2, %s18
      // Predicated region
      $region141: #{residual_conv_unit.1} parent=5 // pred_check
        %p4134 = pneg %p4133
      $region142: #{residual_conv_unit.1} parent=5 // pred_check_branch
        %4136 = sbr.rel (%p4134) target = $region144
      $region143: #{residual_conv_unit.1} parent=5 // pred_region
        %s4137 = ssub.s32 %s18, 2
        // Predicated region
        $region145: #{residual_conv_unit.1} parent=143 // pred_check
          %p4138 = pneg %p203
        $region146: #{residual_conv_unit.1} parent=143 // pred_check_branch
          %4140 = sbr.rel (%p4138) target = $region148
        $region147: #{residual_conv_unit.1} parent=143 // pred_region
          %s4141 = sand.u32 %s188, 1
          %s4142 = scalar_lea.sflag [#allocation5], %s4141
          %s4143 = sand.u32 %s188, 1
          %s4144 = smul.addr %s4143, 32
          %s4145 = scalar_lea.vmem [#allocation12], %s4144
          %4146 = dma.done %s4142, 512
        $region148: #{residual_conv_unit.1} parent=143 // pred_fallthru
          _
      $region144: #{residual_conv_unit.1} parent=5 // pred_fallthru
        _
    $region6: #{residual_conv_unit.1} parent=1 // loop_footer
      %s22 = sadd.s32 1, %s18
    $region7: #{residual_conv_unit.1} parent=1 // loop_footer_branch
      %17 = sbr.rel target = $region3
    $region8: #{residual_conv_unit.1} parent=1 // loop_exit
      _
    %4147 = vsyncpa [#allocation5], 1
    %s4148 = scalar_lea.sflag [#allocation5], 1
    %4149 = vsyncpa %s4148, 1
    %4150 = vsyncpa [#allocation6], 1
    %s4151 = scalar_lea.sflag [#allocation6], 1
    %4152 = vsyncpa %s4151, 1
    %4153 = vsyncpa [#allocation8], 1
    %4154 = vsyncpa [#allocation11], 1

</llo_original>
